<compile_context>
chip_gen: v7x
topology: tpu7x:2x2x1
jax: 0.10.0
libtpu: 0.0.40
codegen_flags: <defaults>
</compile_context>

<pallas_src>
import functools

import jax
import jax.numpy as jnp
from jax.experimental import pallas as pl
from jax.experimental.pallas import tpu as pltpu


def _conv_frame(x_ref, w_ref, n, *, Ho, Wp, KH, KW):
    """f32 conv accumulator over one batch element's row-frame.

    x_ref : (NB, Cin, G)        lane-dense flattened padded input, G = Hp*Wp + KW - 1
    w_ref : (KH*KW, Cout, Cin)  per-tap weight matrices (f32 or bf16)
    Returns (Cout, Ho*Wp) f32.  Columns [0, Wo) of each frame row are the true
    conv outputs; columns [Wo, Wp) are don't-care (masked / never stored).
    """
    F = Ho * Wp
    acc = None
    for kh in range(KH):
        for kw in range(KW):
            start = kh * Wp + kw                       # static lane offset
            xs = x_ref[n, :, start:start + F]          # (Cin, F) contiguous lane slice
            part = jnp.dot(w_ref[kh * KW + kw], xs,
                           preferred_element_type=jnp.float32)
            acc = part if acc is None else acc + part
    return acc
    # TODO(synk): for real channel counts (Cin, Cout >= 128) also tile Cout and
    # the spatial axis, and stage a K=KH*KW*Cin im2col patch in a VMEM scratch
    # so the MXU contraction dim is fat; at Cin=4 the K dim is inherently tiny.


def _conv_stats_kernel(x_ref, w_ref, mask_ref, stats_ref, *, Ho, Wo, Wp, KH, KW):
    """Pass 1: per-element per-channel sum and centered sum-of-squares."""
    NB = x_ref.shape[0]
    m = jnp.float32(Ho * Wo)
    mask = mask_ref[...]                               # (1, Ho*Wp) f32 {0,1}
    for n in range(NB):
        acc = _conv_frame(x_ref, w_ref, n, Ho=Ho, Wp=Wp, KH=KH, KW=KW)
        s = jnp.sum(acc * mask, axis=1, keepdims=True)           # (Cout, 1)
        mu = s * (1.0 / m)
        d = (acc - mu) * mask                                    # centered, interior only
        css = jnp.sum(d * d, axis=1, keepdims=True)              # (Cout, 1)
        stats_ref[n, :, 0:1] = s
        stats_ref[n, :, 1:2] = css


def _conv_bn_relu_kernel(x_ref, w_ref, shift_ref, o_ref, *, Ho, Wo, Wp, KH, KW):
    """Pass 2: conv with BN-scale-folded weights + shift + ReLU, dense stores."""
    NB = x_ref.shape[0]
    shift = shift_ref[...]                             # (Cout, 1) f32
    for n in range(NB):
        acc = _conv_frame(x_ref, w_ref, n, Ho=Ho, Wp=Wp, KH=KH, KW=KW)
        y = jnp.maximum(acc + shift, 0.0)
        # Crop the Wp-wide frame rows to Wo columns with static slices (stores
        # land in the VMEM output block; the HBM writeback stays one dense
        # (Cout, Ho*Wo) lane-dense tile per element).
        for h in range(Ho):
            o_ref[n, :, h * Wo:(h + 1) * Wo] = (
                y[:, h * Wp:h * Wp + Wo].astype(o_ref.dtype))


def _pick_batch_tile(N, bytes_per_elem, vmem_budget=8 << 20):
    """Batch elements per grid step: fill VMEM but keep >=2 grid steps (v7x)."""
    nb = max(1, min(N, vmem_budget // max(1, bytes_per_elem)))
    if N >= 2:
        nb = max(1, min(nb, N // 2))   # both v7x TensorCores get work
    while N % nb:
        nb -= 1
    return nb


@functools.partial(jax.jit, static_argnames=("padding", "eps", "mxu_dtype"))
def conv_bn_relu(x_nchw, w_oihw, gamma, beta, padding=1, eps=1e-5,
                 mxu_dtype=jnp.float32):
    """Fused Conv2d(stride=1, no bias) + BatchNorm2d(batch stats) + ReLU, NCHW."""
    N, Cin, H, W = x_nchw.shape
    Cout, _, KH, KW = w_oihw.shape
    p = padding
    Hp, Wp = H + 2 * p, W + 2 * p
    Ho, Wo = Hp - KH + 1, Wp - KW + 1        # stride == 1 (module default)
    L = Hp * Wp
    F = Ho * Wp                               # per-element compute frame (lanes)
    HW = Ho * Wo
    G = L + (KW - 1)                          # flat right margin for tap slices

    # Lane-dense padded input: single spatial pad in NCHW, flatten HxW, tiny
    # flat margin so every tap is a contiguous in-bounds lane slice.
    xp = jnp.pad(x_nchw, ((0, 0), (0, 0), (p, p), (p, p))).reshape(N, Cin, L)
    xg = jnp.pad(xp, ((0, 0), (0, 0), (0, KW - 1))).astype(mxu_dtype)

    # Per-tap weight matrices (KH*KW, Cout, Cin); bf16 cast (if any) at operands only.
    w_taps = jnp.transpose(w_oihw, (2, 3, 0, 1)).reshape(KH * KW, Cout, Cin)
    w_taps = w_taps.astype(jnp.float32)

    # Interior mask over the frame lanes: true output columns are [0, Wo).
    colmask = (jnp.arange(Wp) < Wo).astype(jnp.float32)
    mask = jnp.tile(colmask, Ho).reshape(1, F)

    in_bytes = jnp.dtype(mxu_dtype).itemsize
    bytes_per_elem = 2 * Cin * G * in_bytes + Cout * F * 4 + 2 * Cout * HW * 4
    NB = _pick_batch_tile(N, bytes_per_elem)
    grid = (N // NB,)
    # TODO(synk): fold the NB elements into the lane axis (channels-major
    # wrapper layout) so the KH*KW matmuls each span NB*F lanes in one shot.

    # ---- pass 1: per-channel batch statistics only (no conv output to HBM) ----
    stats = pl.pallas_call(
        functools.partial(_conv_stats_kernel, Ho=Ho, Wo=Wo, Wp=Wp, KH=KH, KW=KW),
        out_shape=jax.ShapeDtypeStruct((N, Cout, 2), jnp.float32),
        grid=grid,
        in_specs=[
            pl.BlockSpec((NB, Cin, G), lambda i: (i, 0, 0)),
            pl.BlockSpec((KH * KW, Cout, Cin), lambda i: (0, 0, 0)),
            pl.BlockSpec((1, F), lambda i: (0, 0)),
        ],
        out_specs=pl.BlockSpec((NB, Cout, 2), lambda i: (i, 0, 0)),
        compiler_params=pltpu.CompilerParams(dimension_semantics=("parallel",)),
    )(xg, w_taps.astype(mxu_dtype), mask)

    # ---- finalize BN: Chan-style merge of per-element centered stats --------
    sum_n = stats[..., 0]                                  # (N, Cout)
    css_n = stats[..., 1]                                  # (N, Cout)
    m = jnp.float32(HW)
    cnt = jnp.float32(N * HW)
    mean = jnp.sum(sum_n, axis=0) / cnt                    # (Cout,)
    mean_n = sum_n / m
    ss = jnp.sum(css_n, axis=0) + m * jnp.sum((mean_n - mean) ** 2, axis=0)
    var = ss / cnt                                         # biased (training-mode BN)
    inv = jax.lax.rsqrt(var + jnp.float32(eps))
    scale = gamma.astype(jnp.float32) * inv                # (Cout,)
    shift = (beta.astype(jnp.float32) - mean * scale).reshape(Cout, 1)

    # Fold scale into the weights (in f32) so pass 2 is conv + shift + ReLU.
    w_scaled = (w_taps * scale[None, :, None]).astype(mxu_dtype)

    # ---- pass 2: recompute conv with folded weights, + shift, ReLU ----------
    out_flat = pl.pallas_call(
        functools.partial(_conv_bn_relu_kernel, Ho=Ho, Wo=Wo, Wp=Wp, KH=KH, KW=KW),
        out_shape=jax.ShapeDtypeStruct((N, Cout, HW), x_nchw.dtype),
        grid=grid,
        in_specs=[
            pl.BlockSpec((NB, Cin, G), lambda i: (i, 0, 0)),
            pl.BlockSpec((KH * KW, Cout, Cin), lambda i: (0, 0, 0)),
            pl.BlockSpec((Cout, 1), lambda i: (0, 0)),
        ],
        out_specs=pl.BlockSpec((NB, Cout, HW), lambda i: (i, 0, 0)),
        compiler_params=pltpu.CompilerParams(dimension_semantics=("parallel",)),
    )(xg, w_scaled, shift)

    # Free (contiguous) reshape back to NCHW.
    return out_flat.reshape(N, Cout, Ho, Wo)


def reference(x_nchw, w_oihw, gamma, beta, padding=1, eps=1e-5):
    """Pure-JAX reference mirroring the PyTorch forward (training-mode BN)."""
    y = jax.lax.conv_general_dilated(
        x_nchw, w_oihw, window_strides=(1, 1),
        padding=[(padding, padding), (padding, padding)],
        dimension_numbers=("NCHW", "OIHW", "NCHW"))
    mean = jnp.mean(y, axis=(0, 2, 3), keepdims=True)
    var = jnp.mean((y - mean) ** 2, axis=(0, 2, 3), keepdims=True)
    y = (y - mean) / jnp.sqrt(var + eps)
    y = y * gamma.reshape(1, -1, 1, 1) + beta.reshape(1, -1, 1, 1)
    return jnp.maximum(y, 0.0)


if __name__ == "__main__":
    key = jax.random.PRNGKey(0)
    kx, kw = jax.random.split(key)

    N, Cin, H, W = 2, 4, 16, 16
    Cout, KS = 8, 3

    x = jax.random.normal(kx, (N, Cin, H, W), dtype=jnp.float32)

    # Conv weights: kaiming_normal_ with a=1 => std = 1/sqrt(fan_in)
    fan_in = Cin * KS * KS
    w = jax.random.normal(kw, (Cout, Cin, KS, KS), dtype=jnp.float32) / jnp.sqrt(
        jnp.float32(fan_in))

    # BatchNorm2d default init: gamma = 1, beta = 0
    gamma = jnp.ones((Cout,), dtype=jnp.float32)
    beta = jnp.zeros((Cout,), dtype=jnp.float32)

    ref = jax.block_until_ready(reference(x, w, gamma, beta, padding=1))

    # f32 MXU operands: matches the f32 reference tightly.
    out = jax.block_until_ready(conv_bn_relu(x, w, gamma, beta, padding=1))
    assert out.shape == (N, Cout, H, W)
    assert jnp.allclose(out, ref, atol=1e-3, rtol=1e-3), (
        f"f32 path max abs diff {jnp.max(jnp.abs(out - ref))}")

    # bf16 MXU operands (f32 accumulation/stats): the fast path on v5e/v6e/v7x.
    out_bf16 = jax.block_until_ready(
        conv_bn_relu(x, w, gamma, beta, padding=1, mxu_dtype=jnp.bfloat16))
    assert out_bf16.shape == (N, Cout, H, W)
    assert jnp.allclose(out_bf16, ref, atol=5e-2, rtol=5e-2), (
        f"bf16 path max abs diff {jnp.max(jnp.abs(out_bf16 - ref))}")

    print("KERNEL_OK")
</pallas_src>

<mosaic_0001>
module attributes {stable_mosaic.version = 11 : i64} {
  func.func @_conv_stats_kernel(%arg0: i32, %arg1: memref<1x4x326xf32, #tpu.memory_space<vmem>>, %arg2: memref<9x8x4xf32, #tpu.memory_space<vmem>>, %arg3: memref<1x288xf32, #tpu.memory_space<vmem>>, %arg4: memref<1x8x2xf32, #tpu.memory_space<vmem>>) attributes {dimension_semantics = [#tpu.dimension_semantics<parallel>], iteration_bounds = array<i64: 2>, scalar_prefetch = 0 : i64, scratch_operands = 0 : i64, tpu.core_type = #tpu.core_type<tc>, window_params = [{transform_indices = @transform_0, window_bounds = array<i64: 1, 4, 326>}, {pipeline_mode = #tpu.pipeline_mode<synchronous>, transform_indices = @transform_1, window_bounds = array<i64: 9, 8, 4>}, {pipeline_mode = #tpu.pipeline_mode<synchronous>, transform_indices = @transform_2, window_bounds = array<i64: 1, 288>}, {transform_indices = @transform_3, window_bounds = array<i64: 1, 8, 2>}]} {
    %c0 = arith.constant 0 : index
    %c0_0 = arith.constant 0 : index
    %0 = vector.load %arg3[%c0, %c0_0] : memref<1x288xf32, #tpu.memory_space<vmem>>, vector<1x288xf32>
    %c0_1 = arith.constant 0 : index
    %c0_2 = arith.constant 0 : index
    %c0_3 = arith.constant 0 : index
    %1 = vector.load %arg1[%c0_1, %c0_2, %c0_3] : memref<1x4x326xf32, #tpu.memory_space<vmem>>, vector<1x4x288xf32>
    %2 = vector.shape_cast %1 : vector<1x4x288xf32> to vector<4x288xf32>
    %c0_4 = arith.constant 0 : index
    %c0_5 = arith.constant 0 : index
    %c0_6 = arith.constant 0 : index
    %3 = vector.load %arg2[%c0_4, %c0_5, %c0_6] : memref<9x8x4xf32, #tpu.memory_space<vmem>>, vector<1x8x4xf32>
    %4 = vector.shape_cast %3 : vector<1x8x4xf32> to vector<8x4xf32>
    %cst = arith.constant dense<0.000000e+00> : vector<8x288xf32>
    %5 = tpu.matmul %4, %2, %cst {dimension_numbers = #tpu.dot_dimension_numbers<[1], [0], [0], [1], [0, 0, 1, 1], [], []>} : vector<8x4xf32>, vector<4x288xf32>, vector<8x288xf32> -> vector<8x288xf32>
    %c0_7 = arith.constant 0 : index
    %c0_8 = arith.constant 0 : index
    %c1 = arith.constant 1 : index
    %6 = vector.load %arg1[%c0_7, %c0_8, %c1] : memref<1x4x326xf32, #tpu.memory_space<vmem>>, vector<1x4x288xf32>
    %7 = vector.shape_cast %6 : vector<1x4x288xf32> to vector<4x288xf32>
    %c1_9 = arith.constant 1 : index
    %c0_10 = arith.constant 0 : index
    %c0_11 = arith.constant 0 : index
    %8 = vector.load %arg2[%c1_9, %c0_10, %c0_11] : memref<9x8x4xf32, #tpu.memory_space<vmem>>, vector<1x8x4xf32>
    %9 = vector.shape_cast %8 : vector<1x8x4xf32> to vector<8x4xf32>
    %cst_12 = arith.constant dense<0.000000e+00> : vector<8x288xf32>
    %10 = tpu.matmul %9, %7, %cst_12 {dimension_numbers = #tpu.dot_dimension_numbers<[1], [0], [0], [1], [0, 0, 1, 1], [], []>} : vector<8x4xf32>, vector<4x288xf32>, vector<8x288xf32> -> vector<8x288xf32>
    %11 = arith.addf %5, %10 : vector<8x288xf32>
    %c0_13 = arith.constant 0 : index
    %c0_14 = arith.constant 0 : index
    %c2 = arith.constant 2 : index
    %12 = vector.load %arg1[%c0_13, %c0_14, %c2] : memref<1x4x326xf32, #tpu.memory_space<vmem>>, vector<1x4x288xf32>
    %13 = vector.shape_cast %12 : vector<1x4x288xf32> to vector<4x288xf32>
    %c2_15 = arith.constant 2 : index
    %c0_16 = arith.constant 0 : index
    %c0_17 = arith.constant 0 : index
    %14 = vector.load %arg2[%c2_15, %c0_16, %c0_17] : memref<9x8x4xf32, #tpu.memory_space<vmem>>, vector<1x8x4xf32>
    %15 = vector.shape_cast %14 : vector<1x8x4xf32> to vector<8x4xf32>
    %cst_18 = arith.constant dense<0.000000e+00> : vector<8x288xf32>
    %16 = tpu.matmul %15, %13, %cst_18 {dimension_numbers = #tpu.dot_dimension_numbers<[1], [0], [0], [1], [0, 0, 1, 1], [], []>} : vector<8x4xf32>, vector<4x288xf32>, vector<8x288xf32> -> vector<8x288xf32>
    %17 = arith.addf %11, %16 : vector<8x288xf32>
    %c0_19 = arith.constant 0 : index
    %c0_20 = arith.constant 0 : index
    %c18 = arith.constant 18 : index
    %18 = vector.load %arg1[%c0_19, %c0_20, %c18] : memref<1x4x326xf32, #tpu.memory_space<vmem>>, vector<1x4x288xf32>
    %19 = vector.shape_cast %18 : vector<1x4x288xf32> to vector<4x288xf32>
    %c3 = arith.constant 3 : index
    %c0_21 = arith.constant 0 : index
    %c0_22 = arith.constant 0 : index
    %20 = vector.load %arg2[%c3, %c0_21, %c0_22] : memref<9x8x4xf32, #tpu.memory_space<vmem>>, vector<1x8x4xf32>
    %21 = vector.shape_cast %20 : vector<1x8x4xf32> to vector<8x4xf32>
    %cst_23 = arith.constant dense<0.000000e+00> : vector<8x288xf32>
    %22 = tpu.matmul %21, %19, %cst_23 {dimension_numbers = #tpu.dot_dimension_numbers<[1], [0], [0], [1], [0, 0, 1, 1], [], []>} : vector<8x4xf32>, vector<4x288xf32>, vector<8x288xf32> -> vector<8x288xf32>
    %23 = arith.addf %17, %22 : vector<8x288xf32>
    %c0_24 = arith.constant 0 : index
    %c0_25 = arith.constant 0 : index
    %c19 = arith.constant 19 : index
    %24 = vector.load %arg1[%c0_24, %c0_25, %c19] : memref<1x4x326xf32, #tpu.memory_space<vmem>>, vector<1x4x288xf32>
    %25 = vector.shape_cast %24 : vector<1x4x288xf32> to vector<4x288xf32>
    %c4 = arith.constant 4 : index
    %c0_26 = arith.constant 0 : index
    %c0_27 = arith.constant 0 : index
    %26 = vector.load %arg2[%c4, %c0_26, %c0_27] : memref<9x8x4xf32, #tpu.memory_space<vmem>>, vector<1x8x4xf32>
    %27 = vector.shape_cast %26 : vector<1x8x4xf32> to vector<8x4xf32>
    %cst_28 = arith.constant dense<0.000000e+00> : vector<8x288xf32>
    %28 = tpu.matmul %27, %25, %cst_28 {dimension_numbers = #tpu.dot_dimension_numbers<[1], [0], [0], [1], [0, 0, 1, 1], [], []>} : vector<8x4xf32>, vector<4x288xf32>, vector<8x288xf32> -> vector<8x288xf32>
    %29 = arith.addf %23, %28 : vector<8x288xf32>
    %c0_29 = arith.constant 0 : index
    %c0_30 = arith.constant 0 : index
    %c20 = arith.constant 20 : index
    %30 = vector.load %arg1[%c0_29, %c0_30, %c20] : memref<1x4x326xf32, #tpu.memory_space<vmem>>, vector<1x4x288xf32>
    %31 = vector.shape_cast %30 : vector<1x4x288xf32> to vector<4x288xf32>
    %c5 = arith.constant 5 : index
    %c0_31 = arith.constant 0 : index
    %c0_32 = arith.constant 0 : index
    %32 = vector.load %arg2[%c5, %c0_31, %c0_32] : memref<9x8x4xf32, #tpu.memory_space<vmem>>, vector<1x8x4xf32>
    %33 = vector.shape_cast %32 : vector<1x8x4xf32> to vector<8x4xf32>
    %cst_33 = arith.constant dense<0.000000e+00> : vector<8x288xf32>
    %34 = tpu.matmul %33, %31, %cst_33 {dimension_numbers = #tpu.dot_dimension_numbers<[1], [0], [0], [1], [0, 0, 1, 1], [], []>} : vector<8x4xf32>, vector<4x288xf32>, vector<8x288xf32> -> vector<8x288xf32>
    %35 = arith.addf %29, %34 : vector<8x288xf32>
    %c0_34 = arith.constant 0 : index
    %c0_35 = arith.constant 0 : index
    %c36 = arith.constant 36 : index
    %36 = vector.load %arg1[%c0_34, %c0_35, %c36] : memref<1x4x326xf32, #tpu.memory_space<vmem>>, vector<1x4x288xf32>
    %37 = vector.shape_cast %36 : vector<1x4x288xf32> to vector<4x288xf32>
    %c6 = arith.constant 6 : index
    %c0_36 = arith.constant 0 : index
    %c0_37 = arith.constant 0 : index
    %38 = vector.load %arg2[%c6, %c0_36, %c0_37] : memref<9x8x4xf32, #tpu.memory_space<vmem>>, vector<1x8x4xf32>
    %39 = vector.shape_cast %38 : vector<1x8x4xf32> to vector<8x4xf32>
    %cst_38 = arith.constant dense<0.000000e+00> : vector<8x288xf32>
    %40 = tpu.matmul %39, %37, %cst_38 {dimension_numbers = #tpu.dot_dimension_numbers<[1], [0], [0], [1], [0, 0, 1, 1], [], []>} : vector<8x4xf32>, vector<4x288xf32>, vector<8x288xf32> -> vector<8x288xf32>
    %41 = arith.addf %35, %40 : vector<8x288xf32>
    %c0_39 = arith.constant 0 : index
    %c0_40 = arith.constant 0 : index
    %c37 = arith.constant 37 : index
    %42 = vector.load %arg1[%c0_39, %c0_40, %c37] : memref<1x4x326xf32, #tpu.memory_space<vmem>>, vector<1x4x288xf32>
    %43 = vector.shape_cast %42 : vector<1x4x288xf32> to vector<4x288xf32>
    %c7 = arith.constant 7 : index
    %c0_41 = arith.constant 0 : index
    %c0_42 = arith.constant 0 : index
    %44 = vector.load %arg2[%c7, %c0_41, %c0_42] : memref<9x8x4xf32, #tpu.memory_space<vmem>>, vector<1x8x4xf32>
    %45 = vector.shape_cast %44 : vector<1x8x4xf32> to vector<8x4xf32>
    %cst_43 = arith.constant dense<0.000000e+00> : vector<8x288xf32>
    %46 = tpu.matmul %45, %43, %cst_43 {dimension_numbers = #tpu.dot_dimension_numbers<[1], [0], [0], [1], [0, 0, 1, 1], [], []>} : vector<8x4xf32>, vector<4x288xf32>, vector<8x288xf32> -> vector<8x288xf32>
    %47 = arith.addf %41, %46 : vector<8x288xf32>
    %c0_44 = arith.constant 0 : index
    %c0_45 = arith.constant 0 : index
    %c38 = arith.constant 38 : index
    %48 = vector.load %arg1[%c0_44, %c0_45, %c38] : memref<1x4x326xf32, #tpu.memory_space<vmem>>, vector<1x4x288xf32>
    %49 = vector.shape_cast %48 : vector<1x4x288xf32> to vector<4x288xf32>
    %c8 = arith.constant 8 : index
    %c0_46 = arith.constant 0 : index
    %c0_47 = arith.constant 0 : index
    %50 = vector.load %arg2[%c8, %c0_46, %c0_47] : memref<9x8x4xf32, #tpu.memory_space<vmem>>, vector<1x8x4xf32>
    %51 = vector.shape_cast %50 : vector<1x8x4xf32> to vector<8x4xf32>
    %cst_48 = arith.constant dense<0.000000e+00> : vector<8x288xf32>
    %52 = tpu.matmul %51, %49, %cst_48 {dimension_numbers = #tpu.dot_dimension_numbers<[1], [0], [0], [1], [0, 0, 1, 1], [], []>} : vector<8x4xf32>, vector<4x288xf32>, vector<8x288xf32> -> vector<8x288xf32>
    %53 = arith.addf %47, %52 : vector<8x288xf32>
    %54 = vector.broadcast %0 : vector<1x288xf32> to vector<8x288xf32>
    %55 = arith.mulf %53, %54 : vector<8x288xf32>
    %cst_49 = arith.constant dense<0.000000e+00> : vector<8xf32>
    %56 = vector.multi_reduction <add>, %55, %cst_49 [1] : vector<8x288xf32> to vector<8xf32>
    %57 = vector.shape_cast %56 : vector<8xf32> to vector<8x1xf32>
    %cst_50 = arith.constant 1.000000e+00 : f32
    %cst_51 = arith.constant 2.560000e+02 : f32
    %58 = arith.divf %cst_50, %cst_51 : f32
    %59 = vector.broadcast %58 : f32 to vector<8x1xf32>
    %60 = arith.mulf %57, %59 : vector<8x1xf32>
    %61 = vector.broadcast %60 : vector<8x1xf32> to vector<8x288xf32>
    %62 = arith.subf %53, %61 : vector<8x288xf32>
    %63 = vector.broadcast %0 : vector<1x288xf32> to vector<8x288xf32>
    %64 = arith.mulf %62, %63 : vector<8x288xf32>
    %65 = arith.mulf %64, %64 : vector<8x288xf32>
    %cst_52 = arith.constant dense<0.000000e+00> : vector<8xf32>
    %66 = vector.multi_reduction <add>, %65, %cst_52 [1] : vector<8x288xf32> to vector<8xf32>
    %67 = vector.shape_cast %66 : vector<8xf32> to vector<8x1xf32>
    %c0_53 = arith.constant 0 : index
    %c0_54 = arith.constant 0 : index
    %c0_55 = arith.constant 0 : index
    %68 = vector.load %arg4[%c0_53, %c0_54, %c0_55] : memref<1x8x2xf32, #tpu.memory_space<vmem>>, vector<1x8x1xf32>
    %69 = vector.shape_cast %68 : vector<1x8x1xf32> to vector<8x1xf32>
    %70 = vector.shape_cast %57 : vector<8x1xf32> to vector<1x8x1xf32>
    tpu.vector_store %arg4[%c0_53, %c0_54, %c0_55], %70 {strides = array<i32>} : memref<1x8x2xf32, #tpu.memory_space<vmem>>, vector<1x8x1xf32>,
    %c0_56 = arith.constant 0 : index
    %c0_57 = arith.constant 0 : index
    %c1_58 = arith.constant 1 : index
    %71 = vector.load %arg4[%c0_56, %c0_57, %c1_58] : memref<1x8x2xf32, #tpu.memory_space<vmem>>, vector<1x8x1xf32>
    %72 = vector.shape_cast %71 : vector<1x8x1xf32> to vector<8x1xf32>
    %73 = vector.shape_cast %67 : vector<8x1xf32> to vector<1x8x1xf32>
    tpu.vector_store %arg4[%c0_56, %c0_57, %c1_58], %73 {strides = array<i32>} : memref<1x8x2xf32, #tpu.memory_space<vmem>>, vector<1x8x1xf32>,
    return
  }
  func.func @transform_0(%arg0: i32) -> (i32, i32, i32) {
    %c0_i32 = arith.constant 0 : i32
    %c0_i32_0 = arith.constant 0 : i32
    %c0_i32_1 = arith.constant 0 : i32
    return %arg0, %c0_i32, %c0_i32_0 : i32, i32, i32
  }
  func.func @transform_1(%arg0: i32) -> (i32, i32, i32) {
    %c0_i32 = arith.constant 0 : i32
    %c0_i32_0 = arith.constant 0 : i32
    %c0_i32_1 = arith.constant 0 : i32
    %c0_i32_2 = arith.constant 0 : i32
    return %c0_i32, %c0_i32_0, %c0_i32_1 : i32, i32, i32
  }
  func.func @transform_2(%arg0: i32) -> (i32, i32) {
    %c0_i32 = arith.constant 0 : i32
    %c0_i32_0 = arith.constant 0 : i32
    %c0_i32_1 = arith.constant 0 : i32
    return %c0_i32, %c0_i32_0 : i32, i32
  }
  func.func @transform_3(%arg0: i32) -> (i32, i32, i32) {
    %c0_i32 = arith.constant 0 : i32
    %c0_i32_0 = arith.constant 0 : i32
    %c0_i32_1 = arith.constant 0 : i32
    return %arg0, %c0_i32, %c0_i32_0 : i32, i32, i32
  }
}

module attributes {stable_mosaic.version = 11 : i64} {
  func.func @_conv_bn_relu_kernel(%arg0: i32, %arg1: memref<1x4x326xf32, #tpu.memory_space<vmem>>, %arg2: memref<9x8x4xf32, #tpu.memory_space<vmem>>, %arg3: memref<8x1xf32, #tpu.memory_space<vmem>>, %arg4: memref<1x8x256xf32, #tpu.memory_space<vmem>>) attributes {dimension_semantics = [#tpu.dimension_semantics<parallel>], iteration_bounds = array<i64: 2>, scalar_prefetch = 0 : i64, scratch_operands = 0 : i64, tpu.core_type = #tpu.core_type<tc>, window_params = [{transform_indices = @transform_0, window_bounds = array<i64: 1, 4, 326>}, {pipeline_mode = #tpu.pipeline_mode<synchronous>, transform_indices = @transform_1, window_bounds = array<i64: 9, 8, 4>}, {pipeline_mode = #tpu.pipeline_mode<synchronous>, transform_indices = @transform_2, window_bounds = array<i64: 8, 1>}, {transform_indices = @transform_3, window_bounds = array<i64: 1, 8, 256>}]} {
    %c0 = arith.constant 0 : index
    %c0_0 = arith.constant 0 : index
    %0 = vector.load %arg3[%c0, %c0_0] : memref<8x1xf32, #tpu.memory_space<vmem>>, vector<8x1xf32>
    %c0_1 = arith.constant 0 : index
    %c0_2 = arith.constant 0 : index
    %c0_3 = arith.constant 0 : index
    %1 = vector.load %arg1[%c0_1, %c0_2, %c0_3] : memref<1x4x326xf32, #tpu.memory_space<vmem>>, vector<1x4x288xf32>
    %2 = vector.shape_cast %1 : vector<1x4x288xf32> to vector<4x288xf32>
    %c0_4 = arith.constant 0 : index
    %c0_5 = arith.constant 0 : index
    %c0_6 = arith.constant 0 : index
    %3 = vector.load %arg2[%c0_4, %c0_5, %c0_6] : memref<9x8x4xf32, #tpu.memory_space<vmem>>, vector<1x8x4xf32>
    %4 = vector.shape_cast %3 : vector<1x8x4xf32> to vector<8x4xf32>
    %cst = arith.constant dense<0.000000e+00> : vector<8x288xf32>
    %5 = tpu.matmul %4, %2, %cst {dimension_numbers = #tpu.dot_dimension_numbers<[1], [0], [0], [1], [0, 0, 1, 1], [], []>} : vector<8x4xf32>, vector<4x288xf32>, vector<8x288xf32> -> vector<8x288xf32>
    %c0_7 = arith.constant 0 : index
    %c0_8 = arith.constant 0 : index
    %c1 = arith.constant 1 : index
    %6 = vector.load %arg1[%c0_7, %c0_8, %c1] : memref<1x4x326xf32, #tpu.memory_space<vmem>>, vector<1x4x288xf32>
    %7 = vector.shape_cast %6 : vector<1x4x288xf32> to vector<4x288xf32>
    %c1_9 = arith.constant 1 : index
    %c0_10 = arith.constant 0 : index
    %c0_11 = arith.constant 0 : index
    %8 = vector.load %arg2[%c1_9, %c0_10, %c0_11] : memref<9x8x4xf32, #tpu.memory_space<vmem>>, vector<1x8x4xf32>
    %9 = vector.shape_cast %8 : vector<1x8x4xf32> to vector<8x4xf32>
    %cst_12 = arith.constant dense<0.000000e+00> : vector<8x288xf32>
    %10 = tpu.matmul %9, %7, %cst_12 {dimension_numbers = #tpu.dot_dimension_numbers<[1], [0], [0], [1], [0, 0, 1, 1], [], []>} : vector<8x4xf32>, vector<4x288xf32>, vector<8x288xf32> -> vector<8x288xf32>
    %11 = arith.addf %5, %10 : vector<8x288xf32>
    %c0_13 = arith.constant 0 : index
    %c0_14 = arith.constant 0 : index
    %c2 = arith.constant 2 : index
    %12 = vector.load %arg1[%c0_13, %c0_14, %c2] : memref<1x4x326xf32, #tpu.memory_space<vmem>>, vector<1x4x288xf32>
    %13 = vector.shape_cast %12 : vector<1x4x288xf32> to vector<4x288xf32>
    %c2_15 = arith.constant 2 : index
    %c0_16 = arith.constant 0 : index
    %c0_17 = arith.constant 0 : index
    %14 = vector.load %arg2[%c2_15, %c0_16, %c0_17] : memref<9x8x4xf32, #tpu.memory_space<vmem>>, vector<1x8x4xf32>
    %15 = vector.shape_cast %14 : vector<1x8x4xf32> to vector<8x4xf32>
    %cst_18 = arith.constant dense<0.000000e+00> : vector<8x288xf32>
    %16 = tpu.matmul %15, %13, %cst_18 {dimension_numbers = #tpu.dot_dimension_numbers<[1], [0], [0], [1], [0, 0, 1, 1], [], []>} : vector<8x4xf32>, vector<4x288xf32>, vector<8x288xf32> -> vector<8x288xf32>
    %17 = arith.addf %11, %16 : vector<8x288xf32>
    %c0_19 = arith.constant 0 : index
    %c0_20 = arith.constant 0 : index
    %c18 = arith.constant 18 : index
    %18 = vector.load %arg1[%c0_19, %c0_20, %c18] : memref<1x4x326xf32, #tpu.memory_space<vmem>>, vector<1x4x288xf32>
    %19 = vector.shape_cast %18 : vector<1x4x288xf32> to vector<4x288xf32>
    %c3 = arith.constant 3 : index
    %c0_21 = arith.constant 0 : index
    %c0_22 = arith.constant 0 : index
    %20 = vector.load %arg2[%c3, %c0_21, %c0_22] : memref<9x8x4xf32, #tpu.memory_space<vmem>>, vector<1x8x4xf32>
    %21 = vector.shape_cast %20 : vector<1x8x4xf32> to vector<8x4xf32>
    %cst_23 = arith.constant dense<0.000000e+00> : vector<8x288xf32>
    %22 = tpu.matmul %21, %19, %cst_23 {dimension_numbers = #tpu.dot_dimension_numbers<[1], [0], [0], [1], [0, 0, 1, 1], [], []>} : vector<8x4xf32>, vector<4x288xf32>, vector<8x288xf32> -> vector<8x288xf32>
    %23 = arith.addf %17, %22 : vector<8x288xf32>
    %c0_24 = arith.constant 0 : index
    %c0_25 = arith.constant 0 : index
    %c19 = arith.constant 19 : index
    %24 = vector.load %arg1[%c0_24, %c0_25, %c19] : memref<1x4x326xf32, #tpu.memory_space<vmem>>, vector<1x4x288xf32>
    %25 = vector.shape_cast %24 : vector<1x4x288xf32> to vector<4x288xf32>
    %c4 = arith.constant 4 : index
    %c0_26 = arith.constant 0 : index
    %c0_27 = arith.constant 0 : index
    %26 = vector.load %arg2[%c4, %c0_26, %c0_27] : memref<9x8x4xf32, #tpu.memory_space<vmem>>, vector<1x8x4xf32>
    %27 = vector.shape_cast %26 : vector<1x8x4xf32> to vector<8x4xf32>
    %cst_28 = arith.constant dense<0.000000e+00> : vector<8x288xf32>
    %28 = tpu.matmul %27, %25, %cst_28 {dimension_numbers = #tpu.dot_dimension_numbers<[1], [0], [0], [1], [0, 0, 1, 1], [], []>} : vector<8x4xf32>, vector<4x288xf32>, vector<8x288xf32> -> vector<8x288xf32>
    %29 = arith.addf %23, %28 : vector<8x288xf32>
    %c0_29 = arith.constant 0 : index
    %c0_30 = arith.constant 0 : index
    %c20 = arith.constant 20 : index
    %30 = vector.load %arg1[%c0_29, %c0_30, %c20] : memref<1x4x326xf32, #tpu.memory_space<vmem>>, vector<1x4x288xf32>
    %31 = vector.shape_cast %30 : vector<1x4x288xf32> to vector<4x288xf32>
    %c5 = arith.constant 5 : index
    %c0_31 = arith.constant 0 : index
    %c0_32 = arith.constant 0 : index
    %32 = vector.load %arg2[%c5, %c0_31, %c0_32] : memref<9x8x4xf32, #tpu.memory_space<vmem>>, vector<1x8x4xf32>
    %33 = vector.shape_cast %32 : vector<1x8x4xf32> to vector<8x4xf32>
    %cst_33 = arith.constant dense<0.000000e+00> : vector<8x288xf32>
    %34 = tpu.matmul %33, %31, %cst_33 {dimension_numbers = #tpu.dot_dimension_numbers<[1], [0], [0], [1], [0, 0, 1, 1], [], []>} : vector<8x4xf32>, vector<4x288xf32>, vector<8x288xf32> -> vector<8x288xf32>
    %35 = arith.addf %29, %34 : vector<8x288xf32>
    %c0_34 = arith.constant 0 : index
    %c0_35 = arith.constant 0 : index
    %c36 = arith.constant 36 : index
    %36 = vector.load %arg1[%c0_34, %c0_35, %c36] : memref<1x4x326xf32, #tpu.memory_space<vmem>>, vector<1x4x288xf32>
    %37 = vector.shape_cast %36 : vector<1x4x288xf32> to vector<4x288xf32>
    %c6 = arith.constant 6 : index
    %c0_36 = arith.constant 0 : index
    %c0_37 = arith.constant 0 : index
    %38 = vector.load %arg2[%c6, %c0_36, %c0_37] : memref<9x8x4xf32, #tpu.memory_space<vmem>>, vector<1x8x4xf32>
    %39 = vector.shape_cast %38 : vector<1x8x4xf32> to vector<8x4xf32>
    %cst_38 = arith.constant dense<0.000000e+00> : vector<8x288xf32>
    %40 = tpu.matmul %39, %37, %cst_38 {dimension_numbers = #tpu.dot_dimension_numbers<[1], [0], [0], [1], [0, 0, 1, 1], [], []>} : vector<8x4xf32>, vector<4x288xf32>, vector<8x288xf32> -> vector<8x288xf32>
    %41 = arith.addf %35, %40 : vector<8x288xf32>
    %c0_39 = arith.constant 0 : index
    %c0_40 = arith.constant 0 : index
    %c37 = arith.constant 37 : index
    %42 = vector.load %arg1[%c0_39, %c0_40, %c37] : memref<1x4x326xf32, #tpu.memory_space<vmem>>, vector<1x4x288xf32>
    %43 = vector.shape_cast %42 : vector<1x4x288xf32> to vector<4x288xf32>
    %c7 = arith.constant 7 : index
    %c0_41 = arith.constant 0 : index
    %c0_42 = arith.constant 0 : index
    %44 = vector.load %arg2[%c7, %c0_41, %c0_42] : memref<9x8x4xf32, #tpu.memory_space<vmem>>, vector<1x8x4xf32>
    %45 = vector.shape_cast %44 : vector<1x8x4xf32> to vector<8x4xf32>
    %cst_43 = arith.constant dense<0.000000e+00> : vector<8x288xf32>
    %46 = tpu.matmul %45, %43, %cst_43 {dimension_numbers = #tpu.dot_dimension_numbers<[1], [0], [0], [1], [0, 0, 1, 1], [], []>} : vector<8x4xf32>, vector<4x288xf32>, vector<8x288xf32> -> vector<8x288xf32>
    %47 = arith.addf %41, %46 : vector<8x288xf32>
    %c0_44 = arith.constant 0 : index
    %c0_45 = arith.constant 0 : index
    %c38 = arith.constant 38 : index
    %48 = vector.load %arg1[%c0_44, %c0_45, %c38] : memref<1x4x326xf32, #tpu.memory_space<vmem>>, vector<1x4x288xf32>
    %49 = vector.shape_cast %48 : vector<1x4x288xf32> to vector<4x288xf32>
    %c8 = arith.constant 8 : index
    %c0_46 = arith.constant 0 : index
    %c0_47 = arith.constant 0 : index
    %50 = vector.load %arg2[%c8, %c0_46, %c0_47] : memref<9x8x4xf32, #tpu.memory_space<vmem>>, vector<1x8x4xf32>
    %51 = vector.shape_cast %50 : vector<1x8x4xf32> to vector<8x4xf32>
    %cst_48 = arith.constant dense<0.000000e+00> : vector<8x288xf32>
    %52 = tpu.matmul %51, %49, %cst_48 {dimension_numbers = #tpu.dot_dimension_numbers<[1], [0], [0], [1], [0, 0, 1, 1], [], []>} : vector<8x4xf32>, vector<4x288xf32>, vector<8x288xf32> -> vector<8x288xf32>
    %53 = arith.addf %47, %52 : vector<8x288xf32>
    %54 = vector.broadcast %0 : vector<8x1xf32> to vector<8x288xf32>
    %55 = arith.addf %53, %54 : vector<8x288xf32>
    %cst_49 = arith.constant 0.000000e+00 : f32
    %56 = vector.broadcast %cst_49 : f32 to vector<8x288xf32>
    %57 = arith.maximumf %55, %56 : vector<8x288xf32>
    %58 = vector.extract_strided_slice %57 {offsets = [0, 0], sizes = [8, 16], strides = [1, 1]} : vector<8x288xf32> to vector<8x16xf32>
    %c0_50 = arith.constant 0 : index
    %c0_51 = arith.constant 0 : index
    %c0_52 = arith.constant 0 : index
    %59 = vector.load %arg4[%c0_50, %c0_51, %c0_52] : memref<1x8x256xf32, #tpu.memory_space<vmem>>, vector<1x8x16xf32>
    %60 = vector.shape_cast %59 : vector<1x8x16xf32> to vector<8x16xf32>
    %61 = vector.shape_cast %58 : vector<8x16xf32> to vector<1x8x16xf32>
    tpu.vector_store %arg4[%c0_50, %c0_51, %c0_52], %61 {strides = array<i32>} : memref<1x8x256xf32, #tpu.memory_space<vmem>>, vector<1x8x16xf32>,
    %62 = vector.extract_strided_slice %57 {offsets = [0, 18], sizes = [8, 16], strides = [1, 1]} : vector<8x288xf32> to vector<8x16xf32>
    %c0_53 = arith.constant 0 : index
    %c0_54 = arith.constant 0 : index
    %c16 = arith.constant 16 : index
    %63 = vector.load %arg4[%c0_53, %c0_54, %c16] : memref<1x8x256xf32, #tpu.memory_space<vmem>>, vector<1x8x16xf32>
    %64 = vector.shape_cast %63 : vector<1x8x16xf32> to vector<8x16xf32>
    %65 = vector.shape_cast %62 : vector<8x16xf32> to vector<1x8x16xf32>
    tpu.vector_store %arg4[%c0_53, %c0_54, %c16], %65 {strides = array<i32>} : memref<1x8x256xf32, #tpu.memory_space<vmem>>, vector<1x8x16xf32>,
    %66 = vector.extract_strided_slice %57 {offsets = [0, 36], sizes = [8, 16], strides = [1, 1]} : vector<8x288xf32> to vector<8x16xf32>
    %c0_55 = arith.constant 0 : index
    %c0_56 = arith.constant 0 : index
    %c32 = arith.constant 32 : index
    %67 = vector.load %arg4[%c0_55, %c0_56, %c32] : memref<1x8x256xf32, #tpu.memory_space<vmem>>, vector<1x8x16xf32>
    %68 = vector.shape_cast %67 : vector<1x8x16xf32> to vector<8x16xf32>
    %69 = vector.shape_cast %66 : vector<8x16xf32> to vector<1x8x16xf32>
    tpu.vector_store %arg4[%c0_55, %c0_56, %c32], %69 {strides = array<i32>} : memref<1x8x256xf32, #tpu.memory_space<vmem>>, vector<1x8x16xf32>,
    %70 = vector.extract_strided_slice %57 {offsets = [0, 54], sizes = [8, 16], strides = [1, 1]} : vector<8x288xf32> to vector<8x16xf32>
    %c0_57 = arith.constant 0 : index
    %c0_58 = arith.constant 0 : index
    %c48 = arith.constant 48 : index
    %71 = vector.load %arg4[%c0_57, %c0_58, %c48] : memref<1x8x256xf32, #tpu.memory_space<vmem>>, vector<1x8x16xf32>
    %72 = vector.shape_cast %71 : vector<1x8x16xf32> to vector<8x16xf32>
    %73 = vector.shape_cast %70 : vector<8x16xf32> to vector<1x8x16xf32>
    tpu.vector_store %arg4[%c0_57, %c0_58, %c48], %73 {strides = array<i32>} : memref<1x8x256xf32, #tpu.memory_space<vmem>>, vector<1x8x16xf32>,
    %74 = vector.extract_strided_slice %57 {offsets = [0, 72], sizes = [8, 16], strides = [1, 1]} : vector<8x288xf32> to vector<8x16xf32>
    %c0_59 = arith.constant 0 : index
    %c0_60 = arith.constant 0 : index
    %c64 = arith.constant 64 : index
    %75 = vector.load %arg4[%c0_59, %c0_60, %c64] : memref<1x8x256xf32, #tpu.memory_space<vmem>>, vector<1x8x16xf32>
    %76 = vector.shape_cast %75 : vector<1x8x16xf32> to vector<8x16xf32>
    %77 = vector.shape_cast %74 : vector<8x16xf32> to vector<1x8x16xf32>
    tpu.vector_store %arg4[%c0_59, %c0_60, %c64], %77 {strides = array<i32>} : memref<1x8x256xf32, #tpu.memory_space<vmem>>, vector<1x8x16xf32>,
    %78 = vector.extract_strided_slice %57 {offsets = [0, 90], sizes = [8, 16], strides = [1, 1]} : vector<8x288xf32> to vector<8x16xf32>
    %c0_61 = arith.constant 0 : index
    %c0_62 = arith.constant 0 : index
    %c80 = arith.constant 80 : index
    %79 = vector.load %arg4[%c0_61, %c0_62, %c80] : memref<1x8x256xf32, #tpu.memory_space<vmem>>, vector<1x8x16xf32>
    %80 = vector.shape_cast %79 : vector<1x8x16xf32> to vector<8x16xf32>
    %81 = vector.shape_cast %78 : vector<8x16xf32> to vector<1x8x16xf32>
    tpu.vector_store %arg4[%c0_61, %c0_62, %c80], %81 {strides = array<i32>} : memref<1x8x256xf32, #tpu.memory_space<vmem>>, vector<1x8x16xf32>,
    %82 = vector.extract_strided_slice %57 {offsets = [0, 108], sizes = [8, 16], strides = [1, 1]} : vector<8x288xf32> to vector<8x16xf32>
    %c0_63 = arith.constant 0 : index
    %c0_64 = arith.constant 0 : index
    %c96 = arith.constant 96 : index
    %83 = vector.load %arg4[%c0_63, %c0_64, %c96] : memref<1x8x256xf32, #tpu.memory_space<vmem>>, vector<1x8x16xf32>
    %84 = vector.shape_cast %83 : vector<1x8x16xf32> to vector<8x16xf32>
    %85 = vector.shape_cast %82 : vector<8x16xf32> to vector<1x8x16xf32>
    tpu.vector_store %arg4[%c0_63, %c0_64, %c96], %85 {strides = array<i32>} : memref<1x8x256xf32, #tpu.memory_space<vmem>>, vector<1x8x16xf32>,
    %86 = vector.extract_strided_slice %57 {offsets = [0, 126], sizes = [8, 16], strides = [1, 1]} : vector<8x288xf32> to vector<8x16xf32>
    %c0_65 = arith.constant 0 : index
    %c0_66 = arith.constant 0 : index
    %c112 = arith.constant 112 : index
    %87 = vector.load %arg4[%c0_65, %c0_66, %c112] : memref<1x8x256xf32, #tpu.memory_space<vmem>>, vector<1x8x16xf32>
    %88 = vector.shape_cast %87 : vector<1x8x16xf32> to vector<8x16xf32>
    %89 = vector.shape_cast %86 : vector<8x16xf32> to vector<1x8x16xf32>
    tpu.vector_store %arg4[%c0_65, %c0_66, %c112], %89 {strides = array<i32>} : memref<1x8x256xf32, #tpu.memory_space<vmem>>, vector<1x8x16xf32>,
    %90 = vector.extract_strided_slice %57 {offsets = [0, 144], sizes = [8, 16], strides = [1, 1]} : vector<8x288xf32> to vector<8x16xf32>
    %c0_67 = arith.constant 0 : index
    %c0_68 = arith.constant 0 : index
    %c128 = arith.constant 128 : index
    %91 = vector.load %arg4[%c0_67, %c0_68, %c128] : memref<1x8x256xf32, #tpu.memory_space<vmem>>, vector<1x8x16xf32>
    %92 = vector.shape_cast %91 : vector<1x8x16xf32> to vector<8x16xf32>
    %93 = vector.shape_cast %90 : vector<8x16xf32> to vector<1x8x16xf32>
    tpu.vector_store %arg4[%c0_67, %c0_68, %c128], %93 {strides = array<i32>} : memref<1x8x256xf32, #tpu.memory_space<vmem>>, vector<1x8x16xf32>,
    %94 = vector.extract_strided_slice %57 {offsets = [0, 162], sizes = [8, 16], strides = [1, 1]} : vector<8x288xf32> to vector<8x16xf32>
    %c0_69 = arith.constant 0 : index
    %c0_70 = arith.constant 0 : index
    %c144 = arith.constant 144 : index
    %95 = vector.load %arg4[%c0_69, %c0_70, %c144] : memref<1x8x256xf32, #tpu.memory_space<vmem>>, vector<1x8x16xf32>
    %96 = vector.shape_cast %95 : vector<1x8x16xf32> to vector<8x16xf32>
    %97 = vector.shape_cast %94 : vector<8x16xf32> to vector<1x8x16xf32>
    tpu.vector_store %arg4[%c0_69, %c0_70, %c144], %97 {strides = array<i32>} : memref<1x8x256xf32, #tpu.memory_space<vmem>>, vector<1x8x16xf32>,
    %98 = vector.extract_strided_slice %57 {offsets = [0, 180], sizes = [8, 16], strides = [1, 1]} : vector<8x288xf32> to vector<8x16xf32>
    %c0_71 = arith.constant 0 : index
    %c0_72 = arith.constant 0 : index
    %c160 = arith.constant 160 : index
    %99 = vector.load %arg4[%c0_71, %c0_72, %c160] : memref<1x8x256xf32, #tpu.memory_space<vmem>>, vector<1x8x16xf32>
    %100 = vector.shape_cast %99 : vector<1x8x16xf32> to vector<8x16xf32>
    %101 = vector.shape_cast %98 : vector<8x16xf32> to vector<1x8x16xf32>
    tpu.vector_store %arg4[%c0_71, %c0_72, %c160], %101 {strides = array<i32>} : memref<1x8x256xf32, #tpu.memory_space<vmem>>, vector<1x8x16xf32>,
    %102 = vector.extract_strided_slice %57 {offsets = [0, 198], sizes = [8, 16], strides = [1, 1]} : vector<8x288xf32> to vector<8x16xf32>
    %c0_73 = arith.constant 0 : index
    %c0_74 = arith.constant 0 : index
    %c176 = arith.constant 176 : index
    %103 = vector.load %arg4[%c0_73, %c0_74, %c176] : memref<1x8x256xf32, #tpu.memory_space<vmem>>, vector<1x8x16xf32>
    %104 = vector.shape_cast %103 : vector<1x8x16xf32> to vector<8x16xf32>
    %105 = vector.shape_cast %102 : vector<8x16xf32> to vector<1x8x16xf32>
    tpu.vector_store %arg4[%c0_73, %c0_74, %c176], %105 {strides = array<i32>} : memref<1x8x256xf32, #tpu.memory_space<vmem>>, vector<1x8x16xf32>,
    %106 = vector.extract_strided_slice %57 {offsets = [0, 216], sizes = [8, 16], strides = [1, 1]} : vector<8x288xf32> to vector<8x16xf32>
    %c0_75 = arith.constant 0 : index
    %c0_76 = arith.constant 0 : index
    %c192 = arith.constant 192 : index
    %107 = vector.load %arg4[%c0_75, %c0_76, %c192] : memref<1x8x256xf32, #tpu.memory_space<vmem>>, vector<1x8x16xf32>
    %108 = vector.shape_cast %107 : vector<1x8x16xf32> to vector<8x16xf32>
    %109 = vector.shape_cast %106 : vector<8x16xf32> to vector<1x8x16xf32>
    tpu.vector_store %arg4[%c0_75, %c0_76, %c192], %109 {strides = array<i32>} : memref<1x8x256xf32, #tpu.memory_space<vmem>>, vector<1x8x16xf32>,
    %110 = vector.extract_strided_slice %57 {offsets = [0, 234], sizes = [8, 16], strides = [1, 1]} : vector<8x288xf32> to vector<8x16xf32>
    %c0_77 = arith.constant 0 : index
    %c0_78 = arith.constant 0 : index
    %c208 = arith.constant 208 : index
    %111 = vector.load %arg4[%c0_77, %c0_78, %c208] : memref<1x8x256xf32, #tpu.memory_space<vmem>>, vector<1x8x16xf32>
    %112 = vector.shape_cast %111 : vector<1x8x16xf32> to vector<8x16xf32>
    %113 = vector.shape_cast %110 : vector<8x16xf32> to vector<1x8x16xf32>
    tpu.vector_store %arg4[%c0_77, %c0_78, %c208], %113 {strides = array<i32>} : memref<1x8x256xf32, #tpu.memory_space<vmem>>, vector<1x8x16xf32>,
    %114 = vector.extract_strided_slice %57 {offsets = [0, 252], sizes = [8, 16], strides = [1, 1]} : vector<8x288xf32> to vector<8x16xf32>
    %c0_79 = arith.constant 0 : index
    %c0_80 = arith.constant 0 : index
    %c224 = arith.constant 224 : index
    %115 = vector.load %arg4[%c0_79, %c0_80, %c224] : memref<1x8x256xf32, #tpu.memory_space<vmem>>, vector<1x8x16xf32>
    %116 = vector.shape_cast %115 : vector<1x8x16xf32> to vector<8x16xf32>
    %117 = vector.shape_cast %114 : vector<8x16xf32> to vector<1x8x16xf32>
    tpu.vector_store %arg4[%c0_79, %c0_80, %c224], %117 {strides = array<i32>} : memref<1x8x256xf32, #tpu.memory_space<vmem>>, vector<1x8x16xf32>,
    %118 = vector.extract_strided_slice %57 {offsets = [0, 270], sizes = [8, 16], strides = [1, 1]} : vector<8x288xf32> to vector<8x16xf32>
    %c0_81 = arith.constant 0 : index
    %c0_82 = arith.constant 0 : index
    %c240 = arith.constant 240 : index
    %119 = vector.load %arg4[%c0_81, %c0_82, %c240] : memref<1x8x256xf32, #tpu.memory_space<vmem>>, vector<1x8x16xf32>
    %120 = vector.shape_cast %119 : vector<1x8x16xf32> to vector<8x16xf32>
    %121 = vector.shape_cast %118 : vector<8x16xf32> to vector<1x8x16xf32>
    tpu.vector_store %arg4[%c0_81, %c0_82, %c240], %121 {strides = array<i32>} : memref<1x8x256xf32, #tpu.memory_space<vmem>>, vector<1x8x16xf32>,
    return
  }
  func.func @transform_0(%arg0: i32) -> (i32, i32, i32) {
    %c0_i32 = arith.constant 0 : i32
    %c0_i32_0 = arith.constant 0 : i32
    %c0_i32_1 = arith.constant 0 : i32
    return %arg0, %c0_i32, %c0_i32_0 : i32, i32, i32
  }
  func.func @transform_1(%arg0: i32) -> (i32, i32, i32) {
    %c0_i32 = arith.constant 0 : i32
    %c0_i32_0 = arith.constant 0 : i32
    %c0_i32_1 = arith.constant 0 : i32
    %c0_i32_2 = arith.constant 0 : i32
    return %c0_i32, %c0_i32_0, %c0_i32_1 : i32, i32, i32
  }
  func.func @transform_2(%arg0: i32) -> (i32, i32) {
    %c0_i32 = arith.constant 0 : i32
    %c0_i32_0 = arith.constant 0 : i32
    %c0_i32_1 = arith.constant 0 : i32
    return %c0_i32, %c0_i32_0 : i32, i32
  }
  func.func @transform_3(%arg0: i32) -> (i32, i32, i32) {
    %c0_i32 = arith.constant 0 : i32
    %c0_i32_0 = arith.constant 0 : i32
    %c0_i32_1 = arith.constant 0 : i32
    return %arg0, %c0_i32, %c0_i32_0 : i32, i32, i32
  }
}

</mosaic_0001>

<llo_original>
// kernel: tile.8
$region0: #{tile.8}
  #allocation0 [shape = 's32[1]{0}', space=sflag, size = 0x4, scoped, tag = 'scoped memory for tile.8']
  %s0 = inlined_call_operand.vmem [shape: f32[18], index: 0, kind: input, shape index: {}]
  %s1 = inlined_call_operand.vmem [shape: f32[16,18], index: 1, kind: output, shape index: {}]
  // Predicated region
  $region2: #{tile.8} parent=0 // pred_check
    _
  $region3: #{tile.8} parent=0 // pred_check_branch
    %3 = sbr.rel (0) target = $region5
  $region4: #{tile.8} parent=0 // pred_region
    _
  $region5: #{tile.8} parent=0 // pred_fallthru
    _
  %v4 = vld [vmem:[%s0] ss:$0 sm:$0xff]
  %5 = vst [vmem:[%s1] sm:$0xff] %v4
  %s6 = scalar_lea.vmem %s1, 8
  %7 = vst [vmem:[%s6] sm:$0xff] %v4

// kernel: tile.9
$region0: #{tile.9}
  %s0 = inlined_call_operand.vmem [shape: f32[16,18], index: 0, kind: input, shape index: {}]
  %s1 = inlined_call_operand.vmem [shape: f32[1,288], index: 1, kind: output, shape index: {}]
  $region1: #{tile.9} parent=0
    #allocation0 [shape = 'u8[12288]{0}', space=vmem, size = 0x3000, scoped, tag = 'scoped mem for output reshape']
    %v2 = vld [vmem:[%s0] sm:$0x1]
    %vm3 = vcmask 146432
    %4 = vst.msk [vmem:[#allocation0] sm:$0x1] %vm3, %v2
    %s5 = scalar_lea.vmem %s0, 7
    %v6 = vld [vmem:[%s5] sm:$0x1]
    %s7 = scalar_lea.vmem %s0, 7
    %v8 = vld [vmem:[%s7] sm:$0x1]
    %vm9 = vcmask 15360
    %v10 = vsel %vm9, %v8, %v6
    %11 = vrot.lane.b32.xlu0 %v10, 126
    %v12 = vpop.permute.xlu0 %11
    %vm13 = vcmask 130048
    %s14 = scalar_lea.vmem [#allocation0], 8
    %15 = vst.msk [vmem:[%s14] sm:$0x1] %vm13, %v12
    %vm16 = vcmask 1048560
    %17 = vst.msk [vmem:[#allocation0] sm:$0x1] %vm16, %v12
    %s18 = scalar_lea.vmem %s0, 14
    %v19 = vld [vmem:[%s18] sm:$0x1]
    %s20 = scalar_lea.vmem %s0, 14
    %v21 = vld [vmem:[%s20] sm:$0x1]
    %vm22 = vcmask 31744
    %v23 = vsel %vm22, %v21, %v19
    %24 = vrot.lane.b32.xlu0 %v23, 124
    %v25 = vpop.permute.xlu0 %24
    %vm26 = vcmask 113664
    %s27 = scalar_lea.vmem [#allocation0], 16
    %28 = vst.msk [vmem:[%s27] sm:$0x1] %vm26, %v25
    %vm29 = vcmask 1048544
    %s30 = scalar_lea.vmem [#allocation0], 8
    %31 = vst.msk [vmem:[%s30] sm:$0x1] %vm29, %v25
    %s32 = scalar_lea.vmem %s0, 6
    %v33 = vld [vmem:[%s32] sm:$0x1]
    %34 = vrot.lane.b32.xlu0 %v33, 108
    %v35 = vpop.permute.xlu0 %34
    %vm36 = vcmask 1032032
    %37 = vst.msk [vmem:[#allocation0] sm:$0x1] %vm36, %v35
    %s38 = scalar_lea.vmem %s0, 13
    %v39 = vld [vmem:[%s38] sm:$0x1]
    %40 = vrot.lane.b32.xlu0 %v39, 106
    %v41 = vpop.permute.xlu0 %40
    %vm42 = vcmask 1015632
    %s43 = scalar_lea.vmem [#allocation0], 8
    %44 = vst.msk [vmem:[%s43] sm:$0x1] %vm42, %v41
    %s45 = scalar_lea.vmem %s0, 5
    %v46 = vld [vmem:[%s45] sm:$0x1]
    %47 = vrot.lane.b32.xlu0 %v46, 90
    %v48 = vpop.permute.xlu0 %47
    %vm49 = vcmask 884432
    %50 = vst.msk [vmem:[#allocation0] sm:$0x1] %vm49, %v48
    %s51 = scalar_lea.vmem %s0, 12
    %v52 = vld [vmem:[%s51] sm:$0x1]
    %53 = vrot.lane.b32.xlu0 %v52, 88
    %v54 = vpop.permute.xlu0 %53
    %vm55 = vcmask 868032
    %s56 = scalar_lea.vmem [#allocation0], 8
    %57 = vst.msk [vmem:[%s56] sm:$0x1] %vm55, %v54
    %s58 = scalar_lea.vmem %s0, 4
    %v59 = vld [vmem:[%s58] sm:$0x1]
    %60 = vrot.lane.b32.xlu0 %v59, 72
    %v61 = vpop.permute.xlu0 %60
    %vm62 = vcmask 736832
    %63 = vst.msk [vmem:[#allocation0] sm:$0x1] %vm62, %v61
    %s64 = scalar_lea.vmem %s0, 11
    %v65 = vld [vmem:[%s64] sm:$0x1]
    %66 = vrot.lane.b32.xlu0 %v65, 70
    %v67 = vpop.permute.xlu0 %66
    %vm68 = vcmask 720432
    %s69 = scalar_lea.vmem [#allocation0], 8
    %70 = vst.msk [vmem:[%s69] sm:$0x1] %vm68, %v67
    %s71 = scalar_lea.vmem %s0, 3
    %v72 = vld [vmem:[%s71] sm:$0x1]
    %73 = vrot.lane.b32.xlu0 %v72, 54
    %v74 = vpop.permute.xlu0 %73
    %vm75 = vcmask 589232
    %76 = vst.msk [vmem:[#allocation0] sm:$0x1] %vm75, %v74
    %s77 = scalar_lea.vmem %s0, 10
    %v78 = vld [vmem:[%s77] sm:$0x1]
    %79 = vrot.lane.b32.xlu0 %v78, 52
    %v80 = vpop.permute.xlu0 %79
    %vm81 = vcmask 572832
    %s82 = scalar_lea.vmem [#allocation0], 8
    %83 = vst.msk [vmem:[%s82] sm:$0x1] %vm81, %v80
    %s84 = scalar_lea.vmem %s0, 2
    %v85 = vld [vmem:[%s84] sm:$0x1]
    %86 = vrot.lane.b32.xlu0 %v85, 36
    %v87 = vpop.permute.xlu0 %86
    %vm88 = vcmask 441632
    %89 = vst.msk [vmem:[#allocation0] sm:$0x1] %vm88, %v87
    %s90 = scalar_lea.vmem %s0, 9
    %v91 = vld [vmem:[%s90] sm:$0x1]
    %92 = vrot.lane.b32.xlu0 %v91, 34
    %v93 = vpop.permute.xlu0 %92
    %vm94 = vcmask 425232
    %s95 = scalar_lea.vmem [#allocation0], 8
    %96 = vst.msk [vmem:[%s95] sm:$0x1] %vm94, %v93
    %s97 = scalar_lea.vmem %s0, 1
    %v98 = vld [vmem:[%s97] sm:$0x1]
    %99 = vrot.lane.b32.xlu0 %v98, 18
    %v100 = vpop.permute.xlu0 %99
    %vm101 = vcmask 294032
    %102 = vst.msk [vmem:[#allocation0] sm:$0x1] %vm101, %v100
    %s103 = scalar_lea.vmem %s0, 8
    %v104 = vld [vmem:[%s103] sm:$0x1]
    %105 = vrot.lane.b32.xlu0 %v104, 16
    %v106 = vpop.permute.xlu0 %105
    %vm107 = vcmask 277632
    %s108 = scalar_lea.vmem [#allocation0], 8
    %109 = vst.msk [vmem:[%s108] sm:$0x1] %vm107, %v106
    %s110 = scalar_lea.vmem %s0, 15
    %v111 = vld [vmem:[%s110] sm:$0x1]
    %112 = vrot.lane.b32.xlu0 %v111, 14
    %v113 = vpop.permute.xlu0 %112
    %vm114 = vcmask 261232
    %s115 = scalar_lea.vmem [#allocation0], 16
    %116 = vst.msk [vmem:[%s115] sm:$0x1] %vm114, %v113
    %s118 = sshllo.u32 0, 1
    %v120 = vld [vmem:[#allocation0] sm:%s118]
    %s121 = sshllo.u32 0, 1
    %122 = vst [vmem:[%s1] sm:%s121] %v120
    %s123 = scalar_lea.vmem [#allocation0], 8
    %v124 = vld [vmem:[%s123] sm:%s118]
    %s125 = sshllo.u32 0, 1
    %s126 = scalar_lea.vmem %s1, 1
    %127 = vst [vmem:[%s126] sm:%s125] %v124
    %s128 = scalar_lea.vmem [#allocation0], 16
    %v129 = vld [vmem:[%s128] sm:%s118]
    %s130 = sshllo.u32 0, 1
    %s131 = smul.addr 1, 2
    %s132 = scalar_lea.vmem %s1, %s131
    %133 = vst [vmem:[%s132] sm:%s130] %v129

// kernel: conv_bn_relu.3
$region0: #{conv_bn_relu.3}
  #allocation0 [shape = 'u32[]', space=smem, size = 0x4, offset = 0x4, fixed_abs, tag = 'smem constant byte address 0x4 - core index']
  #allocation1 [shape = 'u32[144,128]{1,0:T(1,128)}', space=vmem, size = 0x12000, scoped, tag = 'internal scratch']
  %s0 = inlined_call_operand.vmem [shape: f32[2,4,326], index: 0, kind: input, shape index: {}]
  %s1 = inlined_call_operand.vmem [shape: f32[9,8,4], index: 1, kind: input, shape index: {}]
  %s2 = inlined_call_operand.vmem [shape: f32[8,1], index: 2, kind: input, shape index: {}]
  %s3 = inlined_call_operand.vmem [shape: f32[2,8,256], index: 3, kind: output, shape index: {}]
  %s4 = sld [smem:[#allocation0]]
  $region45: #{conv_bn_relu.3} parent=0
    _
  %s6 = ssub.s32 1, %s4
  %s7 = scalar_select 0, %s6, %s4
  loop: start=0, step=1, limit=4
  $region2: #{conv_bn_relu.3} parent=0 // loop_pre_header
    _
  $region3: #{conv_bn_relu.3} parent=0 // loop_header
    %s9 = sphi 0, %s13
    %p10 = scmp.ge.s32.totalorder %s9, 4
    %s19 = sphi 0, %s21
    %s22 = sphi 0, %s19
    %s23 = sphi 0, %s22
    %s39 = sphi 0, %s23
    %s43 = sphi 0, %s43
    %s45 = sphi 0, %s43
    %s46 = sphi 0, %s45
    %s60 = sphi 0, %s46
    %s64 = sphi 0, %s64
    %s66 = sphi 0, %s64
    %s67 = sphi 0, %s66
    %s81 = sphi 0, %s67
    %s87 = sphi 0, %s89
    %s90 = sphi 0, %s87
    %s91 = sphi 0, %s90
    %s107 = sphi 0, %s91
  $region4: #{conv_bn_relu.3} parent=0 // loop_header_branch
    %12 = sbr.rel (%p10) target = $region8
  $region5: #{conv_bn_relu.3} parent=0 // loop_body
    %s14 = ssub.s32 %s9, 1
    %s15 = ssub.s32 %s9, 2
    %s16 = sadd.s32 %s9, 1
    %s17 = ssub.s32 %s9, %s16
    %p18 = scmp.eq.s32.totalorder %s17, 0
    %s20 = sadd.s32 %s19, 1
    %s21 = scalar_select %p18, %s19, %s20
    %p24 = pneg %p18
    %p25 = scmp.eq.s32.totalorder %s9, 1
    %p26 = por %p24, %p25
    %p27 = scmp.ne.s32.totalorder %s19, %s22
    %p28 = scmp.eq.s32.totalorder %s9, 0
    %p29 = por %p27, %p28
    %p30 = scmp.ne.s32.totalorder %s19, %s22
    %p31 = scmp.eq.s32.totalorder %s14, 1
    %p32 = por %p30, %p31
    %p33 = scmp.ne.s32.totalorder %s22, %s23
    %p34 = scmp.eq.s32.totalorder %s14, 0
    %p35 = por %p33, %p34
    %p36 = scmp.ne.s32.totalorder %s22, %s23
    %p37 = scmp.eq.s32.totalorder %s15, 1
    %p38 = por %p36, %p37
    %p40 = scmp.ne.s32.totalorder %s23, %s39
    %p41 = scmp.eq.s32.totalorder %s15, 0
    %p42 = por %p40, %p41
    %s44 = sadd.s32 %s43, 1
    %p47 = scmp.eq.s32.totalorder %s9, 1
    %p48 = scmp.ne.s32.totalorder %s43, %s45
    %p49 = scmp.eq.s32.totalorder %s9, 0
    %p50 = por %p48, %p49
    %p51 = scmp.ne.s32.totalorder %s43, %s45
    %p52 = scmp.eq.s32.totalorder %s14, 1
    %p53 = por %p51, %p52
    %p54 = scmp.ne.s32.totalorder %s45, %s46
    %p55 = scmp.eq.s32.totalorder %s14, 0
    %p56 = por %p54, %p55
    %p57 = scmp.ne.s32.totalorder %s45, %s46
    %p58 = scmp.eq.s32.totalorder %s15, 1
    %p59 = por %p57, %p58
    %p61 = scmp.ne.s32.totalorder %s46, %s60
    %p62 = scmp.eq.s32.totalorder %s15, 0
    %p63 = por %p61, %p62
    %s65 = sadd.s32 %s64, 1
    %p68 = scmp.eq.s32.totalorder %s9, 1
    %p69 = scmp.ne.s32.totalorder %s64, %s66
    %p70 = scmp.eq.s32.totalorder %s9, 0
    %p71 = por %p69, %p70
    %p72 = scmp.ne.s32.totalorder %s64, %s66
    %p73 = scmp.eq.s32.totalorder %s14, 1
    %p74 = por %p72, %p73
    %p75 = scmp.ne.s32.totalorder %s66, %s67
    %p76 = scmp.eq.s32.totalorder %s14, 0
    %p77 = por %p75, %p76
    %p78 = scmp.ne.s32.totalorder %s66, %s67
    %p79 = scmp.eq.s32.totalorder %s15, 1
    %p80 = por %p78, %p79
    %p82 = scmp.ne.s32.totalorder %s67, %s81
    %p83 = scmp.eq.s32.totalorder %s15, 0
    %p84 = por %p82, %p83
    %s85 = ssub.s32 %s9, %s16
    %p86 = scmp.eq.s32.totalorder %s85, 0
    %s88 = sadd.s32 %s87, 1
    %s89 = scalar_select %p86, %s87, %s88
    %p92 = pneg %p86
    %p93 = scmp.eq.s32.totalorder %s9, 1
    %p94 = por %p92, %p93
    %p95 = scmp.ne.s32.totalorder %s87, %s90
    %p96 = scmp.eq.s32.totalorder %s9, 0
    %p97 = por %p95, %p96
    %p98 = scmp.ne.s32.totalorder %s87, %s90
    %p99 = scmp.eq.s32.totalorder %s14, 1
    %p100 = por %p98, %p99
    %p101 = scmp.ne.s32.totalorder %s90, %s91
    %p102 = scmp.eq.s32.totalorder %s14, 0
    %p103 = por %p101, %p102
    %p104 = scmp.ne.s32.totalorder %s90, %s91
    %p105 = scmp.eq.s32.totalorder %s15, 1
    %p106 = por %p104, %p105
    %p108 = scmp.ne.s32.totalorder %s91, %s107
    %p109 = scmp.eq.s32.totalorder %s15, 0
    %p110 = por %p108, %p109
    %p111 = scmp.le.s32.totalorder 1, %s9
    %p112 = scmp.lt.s32.totalorder %s9, 3
    %p113 = pnand %p111, %p112
    %p114 = pneg %p113
    // Predicated region
    $region9: #{conv_bn_relu.3} parent=5 // pred_check
      _
    $region10: #{conv_bn_relu.3} parent=5 // pred_check_branch
      %116 = sbr.rel (%p113) target = $region12
    $region11: #{conv_bn_relu.3} parent=5 // pred_region
      %s117 = ssub.s32 %s9, 1
      // Predicated region
      $region13: #{conv_bn_relu.3} parent=11 // pred_check
        %p118 = pneg %p56
      $region14: #{conv_bn_relu.3} parent=11 // pred_check_branch
        %120 = sbr.rel (%p118) target = $region16
      $region15: #{conv_bn_relu.3} parent=11 // pred_region
        _
      $region16: #{conv_bn_relu.3} parent=11 // pred_fallthru
        _
      // Predicated region
      $region17: #{conv_bn_relu.3} parent=11 // pred_check
        %p121 = pneg %p77
      $region18: #{conv_bn_relu.3} parent=11 // pred_check_branch
        %123 = sbr.rel (%p121) target = $region20
      $region19: #{conv_bn_relu.3} parent=11 // pred_region
        _
      $region20: #{conv_bn_relu.3} parent=11 // pred_fallthru
        _
    $region12: #{conv_bn_relu.3} parent=5 // pred_fallthru
      _
    %p124 = scmp.lt.s32.totalorder %s9, 2
    // Predicated region
    $region21: #{conv_bn_relu.3} parent=5 // pred_check
      %p125 = pneg %p124
    $region22: #{conv_bn_relu.3} parent=5 // pred_check_branch
      %127 = sbr.rel (%p125) target = $region24
    $region23: #{conv_bn_relu.3} parent=5 // pred_region
      // Predicated region
      $region25: #{conv_bn_relu.3} parent=23 // pred_check
        %p128 = pneg %p29
      $region26: #{conv_bn_relu.3} parent=23 // pred_check_branch
        %130 = sbr.rel (%p128) target = $region28
      $region27: #{conv_bn_relu.3} parent=23 // pred_region
        %p131 = scmp.lt.s32.totalorder %s9, 1
        %s132 = scalar_select %p131, %s9, 1
        %s133 = smul.addr %s132, 3
        %s134 = smul.addr %s133, 4
        %s135 = scalar_lea.vmem %s0, %s134
      $region28: #{conv_bn_relu.3} parent=23 // pred_fallthru
        _
    $region24: #{conv_bn_relu.3} parent=5 // pred_fallthru
      _
    %p136 = scmp.le.s32.totalorder 1, %s9
    %p137 = scmp.lt.s32.totalorder %s9, 3
    %p138 = pnand %p136, %p137
    %p139 = pneg %p138
    // Predicated region
    $region29: #{conv_bn_relu.3} parent=5 // pred_check
      _
    $region30: #{conv_bn_relu.3} parent=5 // pred_check_branch
      %141 = sbr.rel (%p138) target = $region32
    $region31: #{conv_bn_relu.3} parent=5 // pred_region
      %s142 = ssub.s32 %s9, 1
      %p143 = scmp.lt.s32.totalorder %s14, 1
      %s144 = scalar_select %p143, %s14, 1
      %s145 = smul.addr %s144, 3
      %s146 = smul.addr %s145, 4
      %s147 = scalar_lea.vmem %s0, %s146
      %p148 = pneg %p35
      %p149 = pneg %p32
      %p150 = pneg %p56
      %p151 = pneg %p53
      %p152 = pneg %p77
      %p153 = pneg %p74
      %p154 = pneg %p103
      %p155 = pneg %p100
      %p156 = scmp.lt.s32.totalorder %s14, 1
      %s157 = scalar_select %p156, %s14, 1
      %s158 = smul.addr %s157, 2
      %s159 = smul.addr %s158, 8
      %s160 = scalar_lea.vmem %s3, %s159
      %p161 = scmp.lt.s32.totalorder %s14, 1
      %s162 = scalar_select %p161, %s14, 1
      %s163 = smul.addr %s162, 3
      %s164 = smul.addr %s163, 4
      %s165 = scalar_lea.vmem %s0, %s164
      %p166 = scmp.lt.s32.totalorder %s14, 1
      %s167 = scalar_select %p166, %s14, 1
      %s168 = smul.addr %s167, 2
      %s169 = smul.addr %s168, 8
      %s170 = scalar_lea.vmem %s3, %s169
      %v171 = vld [vmem:[%s2] sm:$0xff]
      %v172 = vld [vmem:[%s165] sm:$0xff]
      %v173 = vld [vmem:[%s165 + $0x8] sm:$0xf]
      %v174 = vld [vmem:[%s1] sm:$0xff]
      %s175 = scalar_lea.vmem %s1, 8
      %v176 = vld [vmem:[%s175] sm:$0xff]
      %v179 = vcombine.high %v172, %v172
      %180 = vrot.lane.b32.xlu0 %v172, 127
      %v181 = vpop.permute.xlu0 %180
      %182 = vrot.lane.b32.xlu0 %v179, 127
      %v183 = vpop.permute.xlu0 %182
      %184 = vrot.lane.b32.xlu0 %v173, 127
      %v185 = vpop.permute.xlu0 %184
      %vm186 = vcmask 1039360
      %v187 = vsel %vm186, %v181, %v183
      %v188 = vsel %vm186, %v183, %v185
      %vm189 = vcmask 31744
      %v191 = vsel %vm189, %v176, 0
      %vm193 = vcmask 1043456
      %v194 = vsel %vm193, %v187, 0
      %v196 = vsel %vm193, %v188, 0
      %v198 = vsel %vm193, %v185, 0
      %200 = vmatprep.subr.mxu0 %v196
      %201 = vmatpush1.msra.mxu0 %v194
      %202 = vmatprep.subr.mxu0 0.0
      %203 = vmatpush1.msra.mxu0 0.0
      %204 = vmatprep.subr.mxu0 0.0
      %205 = vmatpush1.msra.mxu0 0.0
      %206 = vmatprep.subr.mxu0 0.0
      %207 = vmatpush1.msra.mxu0 0.0
      %208 = vmatprep.subr.mxu0 0.0
      %209 = vmatpush1.msra.mxu0 0.0
      %210 = vmatprep.subr.mxu0 0.0
      %211 = vmatpush1.msra.mxu0 0.0
      %212 = vmatprep.subr.mxu0 0.0
      %213 = vmatpush1.msra.mxu0 0.0
      %214 = vmatprep.subr.mxu0 0.0
      %215 = vmatpush1.msra.mxu0 0.0
      %216 = vmatprep.subr.mxu0 0.0
      %217 = vmatpush1.msra.mxu0 0.0
      %218 = vmatprep.subr.mxu0 0.0
      %219 = vmatpush1.msra.mxu0 0.0
      %220 = vmatprep.subr.mxu0 0.0
      %221 = vmatpush1.msra.mxu0 0.0
      %222 = vmatprep.subr.mxu0 0.0
      %223 = vmatpush1.msra.mxu0 0.0
      %224 = vmatprep.subr.mxu0 0.0
      %225 = vmatpush1.msra.mxu0 0.0
      %226 = vmatprep.subr.mxu0 0.0
      %227 = vmatpush1.msra.mxu0 0.0
      %228 = vmatprep.subr.mxu0 0.0
      %229 = vmatpush1.msra.mxu0 0.0
      %230 = vmatprep.subr.mxu0 0.0
      %231 = vmatpush1.msra.mxu0 0.0
      %232 = vmatprep.subr.mxu0 0.0
      %233 = vmatpush1.msra.mxu0 0.0
      %234 = vmatprep.subr.mxu0 0.0
      %235 = vmatpush1.msra.mxu0 0.0
      %236 = vmatprep.subr.mxu0 0.0
      %237 = vmatpush1.msra.mxu0 0.0
      %238 = vmatprep.subr.mxu0 0.0
      %239 = vmatpush1.msra.mxu0 0.0
      %240 = vmatprep.subr.mxu0 0.0
      %241 = vmatpush1.msra.mxu0 0.0
      %242 = vmatprep.subr.mxu0 0.0
      %243 = vmatpush1.msra.mxu0 0.0
      %244 = vmatprep.subr.mxu0 0.0
      %245 = vmatpush1.msra.mxu0 0.0
      %246 = vmatprep.subr.mxu0 0.0
      %247 = vmatpush1.msra.mxu0 0.0
      %248 = vmatprep.subr.mxu0 0.0
      %249 = vmatpush1.msra.mxu0 0.0
      %250 = vmatprep.subr.mxu0 0.0
      %251 = vmatpush1.msra.mxu0 0.0
      %252 = vmatprep.subr.mxu0 0.0
      %253 = vmatpush1.msra.mxu0 0.0
      %254 = vmatprep.subr.mxu0 0.0
      %255 = vmatpush1.msra.mxu0 0.0
      %256 = vmatprep.subr.mxu0 0.0
      %257 = vmatpush1.msra.mxu0 0.0
      %258 = vmatprep.subr.mxu0 0.0
      %259 = vmatpush1.msra.mxu0 0.0
      %260 = vmatprep.subr.mxu0 0.0
      %261 = vmatpush1.msra.mxu0 0.0
      %262 = vmatprep.subr.mxu0 0.0
      %263 = vmatpush1.msra.mxu0 0.0
      %264 = vmatprep.mubr.f32.mxu0 0.0
      %265 = vmatmul.mubr.f32.gmra.mrb[0].mxu0 %v191
      %v266 = vpop.f32.mrb[0].mxu0
      %v267 = vadd.f32 0.0, %v266
      %v268 = vpop.f32.mrb[0].mxu0
      %v269 = vadd.f32 0.0, %v268
      %270 = vdwg.mxu0
      %271 = vmatprep.subr.mxu0 0.0
      %272 = vmatpush1.msra.mxu0 %v198
      %273 = vmatprep.subr.mxu0 0.0
      %274 = vmatpush1.msra.mxu0 0.0
      %275 = vmatprep.subr.mxu0 0.0
      %276 = vmatpush1.msra.mxu0 0.0
      %277 = vmatprep.subr.mxu0 0.0
      %278 = vmatpush1.msra.mxu0 0.0
      %279 = vmatprep.subr.mxu0 0.0
      %280 = vmatpush1.msra.mxu0 0.0
      %281 = vmatprep.subr.mxu0 0.0
      %282 = vmatpush1.msra.mxu0 0.0
      %283 = vmatprep.subr.mxu0 0.0
      %284 = vmatpush1.msra.mxu0 0.0
      %285 = vmatprep.subr.mxu0 0.0
      %286 = vmatpush1.msra.mxu0 0.0
      %287 = vmatprep.subr.mxu0 0.0
      %288 = vmatpush1.msra.mxu0 0.0
      %289 = vmatprep.subr.mxu0 0.0
      %290 = vmatpush1.msra.mxu0 0.0
      %291 = vmatprep.subr.mxu0 0.0
      %292 = vmatpush1.msra.mxu0 0.0
      %293 = vmatprep.subr.mxu0 0.0
      %294 = vmatpush1.msra.mxu0 0.0
      %295 = vmatprep.subr.mxu0 0.0
      %296 = vmatpush1.msra.mxu0 0.0
      %297 = vmatprep.subr.mxu0 0.0
      %298 = vmatpush1.msra.mxu0 0.0
      %299 = vmatprep.subr.mxu0 0.0
      %300 = vmatpush1.msra.mxu0 0.0
      %301 = vmatprep.subr.mxu0 0.0
      %302 = vmatpush1.msra.mxu0 0.0
      %303 = vmatprep.subr.mxu0 0.0
      %304 = vmatpush1.msra.mxu0 0.0
      %305 = vmatprep.subr.mxu0 0.0
      %306 = vmatpush1.msra.mxu0 0.0
      %307 = vmatprep.subr.mxu0 0.0
      %308 = vmatpush1.msra.mxu0 0.0
      %309 = vmatprep.subr.mxu0 0.0
      %310 = vmatpush1.msra.mxu0 0.0
      %311 = vmatprep.subr.mxu0 0.0
      %312 = vmatpush1.msra.mxu0 0.0
      %313 = vmatprep.subr.mxu0 0.0
      %314 = vmatpush1.msra.mxu0 0.0
      %315 = vmatprep.subr.mxu0 0.0
      %316 = vmatpush1.msra.mxu0 0.0
      %317 = vmatprep.subr.mxu0 0.0
      %318 = vmatpush1.msra.mxu0 0.0
      %319 = vmatprep.subr.mxu0 0.0
      %320 = vmatpush1.msra.mxu0 0.0
      %321 = vmatprep.subr.mxu0 0.0
      %322 = vmatpush1.msra.mxu0 0.0
      %323 = vmatprep.subr.mxu0 0.0
      %324 = vmatpush1.msra.mxu0 0.0
      %325 = vmatprep.subr.mxu0 0.0
      %326 = vmatpush1.msra.mxu0 0.0
      %327 = vmatprep.subr.mxu0 0.0
      %328 = vmatpush1.msra.mxu0 0.0
      %329 = vmatprep.subr.mxu0 0.0
      %330 = vmatpush1.msra.mxu0 0.0
      %331 = vmatprep.subr.mxu0 0.0
      %332 = vmatpush1.msra.mxu0 0.0
      %333 = vmatprep.subr.mxu0 0.0
      %334 = vmatpush1.msra.mxu0 0.0
      %335 = vmatprep.mubr.f32.mxu0 0.0
      %336 = vmatmul.mubr.f32.gmra.mrb[0].mxu0 %v191
      %v337 = vpop.f32.mrb[0].mxu0
      %v338 = vadd.f32 0.0, %v337
      %v339 = vpop.f32.mrb[0].mxu0
      %340 = vdwg.mxu0
      %v342 = vsel %vm189, %v174, 0
      %v344 = vsel %vm193, %v172, 0
      %v346 = vsel %vm193, %v179, 0
      %v348 = vsel %vm193, %v173, 0
      %350 = vmatprep.subr.mxu0 %v346
      %351 = vmatpush1.msra.mxu0 %v344
      %352 = vmatprep.subr.mxu0 0.0
      %353 = vmatpush1.msra.mxu0 0.0
      %354 = vmatprep.subr.mxu0 0.0
      %355 = vmatpush1.msra.mxu0 0.0
      %356 = vmatprep.subr.mxu0 0.0
      %357 = vmatpush1.msra.mxu0 0.0
      %358 = vmatprep.subr.mxu0 0.0
      %359 = vmatpush1.msra.mxu0 0.0
      %360 = vmatprep.subr.mxu0 0.0
      %361 = vmatpush1.msra.mxu0 0.0
      %362 = vmatprep.subr.mxu0 0.0
      %363 = vmatpush1.msra.mxu0 0.0
      %364 = vmatprep.subr.mxu0 0.0
      %365 = vmatpush1.msra.mxu0 0.0
      %366 = vmatprep.subr.mxu0 0.0
      %367 = vmatpush1.msra.mxu0 0.0
      %368 = vmatprep.subr.mxu0 0.0
      %369 = vmatpush1.msra.mxu0 0.0
      %370 = vmatprep.subr.mxu0 0.0
      %371 = vmatpush1.msra.mxu0 0.0
      %372 = vmatprep.subr.mxu0 0.0
      %373 = vmatpush1.msra.mxu0 0.0
      %374 = vmatprep.subr.mxu0 0.0
      %375 = vmatpush1.msra.mxu0 0.0
      %376 = vmatprep.subr.mxu0 0.0
      %377 = vmatpush1.msra.mxu0 0.0
      %378 = vmatprep.subr.mxu0 0.0
      %379 = vmatpush1.msra.mxu0 0.0
      %380 = vmatprep.subr.mxu0 0.0
      %381 = vmatpush1.msra.mxu0 0.0
      %382 = vmatprep.subr.mxu0 0.0
      %383 = vmatpush1.msra.mxu0 0.0
      %384 = vmatprep.subr.mxu0 0.0
      %385 = vmatpush1.msra.mxu0 0.0
      %386 = vmatprep.subr.mxu0 0.0
      %387 = vmatpush1.msra.mxu0 0.0
      %388 = vmatprep.subr.mxu0 0.0
      %389 = vmatpush1.msra.mxu0 0.0
      %390 = vmatprep.subr.mxu0 0.0
      %391 = vmatpush1.msra.mxu0 0.0
      %392 = vmatprep.subr.mxu0 0.0
      %393 = vmatpush1.msra.mxu0 0.0
      %394 = vmatprep.subr.mxu0 0.0
      %395 = vmatpush1.msra.mxu0 0.0
      %396 = vmatprep.subr.mxu0 0.0
      %397 = vmatpush1.msra.mxu0 0.0
      %398 = vmatprep.subr.mxu0 0.0
      %399 = vmatpush1.msra.mxu0 0.0
      %400 = vmatprep.subr.mxu0 0.0
      %401 = vmatpush1.msra.mxu0 0.0
      %402 = vmatprep.subr.mxu0 0.0
      %403 = vmatpush1.msra.mxu0 0.0
      %404 = vmatprep.subr.mxu0 0.0
      %405 = vmatpush1.msra.mxu0 0.0
      %406 = vmatprep.subr.mxu0 0.0
      %407 = vmatpush1.msra.mxu0 0.0
      %408 = vmatprep.subr.mxu0 0.0
      %409 = vmatpush1.msra.mxu0 0.0
      %410 = vmatprep.subr.mxu0 0.0
      %411 = vmatpush1.msra.mxu0 0.0
      %412 = vmatprep.subr.mxu0 0.0
      %413 = vmatpush1.msra.mxu0 0.0
      %414 = vmatprep.mubr.f32.mxu0 0.0
      %415 = vmatmul.mubr.f32.gmra.mrb[0].mxu0 %v342
      %v416 = vpop.f32.mrb[0].mxu0
      %v417 = vadd.f32 %v267, %v416
      %v418 = vpop.f32.mrb[0].mxu0
      %v419 = vadd.f32 %v269, %v418
      %420 = vdwg.mxu0
      %421 = vmatprep.subr.mxu0 0.0
      %422 = vmatpush1.msra.mxu0 %v348
      %423 = vmatprep.subr.mxu0 0.0
      %424 = vmatpush1.msra.mxu0 0.0
      %425 = vmatprep.subr.mxu0 0.0
      %426 = vmatpush1.msra.mxu0 0.0
      %427 = vmatprep.subr.mxu0 0.0
      %428 = vmatpush1.msra.mxu0 0.0
      %429 = vmatprep.subr.mxu0 0.0
      %430 = vmatpush1.msra.mxu0 0.0
      %431 = vmatprep.subr.mxu0 0.0
      %432 = vmatpush1.msra.mxu0 0.0
      %433 = vmatprep.subr.mxu0 0.0
      %434 = vmatpush1.msra.mxu0 0.0
      %435 = vmatprep.subr.mxu0 0.0
      %436 = vmatpush1.msra.mxu0 0.0
      %437 = vmatprep.subr.mxu0 0.0
      %438 = vmatpush1.msra.mxu0 0.0
      %439 = vmatprep.subr.mxu0 0.0
      %440 = vmatpush1.msra.mxu0 0.0
      %441 = vmatprep.subr.mxu0 0.0
      %442 = vmatpush1.msra.mxu0 0.0
      %443 = vmatprep.subr.mxu0 0.0
      %444 = vmatpush1.msra.mxu0 0.0
      %445 = vmatprep.subr.mxu0 0.0
      %446 = vmatpush1.msra.mxu0 0.0
      %447 = vmatprep.subr.mxu0 0.0
      %448 = vmatpush1.msra.mxu0 0.0
      %449 = vmatprep.subr.mxu0 0.0
      %450 = vmatpush1.msra.mxu0 0.0
      %451 = vmatprep.subr.mxu0 0.0
      %452 = vmatpush1.msra.mxu0 0.0
      %453 = vmatprep.subr.mxu0 0.0
      %454 = vmatpush1.msra.mxu0 0.0
      %455 = vmatprep.subr.mxu0 0.0
      %456 = vmatpush1.msra.mxu0 0.0
      %457 = vmatprep.subr.mxu0 0.0
      %458 = vmatpush1.msra.mxu0 0.0
      %459 = vmatprep.subr.mxu0 0.0
      %460 = vmatpush1.msra.mxu0 0.0
      %461 = vmatprep.subr.mxu0 0.0
      %462 = vmatpush1.msra.mxu0 0.0
      %463 = vmatprep.subr.mxu0 0.0
      %464 = vmatpush1.msra.mxu0 0.0
      %465 = vmatprep.subr.mxu0 0.0
      %466 = vmatpush1.msra.mxu0 0.0
      %467 = vmatprep.subr.mxu0 0.0
      %468 = vmatpush1.msra.mxu0 0.0
      %469 = vmatprep.subr.mxu0 0.0
      %470 = vmatpush1.msra.mxu0 0.0
      %471 = vmatprep.subr.mxu0 0.0
      %472 = vmatpush1.msra.mxu0 0.0
      %473 = vmatprep.subr.mxu0 0.0
      %474 = vmatpush1.msra.mxu0 0.0
      %475 = vmatprep.subr.mxu0 0.0
      %476 = vmatpush1.msra.mxu0 0.0
      %477 = vmatprep.subr.mxu0 0.0
      %478 = vmatpush1.msra.mxu0 0.0
      %479 = vmatprep.subr.mxu0 0.0
      %480 = vmatpush1.msra.mxu0 0.0
      %481 = vmatprep.subr.mxu0 0.0
      %482 = vmatpush1.msra.mxu0 0.0
      %483 = vmatprep.subr.mxu0 0.0
      %484 = vmatpush1.msra.mxu0 0.0
      %485 = vmatprep.mubr.f32.mxu0 0.0
      %486 = vmatmul.mubr.f32.gmra.mrb[0].mxu0 %v342
      %v487 = vpop.f32.mrb[0].mxu0
      %v488 = vadd.f32 %v338, %v487
      %v489 = vpop.f32.mrb[0].mxu0
      %490 = vdwg.mxu0
      %v491 = vld [vmem:[%s165] sm:$0xff]
      %v492 = vld [vmem:[%s165 + $0x8] sm:$0xf]
      %s493 = scalar_lea.vmem %s1, 16
      %v494 = vld [vmem:[%s493] sm:$0xff]
      %v497 = vcombine.high %v491, %v491
      %498 = vrot.lane.b32.xlu0 %v491, 126
      %v499 = vpop.permute.xlu0 %498
      %500 = vrot.lane.b32.xlu0 %v497, 126
      %v501 = vpop.permute.xlu0 %500
      %502 = vrot.lane.b32.xlu0 %v492, 126
      %v503 = vpop.permute.xlu0 %502
      %vm504 = vcmask 1031168
      %v505 = vsel %vm504, %v499, %v501
      %v506 = vsel %vm504, %v501, %v503
      %v508 = vsel %vm189, %v494, 0
      %v510 = vsel %vm193, %v505, 0
      %v512 = vsel %vm193, %v506, 0
      %v514 = vsel %vm193, %v503, 0
      %516 = vmatprep.subr.mxu0 %v512
      %517 = vmatpush1.msra.mxu0 %v510
      %518 = vmatprep.subr.mxu0 0.0
      %519 = vmatpush1.msra.mxu0 0.0
      %520 = vmatprep.subr.mxu0 0.0
      %521 = vmatpush1.msra.mxu0 0.0
      %522 = vmatprep.subr.mxu0 0.0
      %523 = vmatpush1.msra.mxu0 0.0
      %524 = vmatprep.subr.mxu0 0.0
      %525 = vmatpush1.msra.mxu0 0.0
      %526 = vmatprep.subr.mxu0 0.0
      %527 = vmatpush1.msra.mxu0 0.0
      %528 = vmatprep.subr.mxu0 0.0
      %529 = vmatpush1.msra.mxu0 0.0
      %530 = vmatprep.subr.mxu0 0.0
      %531 = vmatpush1.msra.mxu0 0.0
      %532 = vmatprep.subr.mxu0 0.0
      %533 = vmatpush1.msra.mxu0 0.0
      %534 = vmatprep.subr.mxu0 0.0
      %535 = vmatpush1.msra.mxu0 0.0
      %536 = vmatprep.subr.mxu0 0.0
      %537 = vmatpush1.msra.mxu0 0.0
      %538 = vmatprep.subr.mxu0 0.0
      %539 = vmatpush1.msra.mxu0 0.0
      %540 = vmatprep.subr.mxu0 0.0
      %541 = vmatpush1.msra.mxu0 0.0
      %542 = vmatprep.subr.mxu0 0.0
      %543 = vmatpush1.msra.mxu0 0.0
      %544 = vmatprep.subr.mxu0 0.0
      %545 = vmatpush1.msra.mxu0 0.0
      %546 = vmatprep.subr.mxu0 0.0
      %547 = vmatpush1.msra.mxu0 0.0
      %548 = vmatprep.subr.mxu0 0.0
      %549 = vmatpush1.msra.mxu0 0.0
      %550 = vmatprep.subr.mxu0 0.0
      %551 = vmatpush1.msra.mxu0 0.0
      %552 = vmatprep.subr.mxu0 0.0
      %553 = vmatpush1.msra.mxu0 0.0
      %554 = vmatprep.subr.mxu0 0.0
      %555 = vmatpush1.msra.mxu0 0.0
      %556 = vmatprep.subr.mxu0 0.0
      %557 = vmatpush1.msra.mxu0 0.0
      %558 = vmatprep.subr.mxu0 0.0
      %559 = vmatpush1.msra.mxu0 0.0
      %560 = vmatprep.subr.mxu0 0.0
      %561 = vmatpush1.msra.mxu0 0.0
      %562 = vmatprep.subr.mxu0 0.0
      %563 = vmatpush1.msra.mxu0 0.0
      %564 = vmatprep.subr.mxu0 0.0
      %565 = vmatpush1.msra.mxu0 0.0
      %566 = vmatprep.subr.mxu0 0.0
      %567 = vmatpush1.msra.mxu0 0.0
      %568 = vmatprep.subr.mxu0 0.0
      %569 = vmatpush1.msra.mxu0 0.0
      %570 = vmatprep.subr.mxu0 0.0
      %571 = vmatpush1.msra.mxu0 0.0
      %572 = vmatprep.subr.mxu0 0.0
      %573 = vmatpush1.msra.mxu0 0.0
      %574 = vmatprep.subr.mxu0 0.0
      %575 = vmatpush1.msra.mxu0 0.0
      %576 = vmatprep.subr.mxu0 0.0
      %577 = vmatpush1.msra.mxu0 0.0
      %578 = vmatprep.subr.mxu0 0.0
      %579 = vmatpush1.msra.mxu0 0.0
      %580 = vmatprep.mubr.f32.mxu0 0.0
      %581 = vmatmul.mubr.f32.gmra.mrb[0].mxu0 %v508
      %v582 = vpop.f32.mrb[0].mxu0
      %v583 = vadd.f32 0.0, %v582
      %v584 = vpop.f32.mrb[0].mxu0
      %v585 = vadd.f32 0.0, %v584
      %586 = vdwg.mxu0
      %587 = vmatprep.subr.mxu0 0.0
      %588 = vmatpush1.msra.mxu0 %v514
      %589 = vmatprep.subr.mxu0 0.0
      %590 = vmatpush1.msra.mxu0 0.0
      %591 = vmatprep.subr.mxu0 0.0
      %592 = vmatpush1.msra.mxu0 0.0
      %593 = vmatprep.subr.mxu0 0.0
      %594 = vmatpush1.msra.mxu0 0.0
      %595 = vmatprep.subr.mxu0 0.0
      %596 = vmatpush1.msra.mxu0 0.0
      %597 = vmatprep.subr.mxu0 0.0
      %598 = vmatpush1.msra.mxu0 0.0
      %599 = vmatprep.subr.mxu0 0.0
      %600 = vmatpush1.msra.mxu0 0.0
      %601 = vmatprep.subr.mxu0 0.0
      %602 = vmatpush1.msra.mxu0 0.0
      %603 = vmatprep.subr.mxu0 0.0
      %604 = vmatpush1.msra.mxu0 0.0
      %605 = vmatprep.subr.mxu0 0.0
      %606 = vmatpush1.msra.mxu0 0.0
      %607 = vmatprep.subr.mxu0 0.0
      %608 = vmatpush1.msra.mxu0 0.0
      %609 = vmatprep.subr.mxu0 0.0
      %610 = vmatpush1.msra.mxu0 0.0
      %611 = vmatprep.subr.mxu0 0.0
      %612 = vmatpush1.msra.mxu0 0.0
      %613 = vmatprep.subr.mxu0 0.0
      %614 = vmatpush1.msra.mxu0 0.0
      %615 = vmatprep.subr.mxu0 0.0
      %616 = vmatpush1.msra.mxu0 0.0
      %617 = vmatprep.subr.mxu0 0.0
      %618 = vmatpush1.msra.mxu0 0.0
      %619 = vmatprep.subr.mxu0 0.0
      %620 = vmatpush1.msra.mxu0 0.0
      %621 = vmatprep.subr.mxu0 0.0
      %622 = vmatpush1.msra.mxu0 0.0
      %623 = vmatprep.subr.mxu0 0.0
      %624 = vmatpush1.msra.mxu0 0.0
      %625 = vmatprep.subr.mxu0 0.0
      %626 = vmatpush1.msra.mxu0 0.0
      %627 = vmatprep.subr.mxu0 0.0
      %628 = vmatpush1.msra.mxu0 0.0
      %629 = vmatprep.subr.mxu0 0.0
      %630 = vmatpush1.msra.mxu0 0.0
      %631 = vmatprep.subr.mxu0 0.0
      %632 = vmatpush1.msra.mxu0 0.0
      %633 = vmatprep.subr.mxu0 0.0
      %634 = vmatpush1.msra.mxu0 0.0
      %635 = vmatprep.subr.mxu0 0.0
      %636 = vmatpush1.msra.mxu0 0.0
      %637 = vmatprep.subr.mxu0 0.0
      %638 = vmatpush1.msra.mxu0 0.0
      %639 = vmatprep.subr.mxu0 0.0
      %640 = vmatpush1.msra.mxu0 0.0
      %641 = vmatprep.subr.mxu0 0.0
      %642 = vmatpush1.msra.mxu0 0.0
      %643 = vmatprep.subr.mxu0 0.0
      %644 = vmatpush1.msra.mxu0 0.0
      %645 = vmatprep.subr.mxu0 0.0
      %646 = vmatpush1.msra.mxu0 0.0
      %647 = vmatprep.subr.mxu0 0.0
      %648 = vmatpush1.msra.mxu0 0.0
      %649 = vmatprep.subr.mxu0 0.0
      %650 = vmatpush1.msra.mxu0 0.0
      %651 = vmatprep.mubr.f32.mxu0 0.0
      %652 = vmatmul.mubr.f32.gmra.mrb[0].mxu0 %v508
      %v653 = vpop.f32.mrb[0].mxu0
      %v654 = vadd.f32 0.0, %v653
      %v655 = vpop.f32.mrb[0].mxu0
      %656 = vdwg.mxu0
      %v657 = vadd.f32 %v417, %v583
      %v658 = vadd.f32 %v419, %v585
      %v659 = vadd.f32 %v488, %v654
      %v660 = vld [vmem:[%s165] sm:$0xff]
      %v661 = vld [vmem:[%s165 + $0x8] sm:$0xf]
      %s662 = scalar_lea.vmem %s1, 24
      %v663 = vld [vmem:[%s662] sm:$0xff]
      %v666 = vcombine.high %v660, %v660
      %667 = vrot.lane.b32.xlu0 %v660, 110
      %v668 = vpop.permute.xlu0 %667
      %669 = vrot.lane.b32.xlu0 %v666, 110
      %v670 = vpop.permute.xlu0 %669
      %671 = vrot.lane.b32.xlu0 %v661, 110
      %v672 = vpop.permute.xlu0 %671
      %vm673 = vcmask 900096
      %v674 = vsel %vm673, %v668, %v670
      %v675 = vsel %vm673, %v670, %v672
      %v677 = vsel %vm189, %v663, 0
      %v679 = vsel %vm193, %v674, 0
      %v681 = vsel %vm193, %v675, 0
      %v683 = vsel %vm193, %v672, 0
      %685 = vmatprep.subr.mxu0 %v681
      %686 = vmatpush1.msra.mxu0 %v679
      %687 = vmatprep.subr.mxu0 0.0
      %688 = vmatpush1.msra.mxu0 0.0
      %689 = vmatprep.subr.mxu0 0.0
      %690 = vmatpush1.msra.mxu0 0.0
      %691 = vmatprep.subr.mxu0 0.0
      %692 = vmatpush1.msra.mxu0 0.0
      %693 = vmatprep.subr.mxu0 0.0
      %694 = vmatpush1.msra.mxu0 0.0
      %695 = vmatprep.subr.mxu0 0.0
      %696 = vmatpush1.msra.mxu0 0.0
      %697 = vmatprep.subr.mxu0 0.0
      %698 = vmatpush1.msra.mxu0 0.0
      %699 = vmatprep.subr.mxu0 0.0
      %700 = vmatpush1.msra.mxu0 0.0
      %701 = vmatprep.subr.mxu0 0.0
      %702 = vmatpush1.msra.mxu0 0.0
      %703 = vmatprep.subr.mxu0 0.0
      %704 = vmatpush1.msra.mxu0 0.0
      %705 = vmatprep.subr.mxu0 0.0
      %706 = vmatpush1.msra.mxu0 0.0
      %707 = vmatprep.subr.mxu0 0.0
      %708 = vmatpush1.msra.mxu0 0.0
      %709 = vmatprep.subr.mxu0 0.0
      %710 = vmatpush1.msra.mxu0 0.0
      %711 = vmatprep.subr.mxu0 0.0
      %712 = vmatpush1.msra.mxu0 0.0
      %713 = vmatprep.subr.mxu0 0.0
      %714 = vmatpush1.msra.mxu0 0.0
      %715 = vmatprep.subr.mxu0 0.0
      %716 = vmatpush1.msra.mxu0 0.0
      %717 = vmatprep.subr.mxu0 0.0
      %718 = vmatpush1.msra.mxu0 0.0
      %719 = vmatprep.subr.mxu0 0.0
      %720 = vmatpush1.msra.mxu0 0.0
      %721 = vmatprep.subr.mxu0 0.0
      %722 = vmatpush1.msra.mxu0 0.0
      %723 = vmatprep.subr.mxu0 0.0
      %724 = vmatpush1.msra.mxu0 0.0
      %725 = vmatprep.subr.mxu0 0.0
      %726 = vmatpush1.msra.mxu0 0.0
      %727 = vmatprep.subr.mxu0 0.0
      %728 = vmatpush1.msra.mxu0 0.0
      %729 = vmatprep.subr.mxu0 0.0
      %730 = vmatpush1.msra.mxu0 0.0
      %731 = vmatprep.subr.mxu0 0.0
      %732 = vmatpush1.msra.mxu0 0.0
      %733 = vmatprep.subr.mxu0 0.0
      %734 = vmatpush1.msra.mxu0 0.0
      %735 = vmatprep.subr.mxu0 0.0
      %736 = vmatpush1.msra.mxu0 0.0
      %737 = vmatprep.subr.mxu0 0.0
      %738 = vmatpush1.msra.mxu0 0.0
      %739 = vmatprep.subr.mxu0 0.0
      %740 = vmatpush1.msra.mxu0 0.0
      %741 = vmatprep.subr.mxu0 0.0
      %742 = vmatpush1.msra.mxu0 0.0
      %743 = vmatprep.subr.mxu0 0.0
      %744 = vmatpush1.msra.mxu0 0.0
      %745 = vmatprep.subr.mxu0 0.0
      %746 = vmatpush1.msra.mxu0 0.0
      %747 = vmatprep.subr.mxu0 0.0
      %748 = vmatpush1.msra.mxu0 0.0
      %749 = vmatprep.mubr.f32.mxu0 0.0
      %750 = vmatmul.mubr.f32.gmra.mrb[0].mxu0 %v677
      %v751 = vpop.f32.mrb[0].mxu0
      %v752 = vadd.f32 0.0, %v751
      %v753 = vpop.f32.mrb[0].mxu0
      %v754 = vadd.f32 0.0, %v753
      %755 = vdwg.mxu0
      %756 = vmatprep.subr.mxu0 0.0
      %757 = vmatpush1.msra.mxu0 %v683
      %758 = vmatprep.subr.mxu0 0.0
      %759 = vmatpush1.msra.mxu0 0.0
      %760 = vmatprep.subr.mxu0 0.0
      %761 = vmatpush1.msra.mxu0 0.0
      %762 = vmatprep.subr.mxu0 0.0
      %763 = vmatpush1.msra.mxu0 0.0
      %764 = vmatprep.subr.mxu0 0.0
      %765 = vmatpush1.msra.mxu0 0.0
      %766 = vmatprep.subr.mxu0 0.0
      %767 = vmatpush1.msra.mxu0 0.0
      %768 = vmatprep.subr.mxu0 0.0
      %769 = vmatpush1.msra.mxu0 0.0
      %770 = vmatprep.subr.mxu0 0.0
      %771 = vmatpush1.msra.mxu0 0.0
      %772 = vmatprep.subr.mxu0 0.0
      %773 = vmatpush1.msra.mxu0 0.0
      %774 = vmatprep.subr.mxu0 0.0
      %775 = vmatpush1.msra.mxu0 0.0
      %776 = vmatprep.subr.mxu0 0.0
      %777 = vmatpush1.msra.mxu0 0.0
      %778 = vmatprep.subr.mxu0 0.0
      %779 = vmatpush1.msra.mxu0 0.0
      %780 = vmatprep.subr.mxu0 0.0
      %781 = vmatpush1.msra.mxu0 0.0
      %782 = vmatprep.subr.mxu0 0.0
      %783 = vmatpush1.msra.mxu0 0.0
      %784 = vmatprep.subr.mxu0 0.0
      %785 = vmatpush1.msra.mxu0 0.0
      %786 = vmatprep.subr.mxu0 0.0
      %787 = vmatpush1.msra.mxu0 0.0
      %788 = vmatprep.subr.mxu0 0.0
      %789 = vmatpush1.msra.mxu0 0.0
      %790 = vmatprep.subr.mxu0 0.0
      %791 = vmatpush1.msra.mxu0 0.0
      %792 = vmatprep.subr.mxu0 0.0
      %793 = vmatpush1.msra.mxu0 0.0
      %794 = vmatprep.subr.mxu0 0.0
      %795 = vmatpush1.msra.mxu0 0.0
      %796 = vmatprep.subr.mxu0 0.0
      %797 = vmatpush1.msra.mxu0 0.0
      %798 = vmatprep.subr.mxu0 0.0
      %799 = vmatpush1.msra.mxu0 0.0
      %800 = vmatprep.subr.mxu0 0.0
      %801 = vmatpush1.msra.mxu0 0.0
      %802 = vmatprep.subr.mxu0 0.0
      %803 = vmatpush1.msra.mxu0 0.0
      %804 = vmatprep.subr.mxu0 0.0
      %805 = vmatpush1.msra.mxu0 0.0
      %806 = vmatprep.subr.mxu0 0.0
      %807 = vmatpush1.msra.mxu0 0.0
      %808 = vmatprep.subr.mxu0 0.0
      %809 = vmatpush1.msra.mxu0 0.0
      %810 = vmatprep.subr.mxu0 0.0
      %811 = vmatpush1.msra.mxu0 0.0
      %812 = vmatprep.subr.mxu0 0.0
      %813 = vmatpush1.msra.mxu0 0.0
      %814 = vmatprep.subr.mxu0 0.0
      %815 = vmatpush1.msra.mxu0 0.0
      %816 = vmatprep.subr.mxu0 0.0
      %817 = vmatpush1.msra.mxu0 0.0
      %818 = vmatprep.subr.mxu0 0.0
      %819 = vmatpush1.msra.mxu0 0.0
      %820 = vmatprep.mubr.f32.mxu0 0.0
      %821 = vmatmul.mubr.f32.gmra.mrb[0].mxu0 %v677
      %v822 = vpop.f32.mrb[0].mxu0
      %v823 = vadd.f32 0.0, %v822
      %v824 = vpop.f32.mrb[0].mxu0
      %825 = vdwg.mxu0
      %v826 = vadd.f32 %v657, %v752
      %v827 = vadd.f32 %v658, %v754
      %v828 = vadd.f32 %v659, %v823
      %v829 = vld [vmem:[%s165] sm:$0xff]
      %v830 = vld [vmem:[%s165 + $0x8] sm:$0xf]
      %s831 = scalar_lea.vmem %s1, 32
      %v832 = vld [vmem:[%s831] sm:$0xff]
      %v835 = vcombine.high %v829, %v829
      %836 = vrot.lane.b32.xlu0 %v829, 109
      %v837 = vpop.permute.xlu0 %836
      %838 = vrot.lane.b32.xlu0 %v835, 109
      %v839 = vpop.permute.xlu0 %838
      %840 = vrot.lane.b32.xlu0 %v830, 109
      %v841 = vpop.permute.xlu0 %840
      %vm842 = vcmask 891904
      %v843 = vsel %vm842, %v837, %v839
      %v844 = vsel %vm842, %v839, %v841
      %v846 = vsel %vm189, %v832, 0
      %v848 = vsel %vm193, %v843, 0
      %v850 = vsel %vm193, %v844, 0
      %v852 = vsel %vm193, %v841, 0
      %854 = vmatprep.subr.mxu0 %v850
      %855 = vmatpush1.msra.mxu0 %v848
      %856 = vmatprep.subr.mxu0 0.0
      %857 = vmatpush1.msra.mxu0 0.0
      %858 = vmatprep.subr.mxu0 0.0
      %859 = vmatpush1.msra.mxu0 0.0
      %860 = vmatprep.subr.mxu0 0.0
      %861 = vmatpush1.msra.mxu0 0.0
      %862 = vmatprep.subr.mxu0 0.0
      %863 = vmatpush1.msra.mxu0 0.0
      %864 = vmatprep.subr.mxu0 0.0
      %865 = vmatpush1.msra.mxu0 0.0
      %866 = vmatprep.subr.mxu0 0.0
      %867 = vmatpush1.msra.mxu0 0.0
      %868 = vmatprep.subr.mxu0 0.0
      %869 = vmatpush1.msra.mxu0 0.0
      %870 = vmatprep.subr.mxu0 0.0
      %871 = vmatpush1.msra.mxu0 0.0
      %872 = vmatprep.subr.mxu0 0.0
      %873 = vmatpush1.msra.mxu0 0.0
      %874 = vmatprep.subr.mxu0 0.0
      %875 = vmatpush1.msra.mxu0 0.0
      %876 = vmatprep.subr.mxu0 0.0
      %877 = vmatpush1.msra.mxu0 0.0
      %878 = vmatprep.subr.mxu0 0.0
      %879 = vmatpush1.msra.mxu0 0.0
      %880 = vmatprep.subr.mxu0 0.0
      %881 = vmatpush1.msra.mxu0 0.0
      %882 = vmatprep.subr.mxu0 0.0
      %883 = vmatpush1.msra.mxu0 0.0
      %884 = vmatprep.subr.mxu0 0.0
      %885 = vmatpush1.msra.mxu0 0.0
      %886 = vmatprep.subr.mxu0 0.0
      %887 = vmatpush1.msra.mxu0 0.0
      %888 = vmatprep.subr.mxu0 0.0
      %889 = vmatpush1.msra.mxu0 0.0
      %890 = vmatprep.subr.mxu0 0.0
      %891 = vmatpush1.msra.mxu0 0.0
      %892 = vmatprep.subr.mxu0 0.0
      %893 = vmatpush1.msra.mxu0 0.0
      %894 = vmatprep.subr.mxu0 0.0
      %895 = vmatpush1.msra.mxu0 0.0
      %896 = vmatprep.subr.mxu0 0.0
      %897 = vmatpush1.msra.mxu0 0.0
      %898 = vmatprep.subr.mxu0 0.0
      %899 = vmatpush1.msra.mxu0 0.0
      %900 = vmatprep.subr.mxu0 0.0
      %901 = vmatpush1.msra.mxu0 0.0
      %902 = vmatprep.subr.mxu0 0.0
      %903 = vmatpush1.msra.mxu0 0.0
      %904 = vmatprep.subr.mxu0 0.0
      %905 = vmatpush1.msra.mxu0 0.0
      %906 = vmatprep.subr.mxu0 0.0
      %907 = vmatpush1.msra.mxu0 0.0
      %908 = vmatprep.subr.mxu0 0.0
      %909 = vmatpush1.msra.mxu0 0.0
      %910 = vmatprep.subr.mxu0 0.0
      %911 = vmatpush1.msra.mxu0 0.0
      %912 = vmatprep.subr.mxu0 0.0
      %913 = vmatpush1.msra.mxu0 0.0
      %914 = vmatprep.subr.mxu0 0.0
      %915 = vmatpush1.msra.mxu0 0.0
      %916 = vmatprep.subr.mxu0 0.0
      %917 = vmatpush1.msra.mxu0 0.0
      %918 = vmatprep.mubr.f32.mxu0 0.0
      %919 = vmatmul.mubr.f32.gmra.mrb[0].mxu0 %v846
      %v920 = vpop.f32.mrb[0].mxu0
      %v921 = vadd.f32 0.0, %v920
      %v922 = vpop.f32.mrb[0].mxu0
      %v923 = vadd.f32 0.0, %v922
      %924 = vdwg.mxu0
      %925 = vmatprep.subr.mxu0 0.0
      %926 = vmatpush1.msra.mxu0 %v852
      %927 = vmatprep.subr.mxu0 0.0
      %928 = vmatpush1.msra.mxu0 0.0
      %929 = vmatprep.subr.mxu0 0.0
      %930 = vmatpush1.msra.mxu0 0.0
      %931 = vmatprep.subr.mxu0 0.0
      %932 = vmatpush1.msra.mxu0 0.0
      %933 = vmatprep.subr.mxu0 0.0
      %934 = vmatpush1.msra.mxu0 0.0
      %935 = vmatprep.subr.mxu0 0.0
      %936 = vmatpush1.msra.mxu0 0.0
      %937 = vmatprep.subr.mxu0 0.0
      %938 = vmatpush1.msra.mxu0 0.0
      %939 = vmatprep.subr.mxu0 0.0
      %940 = vmatpush1.msra.mxu0 0.0
      %941 = vmatprep.subr.mxu0 0.0
      %942 = vmatpush1.msra.mxu0 0.0
      %943 = vmatprep.subr.mxu0 0.0
      %944 = vmatpush1.msra.mxu0 0.0
      %945 = vmatprep.subr.mxu0 0.0
      %946 = vmatpush1.msra.mxu0 0.0
      %947 = vmatprep.subr.mxu0 0.0
      %948 = vmatpush1.msra.mxu0 0.0
      %949 = vmatprep.subr.mxu0 0.0
      %950 = vmatpush1.msra.mxu0 0.0
      %951 = vmatprep.subr.mxu0 0.0
      %952 = vmatpush1.msra.mxu0 0.0
      %953 = vmatprep.subr.mxu0 0.0
      %954 = vmatpush1.msra.mxu0 0.0
      %955 = vmatprep.subr.mxu0 0.0
      %956 = vmatpush1.msra.mxu0 0.0
      %957 = vmatprep.subr.mxu0 0.0
      %958 = vmatpush1.msra.mxu0 0.0
      %959 = vmatprep.subr.mxu0 0.0
      %960 = vmatpush1.msra.mxu0 0.0
      %961 = vmatprep.subr.mxu0 0.0
      %962 = vmatpush1.msra.mxu0 0.0
      %963 = vmatprep.subr.mxu0 0.0
      %964 = vmatpush1.msra.mxu0 0.0
      %965 = vmatprep.subr.mxu0 0.0
      %966 = vmatpush1.msra.mxu0 0.0
      %967 = vmatprep.subr.mxu0 0.0
      %968 = vmatpush1.msra.mxu0 0.0
      %969 = vmatprep.subr.mxu0 0.0
      %970 = vmatpush1.msra.mxu0 0.0
      %971 = vmatprep.subr.mxu0 0.0
      %972 = vmatpush1.msra.mxu0 0.0
      %973 = vmatprep.subr.mxu0 0.0
      %974 = vmatpush1.msra.mxu0 0.0
      %975 = vmatprep.subr.mxu0 0.0
      %976 = vmatpush1.msra.mxu0 0.0
      %977 = vmatprep.subr.mxu0 0.0
      %978 = vmatpush1.msra.mxu0 0.0
      %979 = vmatprep.subr.mxu0 0.0
      %980 = vmatpush1.msra.mxu0 0.0
      %981 = vmatprep.subr.mxu0 0.0
      %982 = vmatpush1.msra.mxu0 0.0
      %983 = vmatprep.subr.mxu0 0.0
      %984 = vmatpush1.msra.mxu0 0.0
      %985 = vmatprep.subr.mxu0 0.0
      %986 = vmatpush1.msra.mxu0 0.0
      %987 = vmatprep.subr.mxu0 0.0
      %988 = vmatpush1.msra.mxu0 0.0
      %989 = vmatprep.mubr.f32.mxu0 0.0
      %990 = vmatmul.mubr.f32.gmra.mrb[0].mxu0 %v846
      %v991 = vpop.f32.mrb[0].mxu0
      %v992 = vadd.f32 0.0, %v991
      %v993 = vpop.f32.mrb[0].mxu0
      %994 = vdwg.mxu0
      %v995 = vadd.f32 %v826, %v921
      %v996 = vadd.f32 %v827, %v923
      %v997 = vadd.f32 %v828, %v992
      %v998 = vld [vmem:[%s165] sm:$0xff]
      %v999 = vld [vmem:[%s165 + $0x8] sm:$0xf]
      %s1000 = scalar_lea.vmem %s1, 40
      %v1001 = vld [vmem:[%s1000] sm:$0xff]
      %v1004 = vcombine.high %v998, %v998
      %1005 = vrot.lane.b32.xlu0 %v998, 108
      %v1006 = vpop.permute.xlu0 %1005
      %1007 = vrot.lane.b32.xlu0 %v1004, 108
      %v1008 = vpop.permute.xlu0 %1007
      %1009 = vrot.lane.b32.xlu0 %v999, 108
      %v1010 = vpop.permute.xlu0 %1009
      %vm1011 = vcmask 883712
      %v1012 = vsel %vm1011, %v1006, %v1008
      %v1013 = vsel %vm1011, %v1008, %v1010
      %v1015 = vsel %vm189, %v1001, 0
      %v1017 = vsel %vm193, %v1012, 0
      %v1019 = vsel %vm193, %v1013, 0
      %v1021 = vsel %vm193, %v1010, 0
      %1023 = vmatprep.subr.mxu0 %v1019
      %1024 = vmatpush1.msra.mxu0 %v1017
      %1025 = vmatprep.subr.mxu0 0.0
      %1026 = vmatpush1.msra.mxu0 0.0
      %1027 = vmatprep.subr.mxu0 0.0
      %1028 = vmatpush1.msra.mxu0 0.0
      %1029 = vmatprep.subr.mxu0 0.0
      %1030 = vmatpush1.msra.mxu0 0.0
      %1031 = vmatprep.subr.mxu0 0.0
      %1032 = vmatpush1.msra.mxu0 0.0
      %1033 = vmatprep.subr.mxu0 0.0
      %1034 = vmatpush1.msra.mxu0 0.0
      %1035 = vmatprep.subr.mxu0 0.0
      %1036 = vmatpush1.msra.mxu0 0.0
      %1037 = vmatprep.subr.mxu0 0.0
      %1038 = vmatpush1.msra.mxu0 0.0
      %1039 = vmatprep.subr.mxu0 0.0
      %1040 = vmatpush1.msra.mxu0 0.0
      %1041 = vmatprep.subr.mxu0 0.0
      %1042 = vmatpush1.msra.mxu0 0.0
      %1043 = vmatprep.subr.mxu0 0.0
      %1044 = vmatpush1.msra.mxu0 0.0
      %1045 = vmatprep.subr.mxu0 0.0
      %1046 = vmatpush1.msra.mxu0 0.0
      %1047 = vmatprep.subr.mxu0 0.0
      %1048 = vmatpush1.msra.mxu0 0.0
      %1049 = vmatprep.subr.mxu0 0.0
      %1050 = vmatpush1.msra.mxu0 0.0
      %1051 = vmatprep.subr.mxu0 0.0
      %1052 = vmatpush1.msra.mxu0 0.0
      %1053 = vmatprep.subr.mxu0 0.0
      %1054 = vmatpush1.msra.mxu0 0.0
      %1055 = vmatprep.subr.mxu0 0.0
      %1056 = vmatpush1.msra.mxu0 0.0
      %1057 = vmatprep.subr.mxu0 0.0
      %1058 = vmatpush1.msra.mxu0 0.0
      %1059 = vmatprep.subr.mxu0 0.0
      %1060 = vmatpush1.msra.mxu0 0.0
      %1061 = vmatprep.subr.mxu0 0.0
      %1062 = vmatpush1.msra.mxu0 0.0
      %1063 = vmatprep.subr.mxu0 0.0
      %1064 = vmatpush1.msra.mxu0 0.0
      %1065 = vmatprep.subr.mxu0 0.0
      %1066 = vmatpush1.msra.mxu0 0.0
      %1067 = vmatprep.subr.mxu0 0.0
      %1068 = vmatpush1.msra.mxu0 0.0
      %1069 = vmatprep.subr.mxu0 0.0
      %1070 = vmatpush1.msra.mxu0 0.0
      %1071 = vmatprep.subr.mxu0 0.0
      %1072 = vmatpush1.msra.mxu0 0.0
      %1073 = vmatprep.subr.mxu0 0.0
      %1074 = vmatpush1.msra.mxu0 0.0
      %1075 = vmatprep.subr.mxu0 0.0
      %1076 = vmatpush1.msra.mxu0 0.0
      %1077 = vmatprep.subr.mxu0 0.0
      %1078 = vmatpush1.msra.mxu0 0.0
      %1079 = vmatprep.subr.mxu0 0.0
      %1080 = vmatpush1.msra.mxu0 0.0
      %1081 = vmatprep.subr.mxu0 0.0
      %1082 = vmatpush1.msra.mxu0 0.0
      %1083 = vmatprep.subr.mxu0 0.0
      %1084 = vmatpush1.msra.mxu0 0.0
      %1085 = vmatprep.subr.mxu0 0.0
      %1086 = vmatpush1.msra.mxu0 0.0
      %1087 = vmatprep.mubr.f32.mxu0 0.0
      %1088 = vmatmul.mubr.f32.gmra.mrb[0].mxu0 %v1015
      %v1089 = vpop.f32.mrb[0].mxu0
      %v1090 = vadd.f32 0.0, %v1089
      %v1091 = vpop.f32.mrb[0].mxu0
      %v1092 = vadd.f32 0.0, %v1091
      %1093 = vdwg.mxu0
      %1094 = vmatprep.subr.mxu0 0.0
      %1095 = vmatpush1.msra.mxu0 %v1021
      %1096 = vmatprep.subr.mxu0 0.0
      %1097 = vmatpush1.msra.mxu0 0.0
      %1098 = vmatprep.subr.mxu0 0.0
      %1099 = vmatpush1.msra.mxu0 0.0
      %1100 = vmatprep.subr.mxu0 0.0
      %1101 = vmatpush1.msra.mxu0 0.0
      %1102 = vmatprep.subr.mxu0 0.0
      %1103 = vmatpush1.msra.mxu0 0.0
      %1104 = vmatprep.subr.mxu0 0.0
      %1105 = vmatpush1.msra.mxu0 0.0
      %1106 = vmatprep.subr.mxu0 0.0
      %1107 = vmatpush1.msra.mxu0 0.0
      %1108 = vmatprep.subr.mxu0 0.0
      %1109 = vmatpush1.msra.mxu0 0.0
      %1110 = vmatprep.subr.mxu0 0.0
      %1111 = vmatpush1.msra.mxu0 0.0
      %1112 = vmatprep.subr.mxu0 0.0
      %1113 = vmatpush1.msra.mxu0 0.0
      %1114 = vmatprep.subr.mxu0 0.0
      %1115 = vmatpush1.msra.mxu0 0.0
      %1116 = vmatprep.subr.mxu0 0.0
      %1117 = vmatpush1.msra.mxu0 0.0
      %1118 = vmatprep.subr.mxu0 0.0
      %1119 = vmatpush1.msra.mxu0 0.0
      %1120 = vmatprep.subr.mxu0 0.0
      %1121 = vmatpush1.msra.mxu0 0.0
      %1122 = vmatprep.subr.mxu0 0.0
      %1123 = vmatpush1.msra.mxu0 0.0
      %1124 = vmatprep.subr.mxu0 0.0
      %1125 = vmatpush1.msra.mxu0 0.0
      %1126 = vmatprep.subr.mxu0 0.0
      %1127 = vmatpush1.msra.mxu0 0.0
      %1128 = vmatprep.subr.mxu0 0.0
      %1129 = vmatpush1.msra.mxu0 0.0
      %1130 = vmatprep.subr.mxu0 0.0
      %1131 = vmatpush1.msra.mxu0 0.0
      %1132 = vmatprep.subr.mxu0 0.0
      %1133 = vmatpush1.msra.mxu0 0.0
      %1134 = vmatprep.subr.mxu0 0.0
      %1135 = vmatpush1.msra.mxu0 0.0
      %1136 = vmatprep.subr.mxu0 0.0
      %1137 = vmatpush1.msra.mxu0 0.0
      %1138 = vmatprep.subr.mxu0 0.0
      %1139 = vmatpush1.msra.mxu0 0.0
      %1140 = vmatprep.subr.mxu0 0.0
      %1141 = vmatpush1.msra.mxu0 0.0
      %1142 = vmatprep.subr.mxu0 0.0
      %1143 = vmatpush1.msra.mxu0 0.0
      %1144 = vmatprep.subr.mxu0 0.0
      %1145 = vmatpush1.msra.mxu0 0.0
      %1146 = vmatprep.subr.mxu0 0.0
      %1147 = vmatpush1.msra.mxu0 0.0
      %1148 = vmatprep.subr.mxu0 0.0
      %1149 = vmatpush1.msra.mxu0 0.0
      %1150 = vmatprep.subr.mxu0 0.0
      %1151 = vmatpush1.msra.mxu0 0.0
      %1152 = vmatprep.subr.mxu0 0.0
      %1153 = vmatpush1.msra.mxu0 0.0
      %1154 = vmatprep.subr.mxu0 0.0
      %1155 = vmatpush1.msra.mxu0 0.0
      %1156 = vmatprep.subr.mxu0 0.0
      %1157 = vmatpush1.msra.mxu0 0.0
      %1158 = vmatprep.mubr.f32.mxu0 0.0
      %1159 = vmatmul.mubr.f32.gmra.mrb[0].mxu0 %v1015
      %v1160 = vpop.f32.mrb[0].mxu0
      %v1161 = vadd.f32 0.0, %v1160
      %v1162 = vpop.f32.mrb[0].mxu0
      %1163 = vdwg.mxu0
      %v1164 = vadd.f32 %v995, %v1090
      %v1165 = vadd.f32 %v996, %v1092
      %v1166 = vadd.f32 %v997, %v1161
      %v1167 = vld [vmem:[%s165] sm:$0xff]
      %v1168 = vld [vmem:[%s165 + $0x8] sm:$0xf]
      %s1169 = scalar_lea.vmem %s1, 48
      %v1170 = vld [vmem:[%s1169] sm:$0xff]
      %v1173 = vcombine.high %v1167, %v1167
      %1174 = vrot.lane.b32.xlu0 %v1167, 92
      %v1175 = vpop.permute.xlu0 %1174
      %1176 = vrot.lane.b32.xlu0 %v1173, 92
      %v1177 = vpop.permute.xlu0 %1176
      %1178 = vrot.lane.b32.xlu0 %v1168, 92
      %v1179 = vpop.permute.xlu0 %1178
      %vm1180 = vcmask 752640
      %v1181 = vsel %vm1180, %v1175, %v1177
      %v1182 = vsel %vm1180, %v1177, %v1179
      %v1184 = vsel %vm189, %v1170, 0
      %v1186 = vsel %vm193, %v1181, 0
      %v1188 = vsel %vm193, %v1182, 0
      %v1190 = vsel %vm193, %v1179, 0
      %1192 = vmatprep.subr.mxu0 %v1188
      %1193 = vmatpush1.msra.mxu0 %v1186
      %1194 = vmatprep.subr.mxu0 0.0
      %1195 = vmatpush1.msra.mxu0 0.0
      %1196 = vmatprep.subr.mxu0 0.0
      %1197 = vmatpush1.msra.mxu0 0.0
      %1198 = vmatprep.subr.mxu0 0.0
      %1199 = vmatpush1.msra.mxu0 0.0
      %1200 = vmatprep.subr.mxu0 0.0
      %1201 = vmatpush1.msra.mxu0 0.0
      %1202 = vmatprep.subr.mxu0 0.0
      %1203 = vmatpush1.msra.mxu0 0.0
      %1204 = vmatprep.subr.mxu0 0.0
      %1205 = vmatpush1.msra.mxu0 0.0
      %1206 = vmatprep.subr.mxu0 0.0
      %1207 = vmatpush1.msra.mxu0 0.0
      %1208 = vmatprep.subr.mxu0 0.0
      %1209 = vmatpush1.msra.mxu0 0.0
      %1210 = vmatprep.subr.mxu0 0.0
      %1211 = vmatpush1.msra.mxu0 0.0
      %1212 = vmatprep.subr.mxu0 0.0
      %1213 = vmatpush1.msra.mxu0 0.0
      %1214 = vmatprep.subr.mxu0 0.0
      %1215 = vmatpush1.msra.mxu0 0.0
      %1216 = vmatprep.subr.mxu0 0.0
      %1217 = vmatpush1.msra.mxu0 0.0
      %1218 = vmatprep.subr.mxu0 0.0
      %1219 = vmatpush1.msra.mxu0 0.0
      %1220 = vmatprep.subr.mxu0 0.0
      %1221 = vmatpush1.msra.mxu0 0.0
      %1222 = vmatprep.subr.mxu0 0.0
      %1223 = vmatpush1.msra.mxu0 0.0
      %1224 = vmatprep.subr.mxu0 0.0
      %1225 = vmatpush1.msra.mxu0 0.0
      %1226 = vmatprep.subr.mxu0 0.0
      %1227 = vmatpush1.msra.mxu0 0.0
      %1228 = vmatprep.subr.mxu0 0.0
      %1229 = vmatpush1.msra.mxu0 0.0
      %1230 = vmatprep.subr.mxu0 0.0
      %1231 = vmatpush1.msra.mxu0 0.0
      %1232 = vmatprep.subr.mxu0 0.0
      %1233 = vmatpush1.msra.mxu0 0.0
      %1234 = vmatprep.subr.mxu0 0.0
      %1235 = vmatpush1.msra.mxu0 0.0
      %1236 = vmatprep.subr.mxu0 0.0
      %1237 = vmatpush1.msra.mxu0 0.0
      %1238 = vmatprep.subr.mxu0 0.0
      %1239 = vmatpush1.msra.mxu0 0.0
      %1240 = vmatprep.subr.mxu0 0.0
      %1241 = vmatpush1.msra.mxu0 0.0
      %1242 = vmatprep.subr.mxu0 0.0
      %1243 = vmatpush1.msra.mxu0 0.0
      %1244 = vmatprep.subr.mxu0 0.0
      %1245 = vmatpush1.msra.mxu0 0.0
      %1246 = vmatprep.subr.mxu0 0.0
      %1247 = vmatpush1.msra.mxu0 0.0
      %1248 = vmatprep.subr.mxu0 0.0
      %1249 = vmatpush1.msra.mxu0 0.0
      %1250 = vmatprep.subr.mxu0 0.0
      %1251 = vmatpush1.msra.mxu0 0.0
      %1252 = vmatprep.subr.mxu0 0.0
      %1253 = vmatpush1.msra.mxu0 0.0
      %1254 = vmatprep.subr.mxu0 0.0
      %1255 = vmatpush1.msra.mxu0 0.0
      %1256 = vmatprep.mubr.f32.mxu0 0.0
      %1257 = vmatmul.mubr.f32.gmra.mrb[0].mxu0 %v1184
      %v1258 = vpop.f32.mrb[0].mxu0
      %v1259 = vadd.f32 0.0, %v1258
      %v1260 = vpop.f32.mrb[0].mxu0
      %v1261 = vadd.f32 0.0, %v1260
      %1262 = vdwg.mxu0
      %1263 = vmatprep.subr.mxu0 0.0
      %1264 = vmatpush1.msra.mxu0 %v1190
      %1265 = vmatprep.subr.mxu0 0.0
      %1266 = vmatpush1.msra.mxu0 0.0
      %1267 = vmatprep.subr.mxu0 0.0
      %1268 = vmatpush1.msra.mxu0 0.0
      %1269 = vmatprep.subr.mxu0 0.0
      %1270 = vmatpush1.msra.mxu0 0.0
      %1271 = vmatprep.subr.mxu0 0.0
      %1272 = vmatpush1.msra.mxu0 0.0
      %1273 = vmatprep.subr.mxu0 0.0
      %1274 = vmatpush1.msra.mxu0 0.0
      %1275 = vmatprep.subr.mxu0 0.0
      %1276 = vmatpush1.msra.mxu0 0.0
      %1277 = vmatprep.subr.mxu0 0.0
      %1278 = vmatpush1.msra.mxu0 0.0
      %1279 = vmatprep.subr.mxu0 0.0
      %1280 = vmatpush1.msra.mxu0 0.0
      %1281 = vmatprep.subr.mxu0 0.0
      %1282 = vmatpush1.msra.mxu0 0.0
      %1283 = vmatprep.subr.mxu0 0.0
      %1284 = vmatpush1.msra.mxu0 0.0
      %1285 = vmatprep.subr.mxu0 0.0
      %1286 = vmatpush1.msra.mxu0 0.0
      %1287 = vmatprep.subr.mxu0 0.0
      %1288 = vmatpush1.msra.mxu0 0.0
      %1289 = vmatprep.subr.mxu0 0.0
      %1290 = vmatpush1.msra.mxu0 0.0
      %1291 = vmatprep.subr.mxu0 0.0
      %1292 = vmatpush1.msra.mxu0 0.0
      %1293 = vmatprep.subr.mxu0 0.0
      %1294 = vmatpush1.msra.mxu0 0.0
      %1295 = vmatprep.subr.mxu0 0.0
      %1296 = vmatpush1.msra.mxu0 0.0
      %1297 = vmatprep.subr.mxu0 0.0
      %1298 = vmatpush1.msra.mxu0 0.0
      %1299 = vmatprep.subr.mxu0 0.0
      %1300 = vmatpush1.msra.mxu0 0.0
      %1301 = vmatprep.subr.mxu0 0.0
      %1302 = vmatpush1.msra.mxu0 0.0
      %1303 = vmatprep.subr.mxu0 0.0
      %1304 = vmatpush1.msra.mxu0 0.0
      %1305 = vmatprep.subr.mxu0 0.0
      %1306 = vmatpush1.msra.mxu0 0.0
      %1307 = vmatprep.subr.mxu0 0.0
      %1308 = vmatpush1.msra.mxu0 0.0
      %1309 = vmatprep.subr.mxu0 0.0
      %1310 = vmatpush1.msra.mxu0 0.0
      %1311 = vmatprep.subr.mxu0 0.0
      %1312 = vmatpush1.msra.mxu0 0.0
      %1313 = vmatprep.subr.mxu0 0.0
      %1314 = vmatpush1.msra.mxu0 0.0
      %1315 = vmatprep.subr.mxu0 0.0
      %1316 = vmatpush1.msra.mxu0 0.0
      %1317 = vmatprep.subr.mxu0 0.0
      %1318 = vmatpush1.msra.mxu0 0.0
      %1319 = vmatprep.subr.mxu0 0.0
      %1320 = vmatpush1.msra.mxu0 0.0
      %1321 = vmatprep.subr.mxu0 0.0
      %1322 = vmatpush1.msra.mxu0 0.0
      %1323 = vmatprep.subr.mxu0 0.0
      %1324 = vmatpush1.msra.mxu0 0.0
      %1325 = vmatprep.subr.mxu0 0.0
      %1326 = vmatpush1.msra.mxu0 0.0
      %1327 = vmatprep.mubr.f32.mxu0 0.0
      %1328 = vmatmul.mubr.f32.gmra.mrb[0].mxu0 %v1184
      %v1329 = vpop.f32.mrb[0].mxu0
      %v1330 = vadd.f32 0.0, %v1329
      %v1331 = vpop.f32.mrb[0].mxu0
      %1332 = vdwg.mxu0
      %v1333 = vadd.f32 %v1164, %v1259
      %v1334 = vadd.f32 %v1165, %v1261
      %v1335 = vadd.f32 %v1166, %v1330
      %v1336 = vld [vmem:[%s165] sm:$0xff]
      %v1337 = vld [vmem:[%s165 + $0x8] sm:$0xf]
      %s1338 = scalar_lea.vmem %s1, 56
      %v1339 = vld [vmem:[%s1338] sm:$0xff]
      %v1342 = vcombine.high %v1336, %v1336
      %1343 = vrot.lane.b32.xlu0 %v1336, 91
      %v1344 = vpop.permute.xlu0 %1343
      %1345 = vrot.lane.b32.xlu0 %v1342, 91
      %v1346 = vpop.permute.xlu0 %1345
      %1347 = vrot.lane.b32.xlu0 %v1337, 91
      %v1348 = vpop.permute.xlu0 %1347
      %vm1349 = vcmask 744448
      %v1350 = vsel %vm1349, %v1344, %v1346
      %v1351 = vsel %vm1349, %v1346, %v1348
      %v1353 = vsel %vm189, %v1339, 0
      %v1355 = vsel %vm193, %v1350, 0
      %v1357 = vsel %vm193, %v1351, 0
      %v1359 = vsel %vm193, %v1348, 0
      %1361 = vmatprep.subr.mxu0 %v1357
      %1362 = vmatpush1.msra.mxu0 %v1355
      %1363 = vmatprep.subr.mxu0 0.0
      %1364 = vmatpush1.msra.mxu0 0.0
      %1365 = vmatprep.subr.mxu0 0.0
      %1366 = vmatpush1.msra.mxu0 0.0
      %1367 = vmatprep.subr.mxu0 0.0
      %1368 = vmatpush1.msra.mxu0 0.0
      %1369 = vmatprep.subr.mxu0 0.0
      %1370 = vmatpush1.msra.mxu0 0.0
      %1371 = vmatprep.subr.mxu0 0.0
      %1372 = vmatpush1.msra.mxu0 0.0
      %1373 = vmatprep.subr.mxu0 0.0
      %1374 = vmatpush1.msra.mxu0 0.0
      %1375 = vmatprep.subr.mxu0 0.0
      %1376 = vmatpush1.msra.mxu0 0.0
      %1377 = vmatprep.subr.mxu0 0.0
      %1378 = vmatpush1.msra.mxu0 0.0
      %1379 = vmatprep.subr.mxu0 0.0
      %1380 = vmatpush1.msra.mxu0 0.0
      %1381 = vmatprep.subr.mxu0 0.0
      %1382 = vmatpush1.msra.mxu0 0.0
      %1383 = vmatprep.subr.mxu0 0.0
      %1384 = vmatpush1.msra.mxu0 0.0
      %1385 = vmatprep.subr.mxu0 0.0
      %1386 = vmatpush1.msra.mxu0 0.0
      %1387 = vmatprep.subr.mxu0 0.0
      %1388 = vmatpush1.msra.mxu0 0.0
      %1389 = vmatprep.subr.mxu0 0.0
      %1390 = vmatpush1.msra.mxu0 0.0
      %1391 = vmatprep.subr.mxu0 0.0
      %1392 = vmatpush1.msra.mxu0 0.0
      %1393 = vmatprep.subr.mxu0 0.0
      %1394 = vmatpush1.msra.mxu0 0.0
      %1395 = vmatprep.subr.mxu0 0.0
      %1396 = vmatpush1.msra.mxu0 0.0
      %1397 = vmatprep.subr.mxu0 0.0
      %1398 = vmatpush1.msra.mxu0 0.0
      %1399 = vmatprep.subr.mxu0 0.0
      %1400 = vmatpush1.msra.mxu0 0.0
      %1401 = vmatprep.subr.mxu0 0.0
      %1402 = vmatpush1.msra.mxu0 0.0
      %1403 = vmatprep.subr.mxu0 0.0
      %1404 = vmatpush1.msra.mxu0 0.0
      %1405 = vmatprep.subr.mxu0 0.0
      %1406 = vmatpush1.msra.mxu0 0.0
      %1407 = vmatprep.subr.mxu0 0.0
      %1408 = vmatpush1.msra.mxu0 0.0
      %1409 = vmatprep.subr.mxu0 0.0
      %1410 = vmatpush1.msra.mxu0 0.0
      %1411 = vmatprep.subr.mxu0 0.0
      %1412 = vmatpush1.msra.mxu0 0.0
      %1413 = vmatprep.subr.mxu0 0.0
      %1414 = vmatpush1.msra.mxu0 0.0
      %1415 = vmatprep.subr.mxu0 0.0
      %1416 = vmatpush1.msra.mxu0 0.0
      %1417 = vmatprep.subr.mxu0 0.0
      %1418 = vmatpush1.msra.mxu0 0.0
      %1419 = vmatprep.subr.mxu0 0.0
      %1420 = vmatpush1.msra.mxu0 0.0
      %1421 = vmatprep.subr.mxu0 0.0
      %1422 = vmatpush1.msra.mxu0 0.0
      %1423 = vmatprep.subr.mxu0 0.0
      %1424 = vmatpush1.msra.mxu0 0.0
      %1425 = vmatprep.mubr.f32.mxu0 0.0
      %1426 = vmatmul.mubr.f32.gmra.mrb[0].mxu0 %v1353
      %v1427 = vpop.f32.mrb[0].mxu0
      %v1428 = vadd.f32 0.0, %v1427
      %v1429 = vpop.f32.mrb[0].mxu0
      %v1430 = vadd.f32 0.0, %v1429
      %1431 = vdwg.mxu0
      %1432 = vmatprep.subr.mxu0 0.0
      %1433 = vmatpush1.msra.mxu0 %v1359
      %1434 = vmatprep.subr.mxu0 0.0
      %1435 = vmatpush1.msra.mxu0 0.0
      %1436 = vmatprep.subr.mxu0 0.0
      %1437 = vmatpush1.msra.mxu0 0.0
      %1438 = vmatprep.subr.mxu0 0.0
      %1439 = vmatpush1.msra.mxu0 0.0
      %1440 = vmatprep.subr.mxu0 0.0
      %1441 = vmatpush1.msra.mxu0 0.0
      %1442 = vmatprep.subr.mxu0 0.0
      %1443 = vmatpush1.msra.mxu0 0.0
      %1444 = vmatprep.subr.mxu0 0.0
      %1445 = vmatpush1.msra.mxu0 0.0
      %1446 = vmatprep.subr.mxu0 0.0
      %1447 = vmatpush1.msra.mxu0 0.0
      %1448 = vmatprep.subr.mxu0 0.0
      %1449 = vmatpush1.msra.mxu0 0.0
      %1450 = vmatprep.subr.mxu0 0.0
      %1451 = vmatpush1.msra.mxu0 0.0
      %1452 = vmatprep.subr.mxu0 0.0
      %1453 = vmatpush1.msra.mxu0 0.0
      %1454 = vmatprep.subr.mxu0 0.0
      %1455 = vmatpush1.msra.mxu0 0.0
      %1456 = vmatprep.subr.mxu0 0.0
      %1457 = vmatpush1.msra.mxu0 0.0
      %1458 = vmatprep.subr.mxu0 0.0
      %1459 = vmatpush1.msra.mxu0 0.0
      %1460 = vmatprep.subr.mxu0 0.0
      %1461 = vmatpush1.msra.mxu0 0.0
      %1462 = vmatprep.subr.mxu0 0.0
      %1463 = vmatpush1.msra.mxu0 0.0
      %1464 = vmatprep.subr.mxu0 0.0
      %1465 = vmatpush1.msra.mxu0 0.0
      %1466 = vmatprep.subr.mxu0 0.0
      %1467 = vmatpush1.msra.mxu0 0.0
      %1468 = vmatprep.subr.mxu0 0.0
      %1469 = vmatpush1.msra.mxu0 0.0
      %1470 = vmatprep.subr.mxu0 0.0
      %1471 = vmatpush1.msra.mxu0 0.0
      %1472 = vmatprep.subr.mxu0 0.0
      %1473 = vmatpush1.msra.mxu0 0.0
      %1474 = vmatprep.subr.mxu0 0.0
      %1475 = vmatpush1.msra.mxu0 0.0
      %1476 = vmatprep.subr.mxu0 0.0
      %1477 = vmatpush1.msra.mxu0 0.0
      %1478 = vmatprep.subr.mxu0 0.0
      %1479 = vmatpush1.msra.mxu0 0.0
      %1480 = vmatprep.subr.mxu0 0.0
      %1481 = vmatpush1.msra.mxu0 0.0
      %1482 = vmatprep.subr.mxu0 0.0
      %1483 = vmatpush1.msra.mxu0 0.0
      %1484 = vmatprep.subr.mxu0 0.0
      %1485 = vmatpush1.msra.mxu0 0.0
      %1486 = vmatprep.subr.mxu0 0.0
      %1487 = vmatpush1.msra.mxu0 0.0
      %1488 = vmatprep.subr.mxu0 0.0
      %1489 = vmatpush1.msra.mxu0 0.0
      %1490 = vmatprep.subr.mxu0 0.0
      %1491 = vmatpush1.msra.mxu0 0.0
      %1492 = vmatprep.subr.mxu0 0.0
      %1493 = vmatpush1.msra.mxu0 0.0
      %1494 = vmatprep.subr.mxu0 0.0
      %1495 = vmatpush1.msra.mxu0 0.0
      %1496 = vmatprep.mubr.f32.mxu0 0.0
      %1497 = vmatmul.mubr.f32.gmra.mrb[0].mxu0 %v1353
      %v1498 = vpop.f32.mrb[0].mxu0
      %v1499 = vadd.f32 0.0, %v1498
      %v1500 = vpop.f32.mrb[0].mxu0
      %1501 = vdwg.mxu0
      %v1502 = vadd.f32 %v1333, %v1428
      %v1503 = vadd.f32 %v1334, %v1430
      %v1504 = vadd.f32 %v1335, %v1499
      %v1505 = vld [vmem:[%s165] sm:$0xff]
      %v1506 = vld [vmem:[%s165 + $0x8] sm:$0xf]
      %s1507 = scalar_lea.vmem %s1, 64
      %v1508 = vld [vmem:[%s1507] sm:$0xff]
      %v1511 = vcombine.high %v1505, %v1505
      %1512 = vrot.lane.b32.xlu0 %v1505, 90
      %v1513 = vpop.permute.xlu0 %1512
      %1514 = vrot.lane.b32.xlu0 %v1511, 90
      %v1515 = vpop.permute.xlu0 %1514
      %1516 = vrot.lane.b32.xlu0 %v1506, 90
      %v1517 = vpop.permute.xlu0 %1516
      %vm1518 = vcmask 736256
      %v1519 = vsel %vm1518, %v1513, %v1515
      %v1520 = vsel %vm1518, %v1515, %v1517
      %v1522 = vsel %vm189, %v1508, 0
      %v1524 = vsel %vm193, %v1519, 0
      %v1526 = vsel %vm193, %v1520, 0
      %v1528 = vsel %vm193, %v1517, 0
      %1530 = vmatprep.subr.mxu0 %v1526
      %1531 = vmatpush1.msra.mxu0 %v1524
      %1532 = vmatprep.subr.mxu0 0.0
      %1533 = vmatpush1.msra.mxu0 0.0
      %1534 = vmatprep.subr.mxu0 0.0
      %1535 = vmatpush1.msra.mxu0 0.0
      %1536 = vmatprep.subr.mxu0 0.0
      %1537 = vmatpush1.msra.mxu0 0.0
      %1538 = vmatprep.subr.mxu0 0.0
      %1539 = vmatpush1.msra.mxu0 0.0
      %1540 = vmatprep.subr.mxu0 0.0
      %1541 = vmatpush1.msra.mxu0 0.0
      %1542 = vmatprep.subr.mxu0 0.0
      %1543 = vmatpush1.msra.mxu0 0.0
      %1544 = vmatprep.subr.mxu0 0.0
      %1545 = vmatpush1.msra.mxu0 0.0
      %1546 = vmatprep.subr.mxu0 0.0
      %1547 = vmatpush1.msra.mxu0 0.0
      %1548 = vmatprep.subr.mxu0 0.0
      %1549 = vmatpush1.msra.mxu0 0.0
      %1550 = vmatprep.subr.mxu0 0.0
      %1551 = vmatpush1.msra.mxu0 0.0
      %1552 = vmatprep.subr.mxu0 0.0
      %1553 = vmatpush1.msra.mxu0 0.0
      %1554 = vmatprep.subr.mxu0 0.0
      %1555 = vmatpush1.msra.mxu0 0.0
      %1556 = vmatprep.subr.mxu0 0.0
      %1557 = vmatpush1.msra.mxu0 0.0
      %1558 = vmatprep.subr.mxu0 0.0
      %1559 = vmatpush1.msra.mxu0 0.0
      %1560 = vmatprep.subr.mxu0 0.0
      %1561 = vmatpush1.msra.mxu0 0.0
      %1562 = vmatprep.subr.mxu0 0.0
      %1563 = vmatpush1.msra.mxu0 0.0
      %1564 = vmatprep.subr.mxu0 0.0
      %1565 = vmatpush1.msra.mxu0 0.0
      %1566 = vmatprep.subr.mxu0 0.0
      %1567 = vmatpush1.msra.mxu0 0.0
      %1568 = vmatprep.subr.mxu0 0.0
      %1569 = vmatpush1.msra.mxu0 0.0
      %1570 = vmatprep.subr.mxu0 0.0
      %1571 = vmatpush1.msra.mxu0 0.0
      %1572 = vmatprep.subr.mxu0 0.0
      %1573 = vmatpush1.msra.mxu0 0.0
      %1574 = vmatprep.subr.mxu0 0.0
      %1575 = vmatpush1.msra.mxu0 0.0
      %1576 = vmatprep.subr.mxu0 0.0
      %1577 = vmatpush1.msra.mxu0 0.0
      %1578 = vmatprep.subr.mxu0 0.0
      %1579 = vmatpush1.msra.mxu0 0.0
      %1580 = vmatprep.subr.mxu0 0.0
      %1581 = vmatpush1.msra.mxu0 0.0
      %1582 = vmatprep.subr.mxu0 0.0
      %1583 = vmatpush1.msra.mxu0 0.0
      %1584 = vmatprep.subr.mxu0 0.0
      %1585 = vmatpush1.msra.mxu0 0.0
      %1586 = vmatprep.subr.mxu0 0.0
      %1587 = vmatpush1.msra.mxu0 0.0
      %1588 = vmatprep.subr.mxu0 0.0
      %1589 = vmatpush1.msra.mxu0 0.0
      %1590 = vmatprep.subr.mxu0 0.0
      %1591 = vmatpush1.msra.mxu0 0.0
      %1592 = vmatprep.subr.mxu0 0.0
      %1593 = vmatpush1.msra.mxu0 0.0
      %1594 = vmatprep.mubr.f32.mxu0 0.0
      %1595 = vmatmul.mubr.f32.gmra.mrb[0].mxu0 %v1522
      %v1596 = vpop.f32.mrb[0].mxu0
      %v1597 = vadd.f32 0.0, %v1596
      %v1598 = vpop.f32.mrb[0].mxu0
      %v1599 = vadd.f32 0.0, %v1598
      %1600 = vdwg.mxu0
      %1601 = vmatprep.subr.mxu0 0.0
      %1602 = vmatpush1.msra.mxu0 %v1528
      %1603 = vmatprep.subr.mxu0 0.0
      %1604 = vmatpush1.msra.mxu0 0.0
      %1605 = vmatprep.subr.mxu0 0.0
      %1606 = vmatpush1.msra.mxu0 0.0
      %1607 = vmatprep.subr.mxu0 0.0
      %1608 = vmatpush1.msra.mxu0 0.0
      %1609 = vmatprep.subr.mxu0 0.0
      %1610 = vmatpush1.msra.mxu0 0.0
      %1611 = vmatprep.subr.mxu0 0.0
      %1612 = vmatpush1.msra.mxu0 0.0
      %1613 = vmatprep.subr.mxu0 0.0
      %1614 = vmatpush1.msra.mxu0 0.0
      %1615 = vmatprep.subr.mxu0 0.0
      %1616 = vmatpush1.msra.mxu0 0.0
      %1617 = vmatprep.subr.mxu0 0.0
      %1618 = vmatpush1.msra.mxu0 0.0
      %1619 = vmatprep.subr.mxu0 0.0
      %1620 = vmatpush1.msra.mxu0 0.0
      %1621 = vmatprep.subr.mxu0 0.0
      %1622 = vmatpush1.msra.mxu0 0.0
      %1623 = vmatprep.subr.mxu0 0.0
      %1624 = vmatpush1.msra.mxu0 0.0
      %1625 = vmatprep.subr.mxu0 0.0
      %1626 = vmatpush1.msra.mxu0 0.0
      %1627 = vmatprep.subr.mxu0 0.0
      %1628 = vmatpush1.msra.mxu0 0.0
      %1629 = vmatprep.subr.mxu0 0.0
      %1630 = vmatpush1.msra.mxu0 0.0
      %1631 = vmatprep.subr.mxu0 0.0
      %1632 = vmatpush1.msra.mxu0 0.0
      %1633 = vmatprep.subr.mxu0 0.0
      %1634 = vmatpush1.msra.mxu0 0.0
      %1635 = vmatprep.subr.mxu0 0.0
      %1636 = vmatpush1.msra.mxu0 0.0
      %1637 = vmatprep.subr.mxu0 0.0
      %1638 = vmatpush1.msra.mxu0 0.0
      %1639 = vmatprep.subr.mxu0 0.0
      %1640 = vmatpush1.msra.mxu0 0.0
      %1641 = vmatprep.subr.mxu0 0.0
      %1642 = vmatpush1.msra.mxu0 0.0
      %1643 = vmatprep.subr.mxu0 0.0
      %1644 = vmatpush1.msra.mxu0 0.0
      %1645 = vmatprep.subr.mxu0 0.0
      %1646 = vmatpush1.msra.mxu0 0.0
      %1647 = vmatprep.subr.mxu0 0.0
      %1648 = vmatpush1.msra.mxu0 0.0
      %1649 = vmatprep.subr.mxu0 0.0
      %1650 = vmatpush1.msra.mxu0 0.0
      %1651 = vmatprep.subr.mxu0 0.0
      %1652 = vmatpush1.msra.mxu0 0.0
      %1653 = vmatprep.subr.mxu0 0.0
      %1654 = vmatpush1.msra.mxu0 0.0
      %1655 = vmatprep.subr.mxu0 0.0
      %1656 = vmatpush1.msra.mxu0 0.0
      %1657 = vmatprep.subr.mxu0 0.0
      %1658 = vmatpush1.msra.mxu0 0.0
      %1659 = vmatprep.subr.mxu0 0.0
      %1660 = vmatpush1.msra.mxu0 0.0
      %1661 = vmatprep.subr.mxu0 0.0
      %1662 = vmatpush1.msra.mxu0 0.0
      %1663 = vmatprep.subr.mxu0 0.0
      %1664 = vmatpush1.msra.mxu0 0.0
      %1665 = vmatprep.mubr.f32.mxu0 0.0
      %1666 = vmatmul.mubr.f32.gmra.mrb[0].mxu0 %v1522
      %v1667 = vpop.f32.mrb[0].mxu0
      %v1668 = vadd.f32 0.0, %v1667
      %v1669 = vpop.f32.mrb[0].mxu0
      %1670 = vdwg.mxu0
      %v1671 = vadd.f32 %v1502, %v1597
      %v1672 = vadd.f32 %v1503, %v1599
      %v1673 = vadd.f32 %v1504, %v1668
      %1675 = vset.pattern.permute.xlu0 0
      %1676 = vperm.xlu0 %1675, %v171
      %v1677 = vpop.permute.xlu0 %1676
      %v1679 = vadd.f32 %v1671, %v1677
      %v1680 = vadd.f32 %v1672, %v1677
      %v1681 = vadd.f32 %v1673, %v1677
      %v1682 = vmax.f32 %v1679, 0.0
      %v1683 = vmax.f32 %v1680, 0.0
      %v1684 = vmax.f32 %v1681, 0.0
      %vm1685 = vcmask 130048
      %1686 = vst.msk [vmem:[%s170] sm:$0xff] %vm1685, %v1682
      %1688 = vrot.lane.b32.xlu0 %v1682, 126
      %v1689 = vpop.permute.xlu0 %1688
      %vm1691 = vcmask 261248
      %1692 = vst.msk [vmem:[%s170] sm:$0xff] %vm1691, %v1689
      %1693 = vrot.lane.b32.xlu0 %v1682, 124
      %v1694 = vpop.permute.xlu0 %1693
      %vm1696 = vcmask 392448
      %1697 = vst.msk [vmem:[%s170] sm:$0xff] %vm1696, %v1694
      %1698 = vrot.lane.b32.xlu0 %v1682, 122
      %v1699 = vpop.permute.xlu0 %1698
      %vm1701 = vcmask 523648
      %1702 = vst.msk [vmem:[%s170] sm:$0xff] %vm1701, %v1699
      %1703 = vrot.lane.b32.xlu0 %v1682, 120
      %v1704 = vpop.permute.xlu0 %1703
      %vm1706 = vcmask 654848
      %1707 = vst.msk [vmem:[%s170] sm:$0xff] %vm1706, %v1704
      %1708 = vrot.lane.b32.xlu0 %v1682, 118
      %v1709 = vpop.permute.xlu0 %1708
      %vm1711 = vcmask 786048
      %1712 = vst.msk [vmem:[%s170] sm:$0xff] %vm1711, %v1709
      %1713 = vrot.lane.b32.xlu0 %v1682, 116
      %v1714 = vpop.permute.xlu0 %1713
      %vm1716 = vcmask 917248
      %1717 = vst.msk [vmem:[%s170] sm:$0xff] %vm1716, %v1714
      %1719 = vrot.lane.b32.xlu0 %v1682, 114
      %v1720 = vpop.permute.xlu0 %1719
      %1721 = vrot.lane.b32.xlu0 %v1683, 114
      %v1722 = vpop.permute.xlu0 %1721
      %vm1723 = vcmask 932864
      %v1724 = vsel %vm1723, %v1720, %v1722
      %vm1726 = vcmask 1048448
      %1727 = vst.msk [vmem:[%s170] sm:$0xff] %vm1726, %v1724
      %1728 = vrot.lane.b32.xlu0 %v1683, 112
      %v1729 = vpop.permute.xlu0 %1728
      %1731 = vst.msk [vmem:[%s170 + $0x8] sm:$0xff] %vm1685, %v1729
      %1732 = vrot.lane.b32.xlu0 %v1683, 110
      %v1733 = vpop.permute.xlu0 %1732
      %1735 = vst.msk [vmem:[%s170 + $0x8] sm:$0xff] %vm1691, %v1733
      %1736 = vrot.lane.b32.xlu0 %v1683, 108
      %v1737 = vpop.permute.xlu0 %1736
      %1739 = vst.msk [vmem:[%s170 + $0x8] sm:$0xff] %vm1696, %v1737
      %1740 = vrot.lane.b32.xlu0 %v1683, 106
      %v1741 = vpop.permute.xlu0 %1740
      %1743 = vst.msk [vmem:[%s170 + $0x8] sm:$0xff] %vm1701, %v1741
      %1744 = vrot.lane.b32.xlu0 %v1683, 104
      %v1745 = vpop.permute.xlu0 %1744
      %1747 = vst.msk [vmem:[%s170 + $0x8] sm:$0xff] %vm1706, %v1745
      %1748 = vrot.lane.b32.xlu0 %v1683, 102
      %v1749 = vpop.permute.xlu0 %1748
      %1751 = vst.msk [vmem:[%s170 + $0x8] sm:$0xff] %vm1711, %v1749
      %1753 = vrot.lane.b32.xlu0 %v1683, 100
      %v1754 = vpop.permute.xlu0 %1753
      %1755 = vrot.lane.b32.xlu0 %v1684, 100
      %v1756 = vpop.permute.xlu0 %1755
      %vm1757 = vcmask 818176
      %v1758 = vsel %vm1757, %v1754, %v1756
      %1760 = vst.msk [vmem:[%s170 + $0x8] sm:$0xff] %vm1716, %v1758
      %1761 = vrot.lane.b32.xlu0 %v1684, 98
      %v1762 = vpop.permute.xlu0 %1761
      %1764 = vst.msk [vmem:[%s170 + $0x8] sm:$0xff] %vm1726, %v1762
      %p1765 = scmp.lt.s32.totalorder %s14, 1
      %s1766 = scalar_select %p1765, %s14, 1
      %s1767 = smul.addr %s1766, 2
      %s1768 = smul.addr %s1767, 8
      %s1769 = scalar_lea.vmem %s3, %s1768
      // Predicated region
      $region33: #{conv_bn_relu.3} parent=31 // pred_check
        %p1770 = pneg %p100
      $region34: #{conv_bn_relu.3} parent=31 // pred_check_branch
        %1772 = sbr.rel (%p1770) target = $region36
      $region35: #{conv_bn_relu.3} parent=31 // pred_region
        _
      $region36: #{conv_bn_relu.3} parent=31 // pred_fallthru
        _
    $region32: #{conv_bn_relu.3} parent=5 // pred_fallthru
      _
    %p1773 = scmp.le.s32.totalorder 2, %s9
    // Predicated region
    $region37: #{conv_bn_relu.3} parent=5 // pred_check
      %p1774 = pneg %p1773
    $region38: #{conv_bn_relu.3} parent=5 // pred_check_branch
      %1776 = sbr.rel (%p1774) target = $region40
    $region39: #{conv_bn_relu.3} parent=5 // pred_region
      %s1777 = ssub.s32 %s9, 2
      // Predicated region
      $region41: #{conv_bn_relu.3} parent=39 // pred_check
        %p1778 = pneg %p106
      $region42: #{conv_bn_relu.3} parent=39 // pred_check_branch
        %1780 = sbr.rel (%p1778) target = $region44
      $region43: #{conv_bn_relu.3} parent=39 // pred_region
        %p1781 = scmp.lt.s32.totalorder %s15, 1
        %s1782 = scalar_select %p1781, %s15, 1
        %s1783 = smul.addr %s1782, 2
        %s1784 = smul.addr %s1783, 8
        %s1785 = scalar_lea.vmem %s3, %s1784
      $region44: #{conv_bn_relu.3} parent=39 // pred_fallthru
        _
    $region40: #{conv_bn_relu.3} parent=5 // pred_fallthru
      _
  $region6: #{conv_bn_relu.3} parent=0 // loop_footer
    %s13 = sadd.s32 1, %s9
  $region7: #{conv_bn_relu.3} parent=0 // loop_footer_branch
    %8 = sbr.rel target = $region3
  $region8: #{conv_bn_relu.3} parent=0 // loop_exit
    _

// kernel: conv_bn_relu.2
$region0: #{conv_bn_relu.2}
  #allocation0 [shape = 'u32[]', space=smem, size = 0x4, offset = 0x4, fixed_abs, tag = 'smem constant byte address 0x4 - core index']
  #allocation1 [shape = 'u32[144,128]{1,0:T(1,128)}', space=vmem, size = 0x12000, scoped, tag = 'internal scratch']
  %s0 = inlined_call_operand.vmem [shape: f32[2,4,326], index: 0, kind: input, shape index: {}]
  %s1 = inlined_call_operand.vmem [shape: f32[9,8,4], index: 1, kind: input, shape index: {}]
  %s2 = inlined_call_operand.vmem [shape: f32[1,288], index: 2, kind: input, shape index: {}]
  %s3 = inlined_call_operand.vmem [shape: f32[2,8,2], index: 3, kind: output, shape index: {}]
  %s4 = sld [smem:[#allocation0]]
  $region45: #{conv_bn_relu.2} parent=0
    _
  %s6 = ssub.s32 1, %s4
  %s7 = scalar_select 0, %s6, %s4
  loop: start=0, step=1, limit=4
  $region2: #{conv_bn_relu.2} parent=0 // loop_pre_header
    _
  $region3: #{conv_bn_relu.2} parent=0 // loop_header
    %s9 = sphi 0, %s13
    %p10 = scmp.ge.s32.totalorder %s9, 4
    %s19 = sphi 0, %s21
    %s22 = sphi 0, %s19
    %s23 = sphi 0, %s22
    %s39 = sphi 0, %s23
    %s43 = sphi 0, %s43
    %s45 = sphi 0, %s43
    %s46 = sphi 0, %s45
    %s60 = sphi 0, %s46
    %s64 = sphi 0, %s64
    %s66 = sphi 0, %s64
    %s67 = sphi 0, %s66
    %s81 = sphi 0, %s67
    %s87 = sphi 0, %s89
    %s90 = sphi 0, %s87
    %s91 = sphi 0, %s90
    %s107 = sphi 0, %s91
  $region4: #{conv_bn_relu.2} parent=0 // loop_header_branch
    %12 = sbr.rel (%p10) target = $region8
  $region5: #{conv_bn_relu.2} parent=0 // loop_body
    %s14 = ssub.s32 %s9, 1
    %s15 = ssub.s32 %s9, 2
    %s16 = sadd.s32 %s9, 1
    %s17 = ssub.s32 %s9, %s16
    %p18 = scmp.eq.s32.totalorder %s17, 0
    %s20 = sadd.s32 %s19, 1
    %s21 = scalar_select %p18, %s19, %s20
    %p24 = pneg %p18
    %p25 = scmp.eq.s32.totalorder %s9, 1
    %p26 = por %p24, %p25
    %p27 = scmp.ne.s32.totalorder %s19, %s22
    %p28 = scmp.eq.s32.totalorder %s9, 0
    %p29 = por %p27, %p28
    %p30 = scmp.ne.s32.totalorder %s19, %s22
    %p31 = scmp.eq.s32.totalorder %s14, 1
    %p32 = por %p30, %p31
    %p33 = scmp.ne.s32.totalorder %s22, %s23
    %p34 = scmp.eq.s32.totalorder %s14, 0
    %p35 = por %p33, %p34
    %p36 = scmp.ne.s32.totalorder %s22, %s23
    %p37 = scmp.eq.s32.totalorder %s15, 1
    %p38 = por %p36, %p37
    %p40 = scmp.ne.s32.totalorder %s23, %s39
    %p41 = scmp.eq.s32.totalorder %s15, 0
    %p42 = por %p40, %p41
    %s44 = sadd.s32 %s43, 1
    %p47 = scmp.eq.s32.totalorder %s9, 1
    %p48 = scmp.ne.s32.totalorder %s43, %s45
    %p49 = scmp.eq.s32.totalorder %s9, 0
    %p50 = por %p48, %p49
    %p51 = scmp.ne.s32.totalorder %s43, %s45
    %p52 = scmp.eq.s32.totalorder %s14, 1
    %p53 = por %p51, %p52
    %p54 = scmp.ne.s32.totalorder %s45, %s46
    %p55 = scmp.eq.s32.totalorder %s14, 0
    %p56 = por %p54, %p55
    %p57 = scmp.ne.s32.totalorder %s45, %s46
    %p58 = scmp.eq.s32.totalorder %s15, 1
    %p59 = por %p57, %p58
    %p61 = scmp.ne.s32.totalorder %s46, %s60
    %p62 = scmp.eq.s32.totalorder %s15, 0
    %p63 = por %p61, %p62
    %s65 = sadd.s32 %s64, 1
    %p68 = scmp.eq.s32.totalorder %s9, 1
    %p69 = scmp.ne.s32.totalorder %s64, %s66
    %p70 = scmp.eq.s32.totalorder %s9, 0
    %p71 = por %p69, %p70
    %p72 = scmp.ne.s32.totalorder %s64, %s66
    %p73 = scmp.eq.s32.totalorder %s14, 1
    %p74 = por %p72, %p73
    %p75 = scmp.ne.s32.totalorder %s66, %s67
    %p76 = scmp.eq.s32.totalorder %s14, 0
    %p77 = por %p75, %p76
    %p78 = scmp.ne.s32.totalorder %s66, %s67
    %p79 = scmp.eq.s32.totalorder %s15, 1
    %p80 = por %p78, %p79
    %p82 = scmp.ne.s32.totalorder %s67, %s81
    %p83 = scmp.eq.s32.totalorder %s15, 0
    %p84 = por %p82, %p83
    %s85 = ssub.s32 %s9, %s16
    %p86 = scmp.eq.s32.totalorder %s85, 0
    %s88 = sadd.s32 %s87, 1
    %s89 = scalar_select %p86, %s87, %s88
    %p92 = pneg %p86
    %p93 = scmp.eq.s32.totalorder %s9, 1
    %p94 = por %p92, %p93
    %p95 = scmp.ne.s32.totalorder %s87, %s90
    %p96 = scmp.eq.s32.totalorder %s9, 0
    %p97 = por %p95, %p96
    %p98 = scmp.ne.s32.totalorder %s87, %s90
    %p99 = scmp.eq.s32.totalorder %s14, 1
    %p100 = por %p98, %p99
    %p101 = scmp.ne.s32.totalorder %s90, %s91
    %p102 = scmp.eq.s32.totalorder %s14, 0
    %p103 = por %p101, %p102
    %p104 = scmp.ne.s32.totalorder %s90, %s91
    %p105 = scmp.eq.s32.totalorder %s15, 1
    %p106 = por %p104, %p105
    %p108 = scmp.ne.s32.totalorder %s91, %s107
    %p109 = scmp.eq.s32.totalorder %s15, 0
    %p110 = por %p108, %p109
    %p111 = scmp.le.s32.totalorder 1, %s9
    %p112 = scmp.lt.s32.totalorder %s9, 3
    %p113 = pnand %p111, %p112
    %p114 = pneg %p113
    // Predicated region
    $region9: #{conv_bn_relu.2} parent=5 // pred_check
      _
    $region10: #{conv_bn_relu.2} parent=5 // pred_check_branch
      %116 = sbr.rel (%p113) target = $region12
    $region11: #{conv_bn_relu.2} parent=5 // pred_region
      %s117 = ssub.s32 %s9, 1
      // Predicated region
      $region13: #{conv_bn_relu.2} parent=11 // pred_check
        %p118 = pneg %p56
      $region14: #{conv_bn_relu.2} parent=11 // pred_check_branch
        %120 = sbr.rel (%p118) target = $region16
      $region15: #{conv_bn_relu.2} parent=11 // pred_region
        _
      $region16: #{conv_bn_relu.2} parent=11 // pred_fallthru
        _
      // Predicated region
      $region17: #{conv_bn_relu.2} parent=11 // pred_check
        %p121 = pneg %p77
      $region18: #{conv_bn_relu.2} parent=11 // pred_check_branch
        %123 = sbr.rel (%p121) target = $region20
      $region19: #{conv_bn_relu.2} parent=11 // pred_region
        _
      $region20: #{conv_bn_relu.2} parent=11 // pred_fallthru
        _
    $region12: #{conv_bn_relu.2} parent=5 // pred_fallthru
      _
    %p124 = scmp.lt.s32.totalorder %s9, 2
    // Predicated region
    $region21: #{conv_bn_relu.2} parent=5 // pred_check
      %p125 = pneg %p124
    $region22: #{conv_bn_relu.2} parent=5 // pred_check_branch
      %127 = sbr.rel (%p125) target = $region24
    $region23: #{conv_bn_relu.2} parent=5 // pred_region
      // Predicated region
      $region25: #{conv_bn_relu.2} parent=23 // pred_check
        %p128 = pneg %p29
      $region26: #{conv_bn_relu.2} parent=23 // pred_check_branch
        %130 = sbr.rel (%p128) target = $region28
      $region27: #{conv_bn_relu.2} parent=23 // pred_region
        %p131 = scmp.lt.s32.totalorder %s9, 1
        %s132 = scalar_select %p131, %s9, 1
        %s133 = smul.addr %s132, 3
        %s134 = smul.addr %s133, 4
        %s135 = scalar_lea.vmem %s0, %s134
      $region28: #{conv_bn_relu.2} parent=23 // pred_fallthru
        _
    $region24: #{conv_bn_relu.2} parent=5 // pred_fallthru
      _
    %p136 = scmp.le.s32.totalorder 1, %s9
    %p137 = scmp.lt.s32.totalorder %s9, 3
    %p138 = pnand %p136, %p137
    %p139 = pneg %p138
    // Predicated region
    $region29: #{conv_bn_relu.2} parent=5 // pred_check
      _
    $region30: #{conv_bn_relu.2} parent=5 // pred_check_branch
      %141 = sbr.rel (%p138) target = $region32
    $region31: #{conv_bn_relu.2} parent=5 // pred_region
      %s142 = ssub.s32 %s9, 1
      %p143 = scmp.lt.s32.totalorder %s14, 1
      %s144 = scalar_select %p143, %s14, 1
      %s145 = smul.addr %s144, 3
      %s146 = smul.addr %s145, 4
      %s147 = scalar_lea.vmem %s0, %s146
      %p148 = pneg %p35
      %p149 = pneg %p32
      %p150 = pneg %p56
      %p151 = pneg %p53
      %p152 = pneg %p77
      %p153 = pneg %p74
      %p154 = pneg %p103
      %p155 = pneg %p100
      %p156 = scmp.lt.s32.totalorder %s14, 1
      %s157 = scalar_select %p156, %s14, 1
      %s158 = smul.addr %s157, 8
      %s159 = scalar_lea.vmem %s3, %s158
      %p160 = scmp.lt.s32.totalorder %s14, 1
      %s161 = scalar_select %p160, %s14, 1
      %s162 = smul.addr %s161, 3
      %s163 = smul.addr %s162, 4
      %s164 = scalar_lea.vmem %s0, %s163
      %p165 = scmp.lt.s32.totalorder %s14, 1
      %s166 = scalar_select %p165, %s14, 1
      %s167 = smul.addr %s166, 8
      %s168 = scalar_lea.vmem %s3, %s167
      %v169 = vld [vmem:[%s2] sm:$0x7]
      %v170 = vld [vmem:[%s164] sm:$0xff]
      %v171 = vld [vmem:[%s164 + $0x8] sm:$0xf]
      %v172 = vld [vmem:[%s1] sm:$0xff]
      %s173 = scalar_lea.vmem %s1, 8
      %v174 = vld [vmem:[%s173] sm:$0xff]
      %v177 = vcombine.high %v170, %v170
      %178 = vrot.lane.b32.xlu0 %v170, 127
      %v179 = vpop.permute.xlu0 %178
      %180 = vrot.lane.b32.xlu0 %v177, 127
      %v181 = vpop.permute.xlu0 %180
      %182 = vrot.lane.b32.xlu0 %v171, 127
      %v183 = vpop.permute.xlu0 %182
      %vm184 = vcmask 1039360
      %v185 = vsel %vm184, %v179, %v181
      %v186 = vsel %vm184, %v181, %v183
      %vm187 = vcmask 31744
      %v189 = vsel %vm187, %v174, 0
      %vm191 = vcmask 1043456
      %v192 = vsel %vm191, %v185, 0
      %v194 = vsel %vm191, %v186, 0
      %v196 = vsel %vm191, %v183, 0
      %198 = vmatprep.subr.mxu0 %v194
      %199 = vmatpush1.msra.mxu0 %v192
      %200 = vmatprep.subr.mxu0 0.0
      %201 = vmatpush1.msra.mxu0 0.0
      %202 = vmatprep.subr.mxu0 0.0
      %203 = vmatpush1.msra.mxu0 0.0
      %204 = vmatprep.subr.mxu0 0.0
      %205 = vmatpush1.msra.mxu0 0.0
      %206 = vmatprep.subr.mxu0 0.0
      %207 = vmatpush1.msra.mxu0 0.0
      %208 = vmatprep.subr.mxu0 0.0
      %209 = vmatpush1.msra.mxu0 0.0
      %210 = vmatprep.subr.mxu0 0.0
      %211 = vmatpush1.msra.mxu0 0.0
      %212 = vmatprep.subr.mxu0 0.0
      %213 = vmatpush1.msra.mxu0 0.0
      %214 = vmatprep.subr.mxu0 0.0
      %215 = vmatpush1.msra.mxu0 0.0
      %216 = vmatprep.subr.mxu0 0.0
      %217 = vmatpush1.msra.mxu0 0.0
      %218 = vmatprep.subr.mxu0 0.0
      %219 = vmatpush1.msra.mxu0 0.0
      %220 = vmatprep.subr.mxu0 0.0
      %221 = vmatpush1.msra.mxu0 0.0
      %222 = vmatprep.subr.mxu0 0.0
      %223 = vmatpush1.msra.mxu0 0.0
      %224 = vmatprep.subr.mxu0 0.0
      %225 = vmatpush1.msra.mxu0 0.0
      %226 = vmatprep.subr.mxu0 0.0
      %227 = vmatpush1.msra.mxu0 0.0
      %228 = vmatprep.subr.mxu0 0.0
      %229 = vmatpush1.msra.mxu0 0.0
      %230 = vmatprep.subr.mxu0 0.0
      %231 = vmatpush1.msra.mxu0 0.0
      %232 = vmatprep.subr.mxu0 0.0
      %233 = vmatpush1.msra.mxu0 0.0
      %234 = vmatprep.subr.mxu0 0.0
      %235 = vmatpush1.msra.mxu0 0.0
      %236 = vmatprep.subr.mxu0 0.0
      %237 = vmatpush1.msra.mxu0 0.0
      %238 = vmatprep.subr.mxu0 0.0
      %239 = vmatpush1.msra.mxu0 0.0
      %240 = vmatprep.subr.mxu0 0.0
      %241 = vmatpush1.msra.mxu0 0.0
      %242 = vmatprep.subr.mxu0 0.0
      %243 = vmatpush1.msra.mxu0 0.0
      %244 = vmatprep.subr.mxu0 0.0
      %245 = vmatpush1.msra.mxu0 0.0
      %246 = vmatprep.subr.mxu0 0.0
      %247 = vmatpush1.msra.mxu0 0.0
      %248 = vmatprep.subr.mxu0 0.0
      %249 = vmatpush1.msra.mxu0 0.0
      %250 = vmatprep.subr.mxu0 0.0
      %251 = vmatpush1.msra.mxu0 0.0
      %252 = vmatprep.subr.mxu0 0.0
      %253 = vmatpush1.msra.mxu0 0.0
      %254 = vmatprep.subr.mxu0 0.0
      %255 = vmatpush1.msra.mxu0 0.0
      %256 = vmatprep.subr.mxu0 0.0
      %257 = vmatpush1.msra.mxu0 0.0
      %258 = vmatprep.subr.mxu0 0.0
      %259 = vmatpush1.msra.mxu0 0.0
      %260 = vmatprep.subr.mxu0 0.0
      %261 = vmatpush1.msra.mxu0 0.0
      %262 = vmatprep.mubr.f32.mxu0 0.0
      %263 = vmatmul.mubr.f32.gmra.mrb[0].mxu0 %v189
      %v264 = vpop.f32.mrb[0].mxu0
      %v265 = vadd.f32 0.0, %v264
      %v266 = vpop.f32.mrb[0].mxu0
      %v267 = vadd.f32 0.0, %v266
      %268 = vdwg.mxu0
      %269 = vmatprep.subr.mxu0 0.0
      %270 = vmatpush1.msra.mxu0 %v196
      %271 = vmatprep.subr.mxu0 0.0
      %272 = vmatpush1.msra.mxu0 0.0
      %273 = vmatprep.subr.mxu0 0.0
      %274 = vmatpush1.msra.mxu0 0.0
      %275 = vmatprep.subr.mxu0 0.0
      %276 = vmatpush1.msra.mxu0 0.0
      %277 = vmatprep.subr.mxu0 0.0
      %278 = vmatpush1.msra.mxu0 0.0
      %279 = vmatprep.subr.mxu0 0.0
      %280 = vmatpush1.msra.mxu0 0.0
      %281 = vmatprep.subr.mxu0 0.0
      %282 = vmatpush1.msra.mxu0 0.0
      %283 = vmatprep.subr.mxu0 0.0
      %284 = vmatpush1.msra.mxu0 0.0
      %285 = vmatprep.subr.mxu0 0.0
      %286 = vmatpush1.msra.mxu0 0.0
      %287 = vmatprep.subr.mxu0 0.0
      %288 = vmatpush1.msra.mxu0 0.0
      %289 = vmatprep.subr.mxu0 0.0
      %290 = vmatpush1.msra.mxu0 0.0
      %291 = vmatprep.subr.mxu0 0.0
      %292 = vmatpush1.msra.mxu0 0.0
      %293 = vmatprep.subr.mxu0 0.0
      %294 = vmatpush1.msra.mxu0 0.0
      %295 = vmatprep.subr.mxu0 0.0
      %296 = vmatpush1.msra.mxu0 0.0
      %297 = vmatprep.subr.mxu0 0.0
      %298 = vmatpush1.msra.mxu0 0.0
      %299 = vmatprep.subr.mxu0 0.0
      %300 = vmatpush1.msra.mxu0 0.0
      %301 = vmatprep.subr.mxu0 0.0
      %302 = vmatpush1.msra.mxu0 0.0
      %303 = vmatprep.subr.mxu0 0.0
      %304 = vmatpush1.msra.mxu0 0.0
      %305 = vmatprep.subr.mxu0 0.0
      %306 = vmatpush1.msra.mxu0 0.0
      %307 = vmatprep.subr.mxu0 0.0
      %308 = vmatpush1.msra.mxu0 0.0
      %309 = vmatprep.subr.mxu0 0.0
      %310 = vmatpush1.msra.mxu0 0.0
      %311 = vmatprep.subr.mxu0 0.0
      %312 = vmatpush1.msra.mxu0 0.0
      %313 = vmatprep.subr.mxu0 0.0
      %314 = vmatpush1.msra.mxu0 0.0
      %315 = vmatprep.subr.mxu0 0.0
      %316 = vmatpush1.msra.mxu0 0.0
      %317 = vmatprep.subr.mxu0 0.0
      %318 = vmatpush1.msra.mxu0 0.0
      %319 = vmatprep.subr.mxu0 0.0
      %320 = vmatpush1.msra.mxu0 0.0
      %321 = vmatprep.subr.mxu0 0.0
      %322 = vmatpush1.msra.mxu0 0.0
      %323 = vmatprep.subr.mxu0 0.0
      %324 = vmatpush1.msra.mxu0 0.0
      %325 = vmatprep.subr.mxu0 0.0
      %326 = vmatpush1.msra.mxu0 0.0
      %327 = vmatprep.subr.mxu0 0.0
      %328 = vmatpush1.msra.mxu0 0.0
      %329 = vmatprep.subr.mxu0 0.0
      %330 = vmatpush1.msra.mxu0 0.0
      %331 = vmatprep.subr.mxu0 0.0
      %332 = vmatpush1.msra.mxu0 0.0
      %333 = vmatprep.mubr.f32.mxu0 0.0
      %334 = vmatmul.mubr.f32.gmra.mrb[0].mxu0 %v189
      %v335 = vpop.f32.mrb[0].mxu0
      %v336 = vadd.f32 0.0, %v335
      %v337 = vpop.f32.mrb[0].mxu0
      %338 = vdwg.mxu0
      %v340 = vsel %vm187, %v172, 0
      %v342 = vsel %vm191, %v170, 0
      %v344 = vsel %vm191, %v177, 0
      %v346 = vsel %vm191, %v171, 0
      %348 = vmatprep.subr.mxu0 %v344
      %349 = vmatpush1.msra.mxu0 %v342
      %350 = vmatprep.subr.mxu0 0.0
      %351 = vmatpush1.msra.mxu0 0.0
      %352 = vmatprep.subr.mxu0 0.0
      %353 = vmatpush1.msra.mxu0 0.0
      %354 = vmatprep.subr.mxu0 0.0
      %355 = vmatpush1.msra.mxu0 0.0
      %356 = vmatprep.subr.mxu0 0.0
      %357 = vmatpush1.msra.mxu0 0.0
      %358 = vmatprep.subr.mxu0 0.0
      %359 = vmatpush1.msra.mxu0 0.0
      %360 = vmatprep.subr.mxu0 0.0
      %361 = vmatpush1.msra.mxu0 0.0
      %362 = vmatprep.subr.mxu0 0.0
      %363 = vmatpush1.msra.mxu0 0.0
      %364 = vmatprep.subr.mxu0 0.0
      %365 = vmatpush1.msra.mxu0 0.0
      %366 = vmatprep.subr.mxu0 0.0
      %367 = vmatpush1.msra.mxu0 0.0
      %368 = vmatprep.subr.mxu0 0.0
      %369 = vmatpush1.msra.mxu0 0.0
      %370 = vmatprep.subr.mxu0 0.0
      %371 = vmatpush1.msra.mxu0 0.0
      %372 = vmatprep.subr.mxu0 0.0
      %373 = vmatpush1.msra.mxu0 0.0
      %374 = vmatprep.subr.mxu0 0.0
      %375 = vmatpush1.msra.mxu0 0.0
      %376 = vmatprep.subr.mxu0 0.0
      %377 = vmatpush1.msra.mxu0 0.0
      %378 = vmatprep.subr.mxu0 0.0
      %379 = vmatpush1.msra.mxu0 0.0
      %380 = vmatprep.subr.mxu0 0.0
      %381 = vmatpush1.msra.mxu0 0.0
      %382 = vmatprep.subr.mxu0 0.0
      %383 = vmatpush1.msra.mxu0 0.0
      %384 = vmatprep.subr.mxu0 0.0
      %385 = vmatpush1.msra.mxu0 0.0
      %386 = vmatprep.subr.mxu0 0.0
      %387 = vmatpush1.msra.mxu0 0.0
      %388 = vmatprep.subr.mxu0 0.0
      %389 = vmatpush1.msra.mxu0 0.0
      %390 = vmatprep.subr.mxu0 0.0
      %391 = vmatpush1.msra.mxu0 0.0
      %392 = vmatprep.subr.mxu0 0.0
      %393 = vmatpush1.msra.mxu0 0.0
      %394 = vmatprep.subr.mxu0 0.0
      %395 = vmatpush1.msra.mxu0 0.0
      %396 = vmatprep.subr.mxu0 0.0
      %397 = vmatpush1.msra.mxu0 0.0
      %398 = vmatprep.subr.mxu0 0.0
      %399 = vmatpush1.msra.mxu0 0.0
      %400 = vmatprep.subr.mxu0 0.0
      %401 = vmatpush1.msra.mxu0 0.0
      %402 = vmatprep.subr.mxu0 0.0
      %403 = vmatpush1.msra.mxu0 0.0
      %404 = vmatprep.subr.mxu0 0.0
      %405 = vmatpush1.msra.mxu0 0.0
      %406 = vmatprep.subr.mxu0 0.0
      %407 = vmatpush1.msra.mxu0 0.0
      %408 = vmatprep.subr.mxu0 0.0
      %409 = vmatpush1.msra.mxu0 0.0
      %410 = vmatprep.subr.mxu0 0.0
      %411 = vmatpush1.msra.mxu0 0.0
      %412 = vmatprep.mubr.f32.mxu0 0.0
      %413 = vmatmul.mubr.f32.gmra.mrb[0].mxu0 %v340
      %v414 = vpop.f32.mrb[0].mxu0
      %v415 = vadd.f32 %v265, %v414
      %v416 = vpop.f32.mrb[0].mxu0
      %v417 = vadd.f32 %v267, %v416
      %418 = vdwg.mxu0
      %419 = vmatprep.subr.mxu0 0.0
      %420 = vmatpush1.msra.mxu0 %v346
      %421 = vmatprep.subr.mxu0 0.0
      %422 = vmatpush1.msra.mxu0 0.0
      %423 = vmatprep.subr.mxu0 0.0
      %424 = vmatpush1.msra.mxu0 0.0
      %425 = vmatprep.subr.mxu0 0.0
      %426 = vmatpush1.msra.mxu0 0.0
      %427 = vmatprep.subr.mxu0 0.0
      %428 = vmatpush1.msra.mxu0 0.0
      %429 = vmatprep.subr.mxu0 0.0
      %430 = vmatpush1.msra.mxu0 0.0
      %431 = vmatprep.subr.mxu0 0.0
      %432 = vmatpush1.msra.mxu0 0.0
      %433 = vmatprep.subr.mxu0 0.0
      %434 = vmatpush1.msra.mxu0 0.0
      %435 = vmatprep.subr.mxu0 0.0
      %436 = vmatpush1.msra.mxu0 0.0
      %437 = vmatprep.subr.mxu0 0.0
      %438 = vmatpush1.msra.mxu0 0.0
      %439 = vmatprep.subr.mxu0 0.0
      %440 = vmatpush1.msra.mxu0 0.0
      %441 = vmatprep.subr.mxu0 0.0
      %442 = vmatpush1.msra.mxu0 0.0
      %443 = vmatprep.subr.mxu0 0.0
      %444 = vmatpush1.msra.mxu0 0.0
      %445 = vmatprep.subr.mxu0 0.0
      %446 = vmatpush1.msra.mxu0 0.0
      %447 = vmatprep.subr.mxu0 0.0
      %448 = vmatpush1.msra.mxu0 0.0
      %449 = vmatprep.subr.mxu0 0.0
      %450 = vmatpush1.msra.mxu0 0.0
      %451 = vmatprep.subr.mxu0 0.0
      %452 = vmatpush1.msra.mxu0 0.0
      %453 = vmatprep.subr.mxu0 0.0
      %454 = vmatpush1.msra.mxu0 0.0
      %455 = vmatprep.subr.mxu0 0.0
      %456 = vmatpush1.msra.mxu0 0.0
      %457 = vmatprep.subr.mxu0 0.0
      %458 = vmatpush1.msra.mxu0 0.0
      %459 = vmatprep.subr.mxu0 0.0
      %460 = vmatpush1.msra.mxu0 0.0
      %461 = vmatprep.subr.mxu0 0.0
      %462 = vmatpush1.msra.mxu0 0.0
      %463 = vmatprep.subr.mxu0 0.0
      %464 = vmatpush1.msra.mxu0 0.0
      %465 = vmatprep.subr.mxu0 0.0
      %466 = vmatpush1.msra.mxu0 0.0
      %467 = vmatprep.subr.mxu0 0.0
      %468 = vmatpush1.msra.mxu0 0.0
      %469 = vmatprep.subr.mxu0 0.0
      %470 = vmatpush1.msra.mxu0 0.0
      %471 = vmatprep.subr.mxu0 0.0
      %472 = vmatpush1.msra.mxu0 0.0
      %473 = vmatprep.subr.mxu0 0.0
      %474 = vmatpush1.msra.mxu0 0.0
      %475 = vmatprep.subr.mxu0 0.0
      %476 = vmatpush1.msra.mxu0 0.0
      %477 = vmatprep.subr.mxu0 0.0
      %478 = vmatpush1.msra.mxu0 0.0
      %479 = vmatprep.subr.mxu0 0.0
      %480 = vmatpush1.msra.mxu0 0.0
      %481 = vmatprep.subr.mxu0 0.0
      %482 = vmatpush1.msra.mxu0 0.0
      %483 = vmatprep.mubr.f32.mxu0 0.0
      %484 = vmatmul.mubr.f32.gmra.mrb[0].mxu0 %v340
      %v485 = vpop.f32.mrb[0].mxu0
      %v486 = vadd.f32 %v336, %v485
      %v487 = vpop.f32.mrb[0].mxu0
      %488 = vdwg.mxu0
      %v489 = vld [vmem:[%s164] sm:$0xff]
      %v490 = vld [vmem:[%s164 + $0x8] sm:$0xf]
      %s491 = scalar_lea.vmem %s1, 16
      %v492 = vld [vmem:[%s491] sm:$0xff]
      %v495 = vcombine.high %v489, %v489
      %496 = vrot.lane.b32.xlu0 %v489, 126
      %v497 = vpop.permute.xlu0 %496
      %498 = vrot.lane.b32.xlu0 %v495, 126
      %v499 = vpop.permute.xlu0 %498
      %500 = vrot.lane.b32.xlu0 %v490, 126
      %v501 = vpop.permute.xlu0 %500
      %vm502 = vcmask 1031168
      %v503 = vsel %vm502, %v497, %v499
      %v504 = vsel %vm502, %v499, %v501
      %v506 = vsel %vm187, %v492, 0
      %v508 = vsel %vm191, %v503, 0
      %v510 = vsel %vm191, %v504, 0
      %v512 = vsel %vm191, %v501, 0
      %514 = vmatprep.subr.mxu0 %v510
      %515 = vmatpush1.msra.mxu0 %v508
      %516 = vmatprep.subr.mxu0 0.0
      %517 = vmatpush1.msra.mxu0 0.0
      %518 = vmatprep.subr.mxu0 0.0
      %519 = vmatpush1.msra.mxu0 0.0
      %520 = vmatprep.subr.mxu0 0.0
      %521 = vmatpush1.msra.mxu0 0.0
      %522 = vmatprep.subr.mxu0 0.0
      %523 = vmatpush1.msra.mxu0 0.0
      %524 = vmatprep.subr.mxu0 0.0
      %525 = vmatpush1.msra.mxu0 0.0
      %526 = vmatprep.subr.mxu0 0.0
      %527 = vmatpush1.msra.mxu0 0.0
      %528 = vmatprep.subr.mxu0 0.0
      %529 = vmatpush1.msra.mxu0 0.0
      %530 = vmatprep.subr.mxu0 0.0
      %531 = vmatpush1.msra.mxu0 0.0
      %532 = vmatprep.subr.mxu0 0.0
      %533 = vmatpush1.msra.mxu0 0.0
      %534 = vmatprep.subr.mxu0 0.0
      %535 = vmatpush1.msra.mxu0 0.0
      %536 = vmatprep.subr.mxu0 0.0
      %537 = vmatpush1.msra.mxu0 0.0
      %538 = vmatprep.subr.mxu0 0.0
      %539 = vmatpush1.msra.mxu0 0.0
      %540 = vmatprep.subr.mxu0 0.0
      %541 = vmatpush1.msra.mxu0 0.0
      %542 = vmatprep.subr.mxu0 0.0
      %543 = vmatpush1.msra.mxu0 0.0
      %544 = vmatprep.subr.mxu0 0.0
      %545 = vmatpush1.msra.mxu0 0.0
      %546 = vmatprep.subr.mxu0 0.0
      %547 = vmatpush1.msra.mxu0 0.0
      %548 = vmatprep.subr.mxu0 0.0
      %549 = vmatpush1.msra.mxu0 0.0
      %550 = vmatprep.subr.mxu0 0.0
      %551 = vmatpush1.msra.mxu0 0.0
      %552 = vmatprep.subr.mxu0 0.0
      %553 = vmatpush1.msra.mxu0 0.0
      %554 = vmatprep.subr.mxu0 0.0
      %555 = vmatpush1.msra.mxu0 0.0
      %556 = vmatprep.subr.mxu0 0.0
      %557 = vmatpush1.msra.mxu0 0.0
      %558 = vmatprep.subr.mxu0 0.0
      %559 = vmatpush1.msra.mxu0 0.0
      %560 = vmatprep.subr.mxu0 0.0
      %561 = vmatpush1.msra.mxu0 0.0
      %562 = vmatprep.subr.mxu0 0.0
      %563 = vmatpush1.msra.mxu0 0.0
      %564 = vmatprep.subr.mxu0 0.0
      %565 = vmatpush1.msra.mxu0 0.0
      %566 = vmatprep.subr.mxu0 0.0
      %567 = vmatpush1.msra.mxu0 0.0
      %568 = vmatprep.subr.mxu0 0.0
      %569 = vmatpush1.msra.mxu0 0.0
      %570 = vmatprep.subr.mxu0 0.0
      %571 = vmatpush1.msra.mxu0 0.0
      %572 = vmatprep.subr.mxu0 0.0
      %573 = vmatpush1.msra.mxu0 0.0
      %574 = vmatprep.subr.mxu0 0.0
      %575 = vmatpush1.msra.mxu0 0.0
      %576 = vmatprep.subr.mxu0 0.0
      %577 = vmatpush1.msra.mxu0 0.0
      %578 = vmatprep.mubr.f32.mxu0 0.0
      %579 = vmatmul.mubr.f32.gmra.mrb[0].mxu0 %v506
      %v580 = vpop.f32.mrb[0].mxu0
      %v581 = vadd.f32 0.0, %v580
      %v582 = vpop.f32.mrb[0].mxu0
      %v583 = vadd.f32 0.0, %v582
      %584 = vdwg.mxu0
      %585 = vmatprep.subr.mxu0 0.0
      %586 = vmatpush1.msra.mxu0 %v512
      %587 = vmatprep.subr.mxu0 0.0
      %588 = vmatpush1.msra.mxu0 0.0
      %589 = vmatprep.subr.mxu0 0.0
      %590 = vmatpush1.msra.mxu0 0.0
      %591 = vmatprep.subr.mxu0 0.0
      %592 = vmatpush1.msra.mxu0 0.0
      %593 = vmatprep.subr.mxu0 0.0
      %594 = vmatpush1.msra.mxu0 0.0
      %595 = vmatprep.subr.mxu0 0.0
      %596 = vmatpush1.msra.mxu0 0.0
      %597 = vmatprep.subr.mxu0 0.0
      %598 = vmatpush1.msra.mxu0 0.0
      %599 = vmatprep.subr.mxu0 0.0
      %600 = vmatpush1.msra.mxu0 0.0
      %601 = vmatprep.subr.mxu0 0.0
      %602 = vmatpush1.msra.mxu0 0.0
      %603 = vmatprep.subr.mxu0 0.0
      %604 = vmatpush1.msra.mxu0 0.0
      %605 = vmatprep.subr.mxu0 0.0
      %606 = vmatpush1.msra.mxu0 0.0
      %607 = vmatprep.subr.mxu0 0.0
      %608 = vmatpush1.msra.mxu0 0.0
      %609 = vmatprep.subr.mxu0 0.0
      %610 = vmatpush1.msra.mxu0 0.0
      %611 = vmatprep.subr.mxu0 0.0
      %612 = vmatpush1.msra.mxu0 0.0
      %613 = vmatprep.subr.mxu0 0.0
      %614 = vmatpush1.msra.mxu0 0.0
      %615 = vmatprep.subr.mxu0 0.0
      %616 = vmatpush1.msra.mxu0 0.0
      %617 = vmatprep.subr.mxu0 0.0
      %618 = vmatpush1.msra.mxu0 0.0
      %619 = vmatprep.subr.mxu0 0.0
      %620 = vmatpush1.msra.mxu0 0.0
      %621 = vmatprep.subr.mxu0 0.0
      %622 = vmatpush1.msra.mxu0 0.0
      %623 = vmatprep.subr.mxu0 0.0
      %624 = vmatpush1.msra.mxu0 0.0
      %625 = vmatprep.subr.mxu0 0.0
      %626 = vmatpush1.msra.mxu0 0.0
      %627 = vmatprep.subr.mxu0 0.0
      %628 = vmatpush1.msra.mxu0 0.0
      %629 = vmatprep.subr.mxu0 0.0
      %630 = vmatpush1.msra.mxu0 0.0
      %631 = vmatprep.subr.mxu0 0.0
      %632 = vmatpush1.msra.mxu0 0.0
      %633 = vmatprep.subr.mxu0 0.0
      %634 = vmatpush1.msra.mxu0 0.0
      %635 = vmatprep.subr.mxu0 0.0
      %636 = vmatpush1.msra.mxu0 0.0
      %637 = vmatprep.subr.mxu0 0.0
      %638 = vmatpush1.msra.mxu0 0.0
      %639 = vmatprep.subr.mxu0 0.0
      %640 = vmatpush1.msra.mxu0 0.0
      %641 = vmatprep.subr.mxu0 0.0
      %642 = vmatpush1.msra.mxu0 0.0
      %643 = vmatprep.subr.mxu0 0.0
      %644 = vmatpush1.msra.mxu0 0.0
      %645 = vmatprep.subr.mxu0 0.0
      %646 = vmatpush1.msra.mxu0 0.0
      %647 = vmatprep.subr.mxu0 0.0
      %648 = vmatpush1.msra.mxu0 0.0
      %649 = vmatprep.mubr.f32.mxu0 0.0
      %650 = vmatmul.mubr.f32.gmra.mrb[0].mxu0 %v506
      %v651 = vpop.f32.mrb[0].mxu0
      %v652 = vadd.f32 0.0, %v651
      %v653 = vpop.f32.mrb[0].mxu0
      %654 = vdwg.mxu0
      %v655 = vadd.f32 %v415, %v581
      %v656 = vadd.f32 %v417, %v583
      %v657 = vadd.f32 %v486, %v652
      %v658 = vld [vmem:[%s164] sm:$0xff]
      %v659 = vld [vmem:[%s164 + $0x8] sm:$0xf]
      %s660 = scalar_lea.vmem %s1, 24
      %v661 = vld [vmem:[%s660] sm:$0xff]
      %v664 = vcombine.high %v658, %v658
      %665 = vrot.lane.b32.xlu0 %v658, 110
      %v666 = vpop.permute.xlu0 %665
      %667 = vrot.lane.b32.xlu0 %v664, 110
      %v668 = vpop.permute.xlu0 %667
      %669 = vrot.lane.b32.xlu0 %v659, 110
      %v670 = vpop.permute.xlu0 %669
      %vm671 = vcmask 900096
      %v672 = vsel %vm671, %v666, %v668
      %v673 = vsel %vm671, %v668, %v670
      %v675 = vsel %vm187, %v661, 0
      %v677 = vsel %vm191, %v672, 0
      %v679 = vsel %vm191, %v673, 0
      %v681 = vsel %vm191, %v670, 0
      %683 = vmatprep.subr.mxu0 %v679
      %684 = vmatpush1.msra.mxu0 %v677
      %685 = vmatprep.subr.mxu0 0.0
      %686 = vmatpush1.msra.mxu0 0.0
      %687 = vmatprep.subr.mxu0 0.0
      %688 = vmatpush1.msra.mxu0 0.0
      %689 = vmatprep.subr.mxu0 0.0
      %690 = vmatpush1.msra.mxu0 0.0
      %691 = vmatprep.subr.mxu0 0.0
      %692 = vmatpush1.msra.mxu0 0.0
      %693 = vmatprep.subr.mxu0 0.0
      %694 = vmatpush1.msra.mxu0 0.0
      %695 = vmatprep.subr.mxu0 0.0
      %696 = vmatpush1.msra.mxu0 0.0
      %697 = vmatprep.subr.mxu0 0.0
      %698 = vmatpush1.msra.mxu0 0.0
      %699 = vmatprep.subr.mxu0 0.0
      %700 = vmatpush1.msra.mxu0 0.0
      %701 = vmatprep.subr.mxu0 0.0
      %702 = vmatpush1.msra.mxu0 0.0
      %703 = vmatprep.subr.mxu0 0.0
      %704 = vmatpush1.msra.mxu0 0.0
      %705 = vmatprep.subr.mxu0 0.0
      %706 = vmatpush1.msra.mxu0 0.0
      %707 = vmatprep.subr.mxu0 0.0
      %708 = vmatpush1.msra.mxu0 0.0
      %709 = vmatprep.subr.mxu0 0.0
      %710 = vmatpush1.msra.mxu0 0.0
      %711 = vmatprep.subr.mxu0 0.0
      %712 = vmatpush1.msra.mxu0 0.0
      %713 = vmatprep.subr.mxu0 0.0
      %714 = vmatpush1.msra.mxu0 0.0
      %715 = vmatprep.subr.mxu0 0.0
      %716 = vmatpush1.msra.mxu0 0.0
      %717 = vmatprep.subr.mxu0 0.0
      %718 = vmatpush1.msra.mxu0 0.0
      %719 = vmatprep.subr.mxu0 0.0
      %720 = vmatpush1.msra.mxu0 0.0
      %721 = vmatprep.subr.mxu0 0.0
      %722 = vmatpush1.msra.mxu0 0.0
      %723 = vmatprep.subr.mxu0 0.0
      %724 = vmatpush1.msra.mxu0 0.0
      %725 = vmatprep.subr.mxu0 0.0
      %726 = vmatpush1.msra.mxu0 0.0
      %727 = vmatprep.subr.mxu0 0.0
      %728 = vmatpush1.msra.mxu0 0.0
      %729 = vmatprep.subr.mxu0 0.0
      %730 = vmatpush1.msra.mxu0 0.0
      %731 = vmatprep.subr.mxu0 0.0
      %732 = vmatpush1.msra.mxu0 0.0
      %733 = vmatprep.subr.mxu0 0.0
      %734 = vmatpush1.msra.mxu0 0.0
      %735 = vmatprep.subr.mxu0 0.0
      %736 = vmatpush1.msra.mxu0 0.0
      %737 = vmatprep.subr.mxu0 0.0
      %738 = vmatpush1.msra.mxu0 0.0
      %739 = vmatprep.subr.mxu0 0.0
      %740 = vmatpush1.msra.mxu0 0.0
      %741 = vmatprep.subr.mxu0 0.0
      %742 = vmatpush1.msra.mxu0 0.0
      %743 = vmatprep.subr.mxu0 0.0
      %744 = vmatpush1.msra.mxu0 0.0
      %745 = vmatprep.subr.mxu0 0.0
      %746 = vmatpush1.msra.mxu0 0.0
      %747 = vmatprep.mubr.f32.mxu0 0.0
      %748 = vmatmul.mubr.f32.gmra.mrb[0].mxu0 %v675
      %v749 = vpop.f32.mrb[0].mxu0
      %v750 = vadd.f32 0.0, %v749
      %v751 = vpop.f32.mrb[0].mxu0
      %v752 = vadd.f32 0.0, %v751
      %753 = vdwg.mxu0
      %754 = vmatprep.subr.mxu0 0.0
      %755 = vmatpush1.msra.mxu0 %v681
      %756 = vmatprep.subr.mxu0 0.0
      %757 = vmatpush1.msra.mxu0 0.0
      %758 = vmatprep.subr.mxu0 0.0
      %759 = vmatpush1.msra.mxu0 0.0
      %760 = vmatprep.subr.mxu0 0.0
      %761 = vmatpush1.msra.mxu0 0.0
      %762 = vmatprep.subr.mxu0 0.0
      %763 = vmatpush1.msra.mxu0 0.0
      %764 = vmatprep.subr.mxu0 0.0
      %765 = vmatpush1.msra.mxu0 0.0
      %766 = vmatprep.subr.mxu0 0.0
      %767 = vmatpush1.msra.mxu0 0.0
      %768 = vmatprep.subr.mxu0 0.0
      %769 = vmatpush1.msra.mxu0 0.0
      %770 = vmatprep.subr.mxu0 0.0
      %771 = vmatpush1.msra.mxu0 0.0
      %772 = vmatprep.subr.mxu0 0.0
      %773 = vmatpush1.msra.mxu0 0.0
      %774 = vmatprep.subr.mxu0 0.0
      %775 = vmatpush1.msra.mxu0 0.0
      %776 = vmatprep.subr.mxu0 0.0
      %777 = vmatpush1.msra.mxu0 0.0
      %778 = vmatprep.subr.mxu0 0.0
      %779 = vmatpush1.msra.mxu0 0.0
      %780 = vmatprep.subr.mxu0 0.0
      %781 = vmatpush1.msra.mxu0 0.0
      %782 = vmatprep.subr.mxu0 0.0
      %783 = vmatpush1.msra.mxu0 0.0
      %784 = vmatprep.subr.mxu0 0.0
      %785 = vmatpush1.msra.mxu0 0.0
      %786 = vmatprep.subr.mxu0 0.0
      %787 = vmatpush1.msra.mxu0 0.0
      %788 = vmatprep.subr.mxu0 0.0
      %789 = vmatpush1.msra.mxu0 0.0
      %790 = vmatprep.subr.mxu0 0.0
      %791 = vmatpush1.msra.mxu0 0.0
      %792 = vmatprep.subr.mxu0 0.0
      %793 = vmatpush1.msra.mxu0 0.0
      %794 = vmatprep.subr.mxu0 0.0
      %795 = vmatpush1.msra.mxu0 0.0
      %796 = vmatprep.subr.mxu0 0.0
      %797 = vmatpush1.msra.mxu0 0.0
      %798 = vmatprep.subr.mxu0 0.0
      %799 = vmatpush1.msra.mxu0 0.0
      %800 = vmatprep.subr.mxu0 0.0
      %801 = vmatpush1.msra.mxu0 0.0
      %802 = vmatprep.subr.mxu0 0.0
      %803 = vmatpush1.msra.mxu0 0.0
      %804 = vmatprep.subr.mxu0 0.0
      %805 = vmatpush1.msra.mxu0 0.0
      %806 = vmatprep.subr.mxu0 0.0
      %807 = vmatpush1.msra.mxu0 0.0
      %808 = vmatprep.subr.mxu0 0.0
      %809 = vmatpush1.msra.mxu0 0.0
      %810 = vmatprep.subr.mxu0 0.0
      %811 = vmatpush1.msra.mxu0 0.0
      %812 = vmatprep.subr.mxu0 0.0
      %813 = vmatpush1.msra.mxu0 0.0
      %814 = vmatprep.subr.mxu0 0.0
      %815 = vmatpush1.msra.mxu0 0.0
      %816 = vmatprep.subr.mxu0 0.0
      %817 = vmatpush1.msra.mxu0 0.0
      %818 = vmatprep.mubr.f32.mxu0 0.0
      %819 = vmatmul.mubr.f32.gmra.mrb[0].mxu0 %v675
      %v820 = vpop.f32.mrb[0].mxu0
      %v821 = vadd.f32 0.0, %v820
      %v822 = vpop.f32.mrb[0].mxu0
      %823 = vdwg.mxu0
      %v824 = vadd.f32 %v655, %v750
      %v825 = vadd.f32 %v656, %v752
      %v826 = vadd.f32 %v657, %v821
      %v827 = vld [vmem:[%s164] sm:$0xff]
      %v828 = vld [vmem:[%s164 + $0x8] sm:$0xf]
      %s829 = scalar_lea.vmem %s1, 32
      %v830 = vld [vmem:[%s829] sm:$0xff]
      %v833 = vcombine.high %v827, %v827
      %834 = vrot.lane.b32.xlu0 %v827, 109
      %v835 = vpop.permute.xlu0 %834
      %836 = vrot.lane.b32.xlu0 %v833, 109
      %v837 = vpop.permute.xlu0 %836
      %838 = vrot.lane.b32.xlu0 %v828, 109
      %v839 = vpop.permute.xlu0 %838
      %vm840 = vcmask 891904
      %v841 = vsel %vm840, %v835, %v837
      %v842 = vsel %vm840, %v837, %v839
      %v844 = vsel %vm187, %v830, 0
      %v846 = vsel %vm191, %v841, 0
      %v848 = vsel %vm191, %v842, 0
      %v850 = vsel %vm191, %v839, 0
      %852 = vmatprep.subr.mxu0 %v848
      %853 = vmatpush1.msra.mxu0 %v846
      %854 = vmatprep.subr.mxu0 0.0
      %855 = vmatpush1.msra.mxu0 0.0
      %856 = vmatprep.subr.mxu0 0.0
      %857 = vmatpush1.msra.mxu0 0.0
      %858 = vmatprep.subr.mxu0 0.0
      %859 = vmatpush1.msra.mxu0 0.0
      %860 = vmatprep.subr.mxu0 0.0
      %861 = vmatpush1.msra.mxu0 0.0
      %862 = vmatprep.subr.mxu0 0.0
      %863 = vmatpush1.msra.mxu0 0.0
      %864 = vmatprep.subr.mxu0 0.0
      %865 = vmatpush1.msra.mxu0 0.0
      %866 = vmatprep.subr.mxu0 0.0
      %867 = vmatpush1.msra.mxu0 0.0
      %868 = vmatprep.subr.mxu0 0.0
      %869 = vmatpush1.msra.mxu0 0.0
      %870 = vmatprep.subr.mxu0 0.0
      %871 = vmatpush1.msra.mxu0 0.0
      %872 = vmatprep.subr.mxu0 0.0
      %873 = vmatpush1.msra.mxu0 0.0
      %874 = vmatprep.subr.mxu0 0.0
      %875 = vmatpush1.msra.mxu0 0.0
      %876 = vmatprep.subr.mxu0 0.0
      %877 = vmatpush1.msra.mxu0 0.0
      %878 = vmatprep.subr.mxu0 0.0
      %879 = vmatpush1.msra.mxu0 0.0
      %880 = vmatprep.subr.mxu0 0.0
      %881 = vmatpush1.msra.mxu0 0.0
      %882 = vmatprep.subr.mxu0 0.0
      %883 = vmatpush1.msra.mxu0 0.0
      %884 = vmatprep.subr.mxu0 0.0
      %885 = vmatpush1.msra.mxu0 0.0
      %886 = vmatprep.subr.mxu0 0.0
      %887 = vmatpush1.msra.mxu0 0.0
      %888 = vmatprep.subr.mxu0 0.0
      %889 = vmatpush1.msra.mxu0 0.0
      %890 = vmatprep.subr.mxu0 0.0
      %891 = vmatpush1.msra.mxu0 0.0
      %892 = vmatprep.subr.mxu0 0.0
      %893 = vmatpush1.msra.mxu0 0.0
      %894 = vmatprep.subr.mxu0 0.0
      %895 = vmatpush1.msra.mxu0 0.0
      %896 = vmatprep.subr.mxu0 0.0
      %897 = vmatpush1.msra.mxu0 0.0
      %898 = vmatprep.subr.mxu0 0.0
      %899 = vmatpush1.msra.mxu0 0.0
      %900 = vmatprep.subr.mxu0 0.0
      %901 = vmatpush1.msra.mxu0 0.0
      %902 = vmatprep.subr.mxu0 0.0
      %903 = vmatpush1.msra.mxu0 0.0
      %904 = vmatprep.subr.mxu0 0.0
      %905 = vmatpush1.msra.mxu0 0.0
      %906 = vmatprep.subr.mxu0 0.0
      %907 = vmatpush1.msra.mxu0 0.0
      %908 = vmatprep.subr.mxu0 0.0
      %909 = vmatpush1.msra.mxu0 0.0
      %910 = vmatprep.subr.mxu0 0.0
      %911 = vmatpush1.msra.mxu0 0.0
      %912 = vmatprep.subr.mxu0 0.0
      %913 = vmatpush1.msra.mxu0 0.0
      %914 = vmatprep.subr.mxu0 0.0
      %915 = vmatpush1.msra.mxu0 0.0
      %916 = vmatprep.mubr.f32.mxu0 0.0
      %917 = vmatmul.mubr.f32.gmra.mrb[0].mxu0 %v844
      %v918 = vpop.f32.mrb[0].mxu0
      %v919 = vadd.f32 0.0, %v918
      %v920 = vpop.f32.mrb[0].mxu0
      %v921 = vadd.f32 0.0, %v920
      %922 = vdwg.mxu0
      %923 = vmatprep.subr.mxu0 0.0
      %924 = vmatpush1.msra.mxu0 %v850
      %925 = vmatprep.subr.mxu0 0.0
      %926 = vmatpush1.msra.mxu0 0.0
      %927 = vmatprep.subr.mxu0 0.0
      %928 = vmatpush1.msra.mxu0 0.0
      %929 = vmatprep.subr.mxu0 0.0
      %930 = vmatpush1.msra.mxu0 0.0
      %931 = vmatprep.subr.mxu0 0.0
      %932 = vmatpush1.msra.mxu0 0.0
      %933 = vmatprep.subr.mxu0 0.0
      %934 = vmatpush1.msra.mxu0 0.0
      %935 = vmatprep.subr.mxu0 0.0
      %936 = vmatpush1.msra.mxu0 0.0
      %937 = vmatprep.subr.mxu0 0.0
      %938 = vmatpush1.msra.mxu0 0.0
      %939 = vmatprep.subr.mxu0 0.0
      %940 = vmatpush1.msra.mxu0 0.0
      %941 = vmatprep.subr.mxu0 0.0
      %942 = vmatpush1.msra.mxu0 0.0
      %943 = vmatprep.subr.mxu0 0.0
      %944 = vmatpush1.msra.mxu0 0.0
      %945 = vmatprep.subr.mxu0 0.0
      %946 = vmatpush1.msra.mxu0 0.0
      %947 = vmatprep.subr.mxu0 0.0
      %948 = vmatpush1.msra.mxu0 0.0
      %949 = vmatprep.subr.mxu0 0.0
      %950 = vmatpush1.msra.mxu0 0.0
      %951 = vmatprep.subr.mxu0 0.0
      %952 = vmatpush1.msra.mxu0 0.0
      %953 = vmatprep.subr.mxu0 0.0
      %954 = vmatpush1.msra.mxu0 0.0
      %955 = vmatprep.subr.mxu0 0.0
      %956 = vmatpush1.msra.mxu0 0.0
      %957 = vmatprep.subr.mxu0 0.0
      %958 = vmatpush1.msra.mxu0 0.0
      %959 = vmatprep.subr.mxu0 0.0
      %960 = vmatpush1.msra.mxu0 0.0
      %961 = vmatprep.subr.mxu0 0.0
      %962 = vmatpush1.msra.mxu0 0.0
      %963 = vmatprep.subr.mxu0 0.0
      %964 = vmatpush1.msra.mxu0 0.0
      %965 = vmatprep.subr.mxu0 0.0
      %966 = vmatpush1.msra.mxu0 0.0
      %967 = vmatprep.subr.mxu0 0.0
      %968 = vmatpush1.msra.mxu0 0.0
      %969 = vmatprep.subr.mxu0 0.0
      %970 = vmatpush1.msra.mxu0 0.0
      %971 = vmatprep.subr.mxu0 0.0
      %972 = vmatpush1.msra.mxu0 0.0
      %973 = vmatprep.subr.mxu0 0.0
      %974 = vmatpush1.msra.mxu0 0.0
      %975 = vmatprep.subr.mxu0 0.0
      %976 = vmatpush1.msra.mxu0 0.0
      %977 = vmatprep.subr.mxu0 0.0
      %978 = vmatpush1.msra.mxu0 0.0
      %979 = vmatprep.subr.mxu0 0.0
      %980 = vmatpush1.msra.mxu0 0.0
      %981 = vmatprep.subr.mxu0 0.0
      %982 = vmatpush1.msra.mxu0 0.0
      %983 = vmatprep.subr.mxu0 0.0
      %984 = vmatpush1.msra.mxu0 0.0
      %985 = vmatprep.subr.mxu0 0.0
      %986 = vmatpush1.msra.mxu0 0.0
      %987 = vmatprep.mubr.f32.mxu0 0.0
      %988 = vmatmul.mubr.f32.gmra.mrb[0].mxu0 %v844
      %v989 = vpop.f32.mrb[0].mxu0
      %v990 = vadd.f32 0.0, %v989
      %v991 = vpop.f32.mrb[0].mxu0
      %992 = vdwg.mxu0
      %v993 = vadd.f32 %v824, %v919
      %v994 = vadd.f32 %v825, %v921
      %v995 = vadd.f32 %v826, %v990
      %v996 = vld [vmem:[%s164] sm:$0xff]
      %v997 = vld [vmem:[%s164 + $0x8] sm:$0xf]
      %s998 = scalar_lea.vmem %s1, 40
      %v999 = vld [vmem:[%s998] sm:$0xff]
      %v1002 = vcombine.high %v996, %v996
      %1003 = vrot.lane.b32.xlu0 %v996, 108
      %v1004 = vpop.permute.xlu0 %1003
      %1005 = vrot.lane.b32.xlu0 %v1002, 108
      %v1006 = vpop.permute.xlu0 %1005
      %1007 = vrot.lane.b32.xlu0 %v997, 108
      %v1008 = vpop.permute.xlu0 %1007
      %vm1009 = vcmask 883712
      %v1010 = vsel %vm1009, %v1004, %v1006
      %v1011 = vsel %vm1009, %v1006, %v1008
      %v1013 = vsel %vm187, %v999, 0
      %v1015 = vsel %vm191, %v1010, 0
      %v1017 = vsel %vm191, %v1011, 0
      %v1019 = vsel %vm191, %v1008, 0
      %1021 = vmatprep.subr.mxu0 %v1017
      %1022 = vmatpush1.msra.mxu0 %v1015
      %1023 = vmatprep.subr.mxu0 0.0
      %1024 = vmatpush1.msra.mxu0 0.0
      %1025 = vmatprep.subr.mxu0 0.0
      %1026 = vmatpush1.msra.mxu0 0.0
      %1027 = vmatprep.subr.mxu0 0.0
      %1028 = vmatpush1.msra.mxu0 0.0
      %1029 = vmatprep.subr.mxu0 0.0
      %1030 = vmatpush1.msra.mxu0 0.0
      %1031 = vmatprep.subr.mxu0 0.0
      %1032 = vmatpush1.msra.mxu0 0.0
      %1033 = vmatprep.subr.mxu0 0.0
      %1034 = vmatpush1.msra.mxu0 0.0
      %1035 = vmatprep.subr.mxu0 0.0
      %1036 = vmatpush1.msra.mxu0 0.0
      %1037 = vmatprep.subr.mxu0 0.0
      %1038 = vmatpush1.msra.mxu0 0.0
      %1039 = vmatprep.subr.mxu0 0.0
      %1040 = vmatpush1.msra.mxu0 0.0
      %1041 = vmatprep.subr.mxu0 0.0
      %1042 = vmatpush1.msra.mxu0 0.0
      %1043 = vmatprep.subr.mxu0 0.0
      %1044 = vmatpush1.msra.mxu0 0.0
      %1045 = vmatprep.subr.mxu0 0.0
      %1046 = vmatpush1.msra.mxu0 0.0
      %1047 = vmatprep.subr.mxu0 0.0
      %1048 = vmatpush1.msra.mxu0 0.0
      %1049 = vmatprep.subr.mxu0 0.0
      %1050 = vmatpush1.msra.mxu0 0.0
      %1051 = vmatprep.subr.mxu0 0.0
      %1052 = vmatpush1.msra.mxu0 0.0
      %1053 = vmatprep.subr.mxu0 0.0
      %1054 = vmatpush1.msra.mxu0 0.0
      %1055 = vmatprep.subr.mxu0 0.0
      %1056 = vmatpush1.msra.mxu0 0.0
      %1057 = vmatprep.subr.mxu0 0.0
      %1058 = vmatpush1.msra.mxu0 0.0
      %1059 = vmatprep.subr.mxu0 0.0
      %1060 = vmatpush1.msra.mxu0 0.0
      %1061 = vmatprep.subr.mxu0 0.0
      %1062 = vmatpush1.msra.mxu0 0.0
      %1063 = vmatprep.subr.mxu0 0.0
      %1064 = vmatpush1.msra.mxu0 0.0
      %1065 = vmatprep.subr.mxu0 0.0
      %1066 = vmatpush1.msra.mxu0 0.0
      %1067 = vmatprep.subr.mxu0 0.0
      %1068 = vmatpush1.msra.mxu0 0.0
      %1069 = vmatprep.subr.mxu0 0.0
      %1070 = vmatpush1.msra.mxu0 0.0
      %1071 = vmatprep.subr.mxu0 0.0
      %1072 = vmatpush1.msra.mxu0 0.0
      %1073 = vmatprep.subr.mxu0 0.0
      %1074 = vmatpush1.msra.mxu0 0.0
      %1075 = vmatprep.subr.mxu0 0.0
      %1076 = vmatpush1.msra.mxu0 0.0
      %1077 = vmatprep.subr.mxu0 0.0
      %1078 = vmatpush1.msra.mxu0 0.0
      %1079 = vmatprep.subr.mxu0 0.0
      %1080 = vmatpush1.msra.mxu0 0.0
      %1081 = vmatprep.subr.mxu0 0.0
      %1082 = vmatpush1.msra.mxu0 0.0
      %1083 = vmatprep.subr.mxu0 0.0
      %1084 = vmatpush1.msra.mxu0 0.0
      %1085 = vmatprep.mubr.f32.mxu0 0.0
      %1086 = vmatmul.mubr.f32.gmra.mrb[0].mxu0 %v1013
      %v1087 = vpop.f32.mrb[0].mxu0
      %v1088 = vadd.f32 0.0, %v1087
      %v1089 = vpop.f32.mrb[0].mxu0
      %v1090 = vadd.f32 0.0, %v1089
      %1091 = vdwg.mxu0
      %1092 = vmatprep.subr.mxu0 0.0
      %1093 = vmatpush1.msra.mxu0 %v1019
      %1094 = vmatprep.subr.mxu0 0.0
      %1095 = vmatpush1.msra.mxu0 0.0
      %1096 = vmatprep.subr.mxu0 0.0
      %1097 = vmatpush1.msra.mxu0 0.0
      %1098 = vmatprep.subr.mxu0 0.0
      %1099 = vmatpush1.msra.mxu0 0.0
      %1100 = vmatprep.subr.mxu0 0.0
      %1101 = vmatpush1.msra.mxu0 0.0
      %1102 = vmatprep.subr.mxu0 0.0
      %1103 = vmatpush1.msra.mxu0 0.0
      %1104 = vmatprep.subr.mxu0 0.0
      %1105 = vmatpush1.msra.mxu0 0.0
      %1106 = vmatprep.subr.mxu0 0.0
      %1107 = vmatpush1.msra.mxu0 0.0
      %1108 = vmatprep.subr.mxu0 0.0
      %1109 = vmatpush1.msra.mxu0 0.0
      %1110 = vmatprep.subr.mxu0 0.0
      %1111 = vmatpush1.msra.mxu0 0.0
      %1112 = vmatprep.subr.mxu0 0.0
      %1113 = vmatpush1.msra.mxu0 0.0
      %1114 = vmatprep.subr.mxu0 0.0
      %1115 = vmatpush1.msra.mxu0 0.0
      %1116 = vmatprep.subr.mxu0 0.0
      %1117 = vmatpush1.msra.mxu0 0.0
      %1118 = vmatprep.subr.mxu0 0.0
      %1119 = vmatpush1.msra.mxu0 0.0
      %1120 = vmatprep.subr.mxu0 0.0
      %1121 = vmatpush1.msra.mxu0 0.0
      %1122 = vmatprep.subr.mxu0 0.0
      %1123 = vmatpush1.msra.mxu0 0.0
      %1124 = vmatprep.subr.mxu0 0.0
      %1125 = vmatpush1.msra.mxu0 0.0
      %1126 = vmatprep.subr.mxu0 0.0
      %1127 = vmatpush1.msra.mxu0 0.0
      %1128 = vmatprep.subr.mxu0 0.0
      %1129 = vmatpush1.msra.mxu0 0.0
      %1130 = vmatprep.subr.mxu0 0.0
      %1131 = vmatpush1.msra.mxu0 0.0
      %1132 = vmatprep.subr.mxu0 0.0
      %1133 = vmatpush1.msra.mxu0 0.0
      %1134 = vmatprep.subr.mxu0 0.0
      %1135 = vmatpush1.msra.mxu0 0.0
      %1136 = vmatprep.subr.mxu0 0.0
      %1137 = vmatpush1.msra.mxu0 0.0
      %1138 = vmatprep.subr.mxu0 0.0
      %1139 = vmatpush1.msra.mxu0 0.0
      %1140 = vmatprep.subr.mxu0 0.0
      %1141 = vmatpush1.msra.mxu0 0.0
      %1142 = vmatprep.subr.mxu0 0.0
      %1143 = vmatpush1.msra.mxu0 0.0
      %1144 = vmatprep.subr.mxu0 0.0
      %1145 = vmatpush1.msra.mxu0 0.0
      %1146 = vmatprep.subr.mxu0 0.0
      %1147 = vmatpush1.msra.mxu0 0.0
      %1148 = vmatprep.subr.mxu0 0.0
      %1149 = vmatpush1.msra.mxu0 0.0
      %1150 = vmatprep.subr.mxu0 0.0
      %1151 = vmatpush1.msra.mxu0 0.0
      %1152 = vmatprep.subr.mxu0 0.0
      %1153 = vmatpush1.msra.mxu0 0.0
      %1154 = vmatprep.subr.mxu0 0.0
      %1155 = vmatpush1.msra.mxu0 0.0
      %1156 = vmatprep.mubr.f32.mxu0 0.0
      %1157 = vmatmul.mubr.f32.gmra.mrb[0].mxu0 %v1013
      %v1158 = vpop.f32.mrb[0].mxu0
      %v1159 = vadd.f32 0.0, %v1158
      %v1160 = vpop.f32.mrb[0].mxu0
      %1161 = vdwg.mxu0
      %v1162 = vadd.f32 %v993, %v1088
      %v1163 = vadd.f32 %v994, %v1090
      %v1164 = vadd.f32 %v995, %v1159
      %v1165 = vld [vmem:[%s164] sm:$0xff]
      %v1166 = vld [vmem:[%s164 + $0x8] sm:$0xf]
      %s1167 = scalar_lea.vmem %s1, 48
      %v1168 = vld [vmem:[%s1167] sm:$0xff]
      %v1171 = vcombine.high %v1165, %v1165
      %1172 = vrot.lane.b32.xlu0 %v1165, 92
      %v1173 = vpop.permute.xlu0 %1172
      %1174 = vrot.lane.b32.xlu0 %v1171, 92
      %v1175 = vpop.permute.xlu0 %1174
      %1176 = vrot.lane.b32.xlu0 %v1166, 92
      %v1177 = vpop.permute.xlu0 %1176
      %vm1178 = vcmask 752640
      %v1179 = vsel %vm1178, %v1173, %v1175
      %v1180 = vsel %vm1178, %v1175, %v1177
      %v1182 = vsel %vm187, %v1168, 0
      %v1184 = vsel %vm191, %v1179, 0
      %v1186 = vsel %vm191, %v1180, 0
      %v1188 = vsel %vm191, %v1177, 0
      %1190 = vmatprep.subr.mxu0 %v1186
      %1191 = vmatpush1.msra.mxu0 %v1184
      %1192 = vmatprep.subr.mxu0 0.0
      %1193 = vmatpush1.msra.mxu0 0.0
      %1194 = vmatprep.subr.mxu0 0.0
      %1195 = vmatpush1.msra.mxu0 0.0
      %1196 = vmatprep.subr.mxu0 0.0
      %1197 = vmatpush1.msra.mxu0 0.0
      %1198 = vmatprep.subr.mxu0 0.0
      %1199 = vmatpush1.msra.mxu0 0.0
      %1200 = vmatprep.subr.mxu0 0.0
      %1201 = vmatpush1.msra.mxu0 0.0
      %1202 = vmatprep.subr.mxu0 0.0
      %1203 = vmatpush1.msra.mxu0 0.0
      %1204 = vmatprep.subr.mxu0 0.0
      %1205 = vmatpush1.msra.mxu0 0.0
      %1206 = vmatprep.subr.mxu0 0.0
      %1207 = vmatpush1.msra.mxu0 0.0
      %1208 = vmatprep.subr.mxu0 0.0
      %1209 = vmatpush1.msra.mxu0 0.0
      %1210 = vmatprep.subr.mxu0 0.0
      %1211 = vmatpush1.msra.mxu0 0.0
      %1212 = vmatprep.subr.mxu0 0.0
      %1213 = vmatpush1.msra.mxu0 0.0
      %1214 = vmatprep.subr.mxu0 0.0
      %1215 = vmatpush1.msra.mxu0 0.0
      %1216 = vmatprep.subr.mxu0 0.0
      %1217 = vmatpush1.msra.mxu0 0.0
      %1218 = vmatprep.subr.mxu0 0.0
      %1219 = vmatpush1.msra.mxu0 0.0
      %1220 = vmatprep.subr.mxu0 0.0
      %1221 = vmatpush1.msra.mxu0 0.0
      %1222 = vmatprep.subr.mxu0 0.0
      %1223 = vmatpush1.msra.mxu0 0.0
      %1224 = vmatprep.subr.mxu0 0.0
      %1225 = vmatpush1.msra.mxu0 0.0
      %1226 = vmatprep.subr.mxu0 0.0
      %1227 = vmatpush1.msra.mxu0 0.0
      %1228 = vmatprep.subr.mxu0 0.0
      %1229 = vmatpush1.msra.mxu0 0.0
      %1230 = vmatprep.subr.mxu0 0.0
      %1231 = vmatpush1.msra.mxu0 0.0
      %1232 = vmatprep.subr.mxu0 0.0
      %1233 = vmatpush1.msra.mxu0 0.0
      %1234 = vmatprep.subr.mxu0 0.0
      %1235 = vmatpush1.msra.mxu0 0.0
      %1236 = vmatprep.subr.mxu0 0.0
      %1237 = vmatpush1.msra.mxu0 0.0
      %1238 = vmatprep.subr.mxu0 0.0
      %1239 = vmatpush1.msra.mxu0 0.0
      %1240 = vmatprep.subr.mxu0 0.0
      %1241 = vmatpush1.msra.mxu0 0.0
      %1242 = vmatprep.subr.mxu0 0.0
      %1243 = vmatpush1.msra.mxu0 0.0
      %1244 = vmatprep.subr.mxu0 0.0
      %1245 = vmatpush1.msra.mxu0 0.0
      %1246 = vmatprep.subr.mxu0 0.0
      %1247 = vmatpush1.msra.mxu0 0.0
      %1248 = vmatprep.subr.mxu0 0.0
      %1249 = vmatpush1.msra.mxu0 0.0
      %1250 = vmatprep.subr.mxu0 0.0
      %1251 = vmatpush1.msra.mxu0 0.0
      %1252 = vmatprep.subr.mxu0 0.0
      %1253 = vmatpush1.msra.mxu0 0.0
      %1254 = vmatprep.mubr.f32.mxu0 0.0
      %1255 = vmatmul.mubr.f32.gmra.mrb[0].mxu0 %v1182
      %v1256 = vpop.f32.mrb[0].mxu0
      %v1257 = vadd.f32 0.0, %v1256
      %v1258 = vpop.f32.mrb[0].mxu0
      %v1259 = vadd.f32 0.0, %v1258
      %1260 = vdwg.mxu0
      %1261 = vmatprep.subr.mxu0 0.0
      %1262 = vmatpush1.msra.mxu0 %v1188
      %1263 = vmatprep.subr.mxu0 0.0
      %1264 = vmatpush1.msra.mxu0 0.0
      %1265 = vmatprep.subr.mxu0 0.0
      %1266 = vmatpush1.msra.mxu0 0.0
      %1267 = vmatprep.subr.mxu0 0.0
      %1268 = vmatpush1.msra.mxu0 0.0
      %1269 = vmatprep.subr.mxu0 0.0
      %1270 = vmatpush1.msra.mxu0 0.0
      %1271 = vmatprep.subr.mxu0 0.0
      %1272 = vmatpush1.msra.mxu0 0.0
      %1273 = vmatprep.subr.mxu0 0.0
      %1274 = vmatpush1.msra.mxu0 0.0
      %1275 = vmatprep.subr.mxu0 0.0
      %1276 = vmatpush1.msra.mxu0 0.0
      %1277 = vmatprep.subr.mxu0 0.0
      %1278 = vmatpush1.msra.mxu0 0.0
      %1279 = vmatprep.subr.mxu0 0.0
      %1280 = vmatpush1.msra.mxu0 0.0
      %1281 = vmatprep.subr.mxu0 0.0
      %1282 = vmatpush1.msra.mxu0 0.0
      %1283 = vmatprep.subr.mxu0 0.0
      %1284 = vmatpush1.msra.mxu0 0.0
      %1285 = vmatprep.subr.mxu0 0.0
      %1286 = vmatpush1.msra.mxu0 0.0
      %1287 = vmatprep.subr.mxu0 0.0
      %1288 = vmatpush1.msra.mxu0 0.0
      %1289 = vmatprep.subr.mxu0 0.0
      %1290 = vmatpush1.msra.mxu0 0.0
      %1291 = vmatprep.subr.mxu0 0.0
      %1292 = vmatpush1.msra.mxu0 0.0
      %1293 = vmatprep.subr.mxu0 0.0
      %1294 = vmatpush1.msra.mxu0 0.0
      %1295 = vmatprep.subr.mxu0 0.0
      %1296 = vmatpush1.msra.mxu0 0.0
      %1297 = vmatprep.subr.mxu0 0.0
      %1298 = vmatpush1.msra.mxu0 0.0
      %1299 = vmatprep.subr.mxu0 0.0
      %1300 = vmatpush1.msra.mxu0 0.0
      %1301 = vmatprep.subr.mxu0 0.0
      %1302 = vmatpush1.msra.mxu0 0.0
      %1303 = vmatprep.subr.mxu0 0.0
      %1304 = vmatpush1.msra.mxu0 0.0
      %1305 = vmatprep.subr.mxu0 0.0
      %1306 = vmatpush1.msra.mxu0 0.0
      %1307 = vmatprep.subr.mxu0 0.0
      %1308 = vmatpush1.msra.mxu0 0.0
      %1309 = vmatprep.subr.mxu0 0.0
      %1310 = vmatpush1.msra.mxu0 0.0
      %1311 = vmatprep.subr.mxu0 0.0
      %1312 = vmatpush1.msra.mxu0 0.0
      %1313 = vmatprep.subr.mxu0 0.0
      %1314 = vmatpush1.msra.mxu0 0.0
      %1315 = vmatprep.subr.mxu0 0.0
      %1316 = vmatpush1.msra.mxu0 0.0
      %1317 = vmatprep.subr.mxu0 0.0
      %1318 = vmatpush1.msra.mxu0 0.0
      %1319 = vmatprep.subr.mxu0 0.0
      %1320 = vmatpush1.msra.mxu0 0.0
      %1321 = vmatprep.subr.mxu0 0.0
      %1322 = vmatpush1.msra.mxu0 0.0
      %1323 = vmatprep.subr.mxu0 0.0
      %1324 = vmatpush1.msra.mxu0 0.0
      %1325 = vmatprep.mubr.f32.mxu0 0.0
      %1326 = vmatmul.mubr.f32.gmra.mrb[0].mxu0 %v1182
      %v1327 = vpop.f32.mrb[0].mxu0
      %v1328 = vadd.f32 0.0, %v1327
      %v1329 = vpop.f32.mrb[0].mxu0
      %1330 = vdwg.mxu0
      %v1331 = vadd.f32 %v1162, %v1257
      %v1332 = vadd.f32 %v1163, %v1259
      %v1333 = vadd.f32 %v1164, %v1328
      %v1334 = vld [vmem:[%s164] sm:$0xff]
      %v1335 = vld [vmem:[%s164 + $0x8] sm:$0xf]
      %s1336 = scalar_lea.vmem %s1, 56
      %v1337 = vld [vmem:[%s1336] sm:$0xff]
      %v1340 = vcombine.high %v1334, %v1334
      %1341 = vrot.lane.b32.xlu0 %v1334, 91
      %v1342 = vpop.permute.xlu0 %1341
      %1343 = vrot.lane.b32.xlu0 %v1340, 91
      %v1344 = vpop.permute.xlu0 %1343
      %1345 = vrot.lane.b32.xlu0 %v1335, 91
      %v1346 = vpop.permute.xlu0 %1345
      %vm1347 = vcmask 744448
      %v1348 = vsel %vm1347, %v1342, %v1344
      %v1349 = vsel %vm1347, %v1344, %v1346
      %v1351 = vsel %vm187, %v1337, 0
      %v1353 = vsel %vm191, %v1348, 0
      %v1355 = vsel %vm191, %v1349, 0
      %v1357 = vsel %vm191, %v1346, 0
      %1359 = vmatprep.subr.mxu0 %v1355
      %1360 = vmatpush1.msra.mxu0 %v1353
      %1361 = vmatprep.subr.mxu0 0.0
      %1362 = vmatpush1.msra.mxu0 0.0
      %1363 = vmatprep.subr.mxu0 0.0
      %1364 = vmatpush1.msra.mxu0 0.0
      %1365 = vmatprep.subr.mxu0 0.0
      %1366 = vmatpush1.msra.mxu0 0.0
      %1367 = vmatprep.subr.mxu0 0.0
      %1368 = vmatpush1.msra.mxu0 0.0
      %1369 = vmatprep.subr.mxu0 0.0
      %1370 = vmatpush1.msra.mxu0 0.0
      %1371 = vmatprep.subr.mxu0 0.0
      %1372 = vmatpush1.msra.mxu0 0.0
      %1373 = vmatprep.subr.mxu0 0.0
      %1374 = vmatpush1.msra.mxu0 0.0
      %1375 = vmatprep.subr.mxu0 0.0
      %1376 = vmatpush1.msra.mxu0 0.0
      %1377 = vmatprep.subr.mxu0 0.0
      %1378 = vmatpush1.msra.mxu0 0.0
      %1379 = vmatprep.subr.mxu0 0.0
      %1380 = vmatpush1.msra.mxu0 0.0
      %1381 = vmatprep.subr.mxu0 0.0
      %1382 = vmatpush1.msra.mxu0 0.0
      %1383 = vmatprep.subr.mxu0 0.0
      %1384 = vmatpush1.msra.mxu0 0.0
      %1385 = vmatprep.subr.mxu0 0.0
      %1386 = vmatpush1.msra.mxu0 0.0
      %1387 = vmatprep.subr.mxu0 0.0
      %1388 = vmatpush1.msra.mxu0 0.0
      %1389 = vmatprep.subr.mxu0 0.0
      %1390 = vmatpush1.msra.mxu0 0.0
      %1391 = vmatprep.subr.mxu0 0.0
      %1392 = vmatpush1.msra.mxu0 0.0
      %1393 = vmatprep.subr.mxu0 0.0
      %1394 = vmatpush1.msra.mxu0 0.0
      %1395 = vmatprep.subr.mxu0 0.0
      %1396 = vmatpush1.msra.mxu0 0.0
      %1397 = vmatprep.subr.mxu0 0.0
      %1398 = vmatpush1.msra.mxu0 0.0
      %1399 = vmatprep.subr.mxu0 0.0
      %1400 = vmatpush1.msra.mxu0 0.0
      %1401 = vmatprep.subr.mxu0 0.0
      %1402 = vmatpush1.msra.mxu0 0.0
      %1403 = vmatprep.subr.mxu0 0.0
      %1404 = vmatpush1.msra.mxu0 0.0
      %1405 = vmatprep.subr.mxu0 0.0
      %1406 = vmatpush1.msra.mxu0 0.0
      %1407 = vmatprep.subr.mxu0 0.0
      %1408 = vmatpush1.msra.mxu0 0.0
      %1409 = vmatprep.subr.mxu0 0.0
      %1410 = vmatpush1.msra.mxu0 0.0
      %1411 = vmatprep.subr.mxu0 0.0
      %1412 = vmatpush1.msra.mxu0 0.0
      %1413 = vmatprep.subr.mxu0 0.0
      %1414 = vmatpush1.msra.mxu0 0.0
      %1415 = vmatprep.subr.mxu0 0.0
      %1416 = vmatpush1.msra.mxu0 0.0
      %1417 = vmatprep.subr.mxu0 0.0
      %1418 = vmatpush1.msra.mxu0 0.0
      %1419 = vmatprep.subr.mxu0 0.0
      %1420 = vmatpush1.msra.mxu0 0.0
      %1421 = vmatprep.subr.mxu0 0.0
      %1422 = vmatpush1.msra.mxu0 0.0
      %1423 = vmatprep.mubr.f32.mxu0 0.0
      %1424 = vmatmul.mubr.f32.gmra.mrb[0].mxu0 %v1351
      %v1425 = vpop.f32.mrb[0].mxu0
      %v1426 = vadd.f32 0.0, %v1425
      %v1427 = vpop.f32.mrb[0].mxu0
      %v1428 = vadd.f32 0.0, %v1427
      %1429 = vdwg.mxu0
      %1430 = vmatprep.subr.mxu0 0.0
      %1431 = vmatpush1.msra.mxu0 %v1357
      %1432 = vmatprep.subr.mxu0 0.0
      %1433 = vmatpush1.msra.mxu0 0.0
      %1434 = vmatprep.subr.mxu0 0.0
      %1435 = vmatpush1.msra.mxu0 0.0
      %1436 = vmatprep.subr.mxu0 0.0
      %1437 = vmatpush1.msra.mxu0 0.0
      %1438 = vmatprep.subr.mxu0 0.0
      %1439 = vmatpush1.msra.mxu0 0.0
      %1440 = vmatprep.subr.mxu0 0.0
      %1441 = vmatpush1.msra.mxu0 0.0
      %1442 = vmatprep.subr.mxu0 0.0
      %1443 = vmatpush1.msra.mxu0 0.0
      %1444 = vmatprep.subr.mxu0 0.0
      %1445 = vmatpush1.msra.mxu0 0.0
      %1446 = vmatprep.subr.mxu0 0.0
      %1447 = vmatpush1.msra.mxu0 0.0
      %1448 = vmatprep.subr.mxu0 0.0
      %1449 = vmatpush1.msra.mxu0 0.0
      %1450 = vmatprep.subr.mxu0 0.0
      %1451 = vmatpush1.msra.mxu0 0.0
      %1452 = vmatprep.subr.mxu0 0.0
      %1453 = vmatpush1.msra.mxu0 0.0
      %1454 = vmatprep.subr.mxu0 0.0
      %1455 = vmatpush1.msra.mxu0 0.0
      %1456 = vmatprep.subr.mxu0 0.0
      %1457 = vmatpush1.msra.mxu0 0.0
      %1458 = vmatprep.subr.mxu0 0.0
      %1459 = vmatpush1.msra.mxu0 0.0
      %1460 = vmatprep.subr.mxu0 0.0
      %1461 = vmatpush1.msra.mxu0 0.0
      %1462 = vmatprep.subr.mxu0 0.0
      %1463 = vmatpush1.msra.mxu0 0.0
      %1464 = vmatprep.subr.mxu0 0.0
      %1465 = vmatpush1.msra.mxu0 0.0
      %1466 = vmatprep.subr.mxu0 0.0
      %1467 = vmatpush1.msra.mxu0 0.0
      %1468 = vmatprep.subr.mxu0 0.0
      %1469 = vmatpush1.msra.mxu0 0.0
      %1470 = vmatprep.subr.mxu0 0.0
      %1471 = vmatpush1.msra.mxu0 0.0
      %1472 = vmatprep.subr.mxu0 0.0
      %1473 = vmatpush1.msra.mxu0 0.0
      %1474 = vmatprep.subr.mxu0 0.0
      %1475 = vmatpush1.msra.mxu0 0.0
      %1476 = vmatprep.subr.mxu0 0.0
      %1477 = vmatpush1.msra.mxu0 0.0
      %1478 = vmatprep.subr.mxu0 0.0
      %1479 = vmatpush1.msra.mxu0 0.0
      %1480 = vmatprep.subr.mxu0 0.0
      %1481 = vmatpush1.msra.mxu0 0.0
      %1482 = vmatprep.subr.mxu0 0.0
      %1483 = vmatpush1.msra.mxu0 0.0
      %1484 = vmatprep.subr.mxu0 0.0
      %1485 = vmatpush1.msra.mxu0 0.0
      %1486 = vmatprep.subr.mxu0 0.0
      %1487 = vmatpush1.msra.mxu0 0.0
      %1488 = vmatprep.subr.mxu0 0.0
      %1489 = vmatpush1.msra.mxu0 0.0
      %1490 = vmatprep.subr.mxu0 0.0
      %1491 = vmatpush1.msra.mxu0 0.0
      %1492 = vmatprep.subr.mxu0 0.0
      %1493 = vmatpush1.msra.mxu0 0.0
      %1494 = vmatprep.mubr.f32.mxu0 0.0
      %1495 = vmatmul.mubr.f32.gmra.mrb[0].mxu0 %v1351
      %v1496 = vpop.f32.mrb[0].mxu0
      %v1497 = vadd.f32 0.0, %v1496
      %v1498 = vpop.f32.mrb[0].mxu0
      %1499 = vdwg.mxu0
      %v1500 = vadd.f32 %v1331, %v1426
      %v1501 = vadd.f32 %v1332, %v1428
      %v1502 = vadd.f32 %v1333, %v1497
      %v1503 = vld [vmem:[%s164] sm:$0xff]
      %v1504 = vld [vmem:[%s164 + $0x8] sm:$0xf]
      %s1505 = scalar_lea.vmem %s1, 64
      %v1506 = vld [vmem:[%s1505] sm:$0xff]
      %v1509 = vcombine.high %v1503, %v1503
      %1510 = vrot.lane.b32.xlu0 %v1503, 90
      %v1511 = vpop.permute.xlu0 %1510
      %1512 = vrot.lane.b32.xlu0 %v1509, 90
      %v1513 = vpop.permute.xlu0 %1512
      %1514 = vrot.lane.b32.xlu0 %v1504, 90
      %v1515 = vpop.permute.xlu0 %1514
      %vm1516 = vcmask 736256
      %v1517 = vsel %vm1516, %v1511, %v1513
      %v1518 = vsel %vm1516, %v1513, %v1515
      %v1520 = vsel %vm187, %v1506, 0
      %v1522 = vsel %vm191, %v1517, 0
      %v1524 = vsel %vm191, %v1518, 0
      %v1526 = vsel %vm191, %v1515, 0
      %1528 = vmatprep.subr.mxu0 %v1524
      %1529 = vmatpush1.msra.mxu0 %v1522
      %1530 = vmatprep.subr.mxu0 0.0
      %1531 = vmatpush1.msra.mxu0 0.0
      %1532 = vmatprep.subr.mxu0 0.0
      %1533 = vmatpush1.msra.mxu0 0.0
      %1534 = vmatprep.subr.mxu0 0.0
      %1535 = vmatpush1.msra.mxu0 0.0
      %1536 = vmatprep.subr.mxu0 0.0
      %1537 = vmatpush1.msra.mxu0 0.0
      %1538 = vmatprep.subr.mxu0 0.0
      %1539 = vmatpush1.msra.mxu0 0.0
      %1540 = vmatprep.subr.mxu0 0.0
      %1541 = vmatpush1.msra.mxu0 0.0
      %1542 = vmatprep.subr.mxu0 0.0
      %1543 = vmatpush1.msra.mxu0 0.0
      %1544 = vmatprep.subr.mxu0 0.0
      %1545 = vmatpush1.msra.mxu0 0.0
      %1546 = vmatprep.subr.mxu0 0.0
      %1547 = vmatpush1.msra.mxu0 0.0
      %1548 = vmatprep.subr.mxu0 0.0
      %1549 = vmatpush1.msra.mxu0 0.0
      %1550 = vmatprep.subr.mxu0 0.0
      %1551 = vmatpush1.msra.mxu0 0.0
      %1552 = vmatprep.subr.mxu0 0.0
      %1553 = vmatpush1.msra.mxu0 0.0
      %1554 = vmatprep.subr.mxu0 0.0
      %1555 = vmatpush1.msra.mxu0 0.0
      %1556 = vmatprep.subr.mxu0 0.0
      %1557 = vmatpush1.msra.mxu0 0.0
      %1558 = vmatprep.subr.mxu0 0.0
      %1559 = vmatpush1.msra.mxu0 0.0
      %1560 = vmatprep.subr.mxu0 0.0
      %1561 = vmatpush1.msra.mxu0 0.0
      %1562 = vmatprep.subr.mxu0 0.0
      %1563 = vmatpush1.msra.mxu0 0.0
      %1564 = vmatprep.subr.mxu0 0.0
      %1565 = vmatpush1.msra.mxu0 0.0
      %1566 = vmatprep.subr.mxu0 0.0
      %1567 = vmatpush1.msra.mxu0 0.0
      %1568 = vmatprep.subr.mxu0 0.0
      %1569 = vmatpush1.msra.mxu0 0.0
      %1570 = vmatprep.subr.mxu0 0.0
      %1571 = vmatpush1.msra.mxu0 0.0
      %1572 = vmatprep.subr.mxu0 0.0
      %1573 = vmatpush1.msra.mxu0 0.0
      %1574 = vmatprep.subr.mxu0 0.0
      %1575 = vmatpush1.msra.mxu0 0.0
      %1576 = vmatprep.subr.mxu0 0.0
      %1577 = vmatpush1.msra.mxu0 0.0
      %1578 = vmatprep.subr.mxu0 0.0
      %1579 = vmatpush1.msra.mxu0 0.0
      %1580 = vmatprep.subr.mxu0 0.0
      %1581 = vmatpush1.msra.mxu0 0.0
      %1582 = vmatprep.subr.mxu0 0.0
      %1583 = vmatpush1.msra.mxu0 0.0
      %1584 = vmatprep.subr.mxu0 0.0
      %1585 = vmatpush1.msra.mxu0 0.0
      %1586 = vmatprep.subr.mxu0 0.0
      %1587 = vmatpush1.msra.mxu0 0.0
      %1588 = vmatprep.subr.mxu0 0.0
      %1589 = vmatpush1.msra.mxu0 0.0
      %1590 = vmatprep.subr.mxu0 0.0
      %1591 = vmatpush1.msra.mxu0 0.0
      %1592 = vmatprep.mubr.f32.mxu0 0.0
      %1593 = vmatmul.mubr.f32.gmra.mrb[0].mxu0 %v1520
      %v1594 = vpop.f32.mrb[0].mxu0
      %v1595 = vadd.f32 0.0, %v1594
      %v1596 = vpop.f32.mrb[0].mxu0
      %v1597 = vadd.f32 0.0, %v1596
      %1598 = vdwg.mxu0
      %1599 = vmatprep.subr.mxu0 0.0
      %1600 = vmatpush1.msra.mxu0 %v1526
      %1601 = vmatprep.subr.mxu0 0.0
      %1602 = vmatpush1.msra.mxu0 0.0
      %1603 = vmatprep.subr.mxu0 0.0
      %1604 = vmatpush1.msra.mxu0 0.0
      %1605 = vmatprep.subr.mxu0 0.0
      %1606 = vmatpush1.msra.mxu0 0.0
      %1607 = vmatprep.subr.mxu0 0.0
      %1608 = vmatpush1.msra.mxu0 0.0
      %1609 = vmatprep.subr.mxu0 0.0
      %1610 = vmatpush1.msra.mxu0 0.0
      %1611 = vmatprep.subr.mxu0 0.0
      %1612 = vmatpush1.msra.mxu0 0.0
      %1613 = vmatprep.subr.mxu0 0.0
      %1614 = vmatpush1.msra.mxu0 0.0
      %1615 = vmatprep.subr.mxu0 0.0
      %1616 = vmatpush1.msra.mxu0 0.0
      %1617 = vmatprep.subr.mxu0 0.0
      %1618 = vmatpush1.msra.mxu0 0.0
      %1619 = vmatprep.subr.mxu0 0.0
      %1620 = vmatpush1.msra.mxu0 0.0
      %1621 = vmatprep.subr.mxu0 0.0
      %1622 = vmatpush1.msra.mxu0 0.0
      %1623 = vmatprep.subr.mxu0 0.0
      %1624 = vmatpush1.msra.mxu0 0.0
      %1625 = vmatprep.subr.mxu0 0.0
      %1626 = vmatpush1.msra.mxu0 0.0
      %1627 = vmatprep.subr.mxu0 0.0
      %1628 = vmatpush1.msra.mxu0 0.0
      %1629 = vmatprep.subr.mxu0 0.0
      %1630 = vmatpush1.msra.mxu0 0.0
      %1631 = vmatprep.subr.mxu0 0.0
      %1632 = vmatpush1.msra.mxu0 0.0
      %1633 = vmatprep.subr.mxu0 0.0
      %1634 = vmatpush1.msra.mxu0 0.0
      %1635 = vmatprep.subr.mxu0 0.0
      %1636 = vmatpush1.msra.mxu0 0.0
      %1637 = vmatprep.subr.mxu0 0.0
      %1638 = vmatpush1.msra.mxu0 0.0
      %1639 = vmatprep.subr.mxu0 0.0
      %1640 = vmatpush1.msra.mxu0 0.0
      %1641 = vmatprep.subr.mxu0 0.0
      %1642 = vmatpush1.msra.mxu0 0.0
      %1643 = vmatprep.subr.mxu0 0.0
      %1644 = vmatpush1.msra.mxu0 0.0
      %1645 = vmatprep.subr.mxu0 0.0
      %1646 = vmatpush1.msra.mxu0 0.0
      %1647 = vmatprep.subr.mxu0 0.0
      %1648 = vmatpush1.msra.mxu0 0.0
      %1649 = vmatprep.subr.mxu0 0.0
      %1650 = vmatpush1.msra.mxu0 0.0
      %1651 = vmatprep.subr.mxu0 0.0
      %1652 = vmatpush1.msra.mxu0 0.0
      %1653 = vmatprep.subr.mxu0 0.0
      %1654 = vmatpush1.msra.mxu0 0.0
      %1655 = vmatprep.subr.mxu0 0.0
      %1656 = vmatpush1.msra.mxu0 0.0
      %1657 = vmatprep.subr.mxu0 0.0
      %1658 = vmatpush1.msra.mxu0 0.0
      %1659 = vmatprep.subr.mxu0 0.0
      %1660 = vmatpush1.msra.mxu0 0.0
      %1661 = vmatprep.subr.mxu0 0.0
      %1662 = vmatpush1.msra.mxu0 0.0
      %1663 = vmatprep.mubr.f32.mxu0 0.0
      %1664 = vmatmul.mubr.f32.gmra.mrb[0].mxu0 %v1520
      %v1665 = vpop.f32.mrb[0].mxu0
      %v1666 = vadd.f32 0.0, %v1665
      %v1667 = vpop.f32.mrb[0].mxu0
      %1668 = vdwg.mxu0
      %v1669 = vadd.f32 %v1500, %v1595
      %v1670 = vadd.f32 %v1501, %v1597
      %v1671 = vadd.f32 %v1502, %v1666
      %v1673 = vlaneseq
      %v1674 = vshrl.u32 %v1673, 7
      %v1675 = vsub.s32 0, %v1674
      %v1676 = vrot.slane %v169, %v1675
      %v1677 = vlaneseq
      %v1678 = vshrl.u32 %v1677, 7
      %v1679 = vsub.s32 1, %v1678
      %v1680 = vrot.slane %v169, %v1679
      %v1681 = vlaneseq
      %v1682 = vshrl.u32 %v1681, 7
      %v1683 = vsub.s32 2, %v1682
      %v1684 = vrot.slane %v169, %v1683
      %v1688 = vmul.f32 %v1669, %v1676
      %v1689 = vmul.f32 %v1670, %v1680
      %v1690 = vmul.f32 %v1671, %v1684
      %v1691 = vadd.f32 %v1688, %v1689
      %vm1692 = vcmask 261120
      %v1693 = vsel %vm1692, %v1690, 0.0
      %v1694 = vadd.f32 %v1691, %v1693
      %1695 = vadd.xlane.f32.xlu0 %v1694
      %v1696 = vpop.xlane.xlu0 %1695
      %v1697 = vmul.f32 %v1696, 0.00390625
      %v1698 = vsub.f32 %v1669, %v1697
      %v1699 = vsub.f32 %v1670, %v1697
      %v1700 = vsub.f32 %v1671, %v1697
      %v1701 = vmul.f32 %v1698, %v1676
      %v1702 = vmul.f32 %v1699, %v1680
      %v1703 = vmul.f32 %v1700, %v1684
      %v1704 = vmul.f32 %v1701, %v1701
      %v1705 = vmul.f32 %v1702, %v1702
      %v1706 = vmul.f32 %v1703, %v1703
      %v1707 = vadd.f32 %v1704, %v1705
      %v1708 = vsel %vm1692, %v1706, 0.0
      %v1709 = vadd.f32 %v1707, %v1708
      %1710 = vadd.xlane.f32.xlu0 %v1709
      %v1711 = vpop.xlane.xlu0 %1710
      %vm1712 = vcmask 7168
      %1713 = vst.msk [vmem:[%s168] sm:$0xff] %vm1712, %v1696
      %vm1714 = vcmask 15368
      %1715 = vst.msk [vmem:[%s168] sm:$0xff] %vm1714, %v1711
      %p1716 = scmp.lt.s32.totalorder %s14, 1
      %s1717 = scalar_select %p1716, %s14, 1
      %s1718 = smul.addr %s1717, 8
      %s1719 = scalar_lea.vmem %s3, %s1718
      // Predicated region
      $region33: #{conv_bn_relu.2} parent=31 // pred_check
        %p1720 = pneg %p100
      $region34: #{conv_bn_relu.2} parent=31 // pred_check_branch
        %1722 = sbr.rel (%p1720) target = $region36
      $region35: #{conv_bn_relu.2} parent=31 // pred_region
        _
      $region36: #{conv_bn_relu.2} parent=31 // pred_fallthru
        _
    $region32: #{conv_bn_relu.2} parent=5 // pred_fallthru
      _
    %p1723 = scmp.le.s32.totalorder 2, %s9
    // Predicated region
    $region37: #{conv_bn_relu.2} parent=5 // pred_check
      %p1724 = pneg %p1723
    $region38: #{conv_bn_relu.2} parent=5 // pred_check_branch
      %1726 = sbr.rel (%p1724) target = $region40
    $region39: #{conv_bn_relu.2} parent=5 // pred_region
      %s1727 = ssub.s32 %s9, 2
      // Predicated region
      $region41: #{conv_bn_relu.2} parent=39 // pred_check
        %p1728 = pneg %p106
      $region42: #{conv_bn_relu.2} parent=39 // pred_check_branch
        %1730 = sbr.rel (%p1728) target = $region44
      $region43: #{conv_bn_relu.2} parent=39 // pred_region
        %p1731 = scmp.lt.s32.totalorder %s15, 1
        %s1732 = scalar_select %p1731, %s15, 1
        %s1733 = smul.addr %s1732, 8
        %s1734 = scalar_lea.vmem %s3, %s1733
      $region44: #{conv_bn_relu.2} parent=39 // pred_fallthru
        _
    $region40: #{conv_bn_relu.2} parent=5 // pred_fallthru
      _
  $region6: #{conv_bn_relu.2} parent=0 // loop_footer
    %s13 = sadd.s32 1, %s9
  $region7: #{conv_bn_relu.2} parent=0 // loop_footer_branch
    %8 = sbr.rel target = $region3
  $region8: #{conv_bn_relu.2} parent=0 // loop_exit
    _

</llo_original>
